<compile_context>
chip_gen: v6e
topology: v6e:2x2x1
jax: 0.10.0
libtpu: 0.0.40
codegen_flags: <defaults>
</compile_context>

<pallas_src>
import functools
import math

import jax
import jax.numpy as jnp
from jax import lax
from jax.experimental import pallas as pl
from jax.experimental.pallas import tpu as pltpu

_GELU_C = math.sqrt(2.0 / math.pi)


# ------------------- conv (im2col) kernel, lane-dense output ------------------

def _conv_relu_kernel(w_ref, p_ref, b_ref, o_ref):
    acc = jnp.dot(w_ref[...], p_ref[...], preferred_element_type=jnp.float32)
    o_ref[...] = jnp.maximum(acc + b_ref[...], 0.0).astype(o_ref.dtype)


def conv_relu_pallas(w_t, patches_t, b_col):
    """relu(w_t @ patches_t + b) -> [C_out, M] bf16 (M on the lane axis)."""
    C_out, CKK = w_t.shape
    M = patches_t.shape[1]
    return pl.pallas_call(
        _conv_relu_kernel,
        out_shape=jax.ShapeDtypeStruct((C_out, M), jnp.bfloat16),
        grid=(1,),
        in_specs=[
            pl.BlockSpec((C_out, CKK), lambda i: (0, 0)),
            pl.BlockSpec((CKK, M), lambda i: (0, 0)),
            pl.BlockSpec((C_out, 1), lambda i: (0, 0)),
        ],
        out_specs=pl.BlockSpec((C_out, M), lambda i: (0, 0)),
        compiler_params=pltpu.CompilerParams(
            dimension_semantics=("arbitrary",)),
    )(w_t, patches_t, b_col)


# ------------------------ fused transformer mega-kernel -----------------------

def _dt_forward_kernel(
    conv_feat_ref, goals_ref, act_emb_ref, time_emb_ref, mask_ref,
    causal_ref, bias_ref, obs_fc_w_ref, goal_w_ref, wpe_ref,
    qkv_w_ref, proj_w_ref, fc_w_ref, mlp_w_ref, dec_w_ref,
    out_ref, x_sc, attn_sc,
    *, n_layer, n_head, seq_len, eps):
    S = seq_len
    T, H = x_sc.shape
    dh = H // n_head
    f32 = jnp.float32
    bf16 = jnp.bfloat16

    # bias slab row layout (must match pack_params)
    R_OBS_B, R_GOAL_B, R_CLN_G, R_CLN_B, R_LNF_G, R_LNF_B, R_DEC_B = range(7)
    lrow = lambda l, off: 7 + l * 8 + off

    def brow(r, width):
        return bias_ref[r:r + 1, :width]          # (1, width) f32, static slice

    def layer_norm(v, g, b):
        mu = jnp.mean(v, axis=-1, keepdims=True)
        c = v - mu
        var = jnp.mean(c * c, axis=-1, keepdims=True)
        return c * lax.rsqrt(var + eps) * g + b

    def gelu_new(v):                               # GPT2 gelu_new
        return 0.5 * v * (1.0 + jnp.tanh(_GELU_C * (v + 0.044715 * v * v * v)))

    # ---- token encoders (bf16 operands, f32 accumulation) ----
    time_e = time_emb_ref[0]
    obs_e = jnp.maximum(
        jnp.dot(conv_feat_ref[0], obs_fc_w_ref[...],
                preferred_element_type=f32) + brow(R_OBS_B, H), 0.0)
    goal_e = (jnp.dot(goals_ref[0], goal_w_ref[...],
                      preferred_element_type=f32) + brow(R_GOAL_B, H))
    act_e = act_emb_ref[0]

    # Grouped token layout: rows [0,S)=goal, [S,2S)=obs, [2S,3S)=action.
    # This is a permutation of the interleaved (g,o,a) sequence; causal mask
    # and position embeddings fed here are permuted identically, so the math
    # matches the interleaved GPT-2 exactly.
    x_sc[0:S, :] = goal_e + time_e
    x_sc[S:2 * S, :] = obs_e + time_e
    x_sc[2 * S:3 * S, :] = act_e + time_e

    x = layer_norm(x_sc[...], brow(R_CLN_G, H), brow(R_CLN_B, H))
    x = x + wpe_ref[...]

    # additive attention bias: causal structure * key-padding mask
    allowed = causal_ref[...] * mask_ref[0]                    # [T,T]*[1,T]
    att_bias = jnp.where(allowed > 0.5, 0.0, -1e9).astype(f32)

    for l in range(n_layer):
        # ---------------- attention ----------------
        xn = layer_norm(x, brow(lrow(l, 0), H), brow(lrow(l, 1), H))
        # fused c_attn: one [T,H]@[H,3H] dot (1/sqrt(dh) folded into W_q, b_q)
        qkv = (jnp.dot(xn.astype(bf16), qkv_w_ref[l],
                       preferred_element_type=f32)
               + brow(lrow(l, 6), 3 * H))                      # [T, 3H] f32
        kT = qkv[:, H:2 * H].T                                 # one transpose/layer
        for hd in range(n_head):
            c0 = hd * dh
            q = qkv[:, c0:c0 + dh]                             # [T, dh]
            v = qkv[:, 2 * H + c0:2 * H + c0 + dh]             # [T, dh]
            s = jnp.dot(q, kT[c0:c0 + dh, :],
                        preferred_element_type=f32) + att_bias  # [T, T]
            m = jnp.max(s, axis=-1, keepdims=True)
            p = jnp.exp(s - m)
            p = p * pl.reciprocal(jnp.sum(p, axis=-1, keepdims=True),
                                  approx=True)
            attn_sc[:, c0:c0 + dh] = jnp.dot(p, v,
                                             preferred_element_type=f32)
        # single full-width output projection, K = H
        x = x + (jnp.dot(attn_sc[...].astype(bf16), proj_w_ref[l],
                         preferred_element_type=f32) + brow(lrow(l, 4), H))

        # ---------------- MLP ----------------
        xn2 = layer_norm(x, brow(lrow(l, 2), H), brow(lrow(l, 3), H))
        hmid = gelu_new(jnp.dot(xn2.astype(bf16), fc_w_ref[l],
                                preferred_element_type=f32)
                        + brow(lrow(l, 7), 4 * H))
        x = x + (jnp.dot(hmid.astype(bf16), mlp_w_ref[l],
                         preferred_element_type=f32) + brow(lrow(l, 5), H))

    x = layer_norm(x, brow(R_LNF_G, H), brow(R_LNF_B, H))
    obs_tok = x[S:2 * S, :]
    # lane-dense decoder: 128-wide padded output, sliced to act_num in wrapper
    out_ref[0] = (jnp.dot(obs_tok.astype(bf16), dec_w_ref[...],
                          preferred_element_type=f32) + brow(R_DEC_B, 128))


def dt_transformer_pallas(cfg, conv_feat, goals_p, act_emb, time_emb, mask_g, w):
    B, S, F = conv_feat.shape
    H = cfg.hidden_size
    T = 3 * S
    L = cfg.n_layer
    GP = goals_p.shape[-1]
    R, SW = w["bias_slab"].shape

    def cspec(*shape):            # whole-array block, shared across grid steps
        n = len(shape)
        return pl.BlockSpec(shape, lambda b, n=n: (0,) * n)

    def bspec(*rest):             # per-batch block
        n = len(rest)
        return pl.BlockSpec((1,) + rest, lambda b, n=n: (b,) + (0,) * n)

    kernel = functools.partial(_dt_forward_kernel, n_layer=L,
                               n_head=cfg.n_head, seq_len=S, eps=cfg.ln_eps)
    return pl.pallas_call(
        kernel,
        out_shape=jax.ShapeDtypeStruct((B, S, 128), jnp.float32),
        grid=(B,),
        in_specs=[
            bspec(S, F), bspec(S, GP), bspec(S, H), bspec(S, H), bspec(1, T),
            cspec(T, T), cspec(R, SW),
            cspec(F, H), cspec(GP, H), cspec(T, H),
            cspec(L, H, 3 * H), cspec(L, H, H),
            cspec(L, H, 4 * H), cspec(L, 4 * H, H),
            cspec(H, 128),
        ],
        out_specs=bspec(S, 128),
        scratch_shapes=[pltpu.VMEM((T, H), jnp.float32),
                        pltpu.VMEM((T, H), jnp.float32)],
        compiler_params=pltpu.CompilerParams(
            dimension_semantics=("parallel",)),
    )(conv_feat, goals_p, act_emb, time_emb, mask_g,
      w["causal"], w["bias_slab"],
      w["obs_fc_w"], w["goal_w"], w["wpe"],
      w["qkv_w"], w["proj_w"], w["fc_w"], w["mlp_w"], w["dec_w"])


# ------------------------------- configuration --------------------------------

class Config:
    obs_channel = 3
    obs_height = 16
    obs_width = 16
    goal_dim = 2
    goal_form = "rel_goal"
    act_num = 4
    hidden_size = 64
    max_ep_len = 100
    context_length = 8
    n_layer = 2
    n_head = 4
    n_positions = 64          # GPT2 wpe table size (>= 3 * context_length)
    conv_channels = 16
    conv_kernel = 4
    conv_stride = 2
    ln_eps = 1e-5


def init_params(cfg, key):
    H = cfg.hidden_size
    keys = iter(jax.random.split(key, 64))

    def w(shape, std=0.02):
        return jax.random.normal(next(keys), shape, jnp.float32) * std

    oh = (cfg.obs_height - cfg.conv_kernel) // cfg.conv_stride + 1
    ow = (cfg.obs_width - cfg.conv_kernel) // cfg.conv_stride + 1
    p = {
        # TODO(synk): exact enlighten ObservationEncoder architecture not given;
        # using Conv(k=4,s=2)+ReLU -> flatten -> Linear+ReLU stand-in.
        "conv_w": w((cfg.conv_channels, cfg.obs_channel,
                     cfg.conv_kernel, cfg.conv_kernel), 0.1),
        "conv_b": jnp.zeros((cfg.conv_channels,), jnp.float32),
        "obs_fc_w": w((cfg.conv_channels * oh * ow, H)),
        "obs_fc_b": jnp.zeros((H,), jnp.float32),
        "goal_w": w((cfg.goal_dim, H)),                 # GoalEncoder (rel_goal)
        "goal_b": jnp.zeros((H,), jnp.float32),
        "act_embed": w((cfg.act_num, H)),               # DiscreteActionEncoder
        "time_embed": w((cfg.max_ep_len, H)),           # TimestepEncoder
        "cln_g": jnp.ones((H,), jnp.float32),           # concat_embed_ln
        "cln_b": jnp.zeros((H,), jnp.float32),
        "wpe": w((cfg.n_positions, H)),                 # GPT2 position embeds
        "lnf_g": jnp.ones((H,), jnp.float32),
        "lnf_b": jnp.zeros((H,), jnp.float32),
        "dec_w": w((H, cfg.act_num)),                   # DiscreteActionDecoder
        "dec_b": jnp.zeros((cfg.act_num,), jnp.float32),
        "layers": [],
    }
    for _ in range(cfg.n_layer):
        p["layers"].append({
            "ln1_g": jnp.ones((H,), jnp.float32),
            "ln1_b": jnp.zeros((H,), jnp.float32),
            "attn_w": w((H, 3 * H)),                    # GPT2 Conv1D c_attn
            "attn_b": jnp.zeros((3 * H,), jnp.float32),
            "proj_w": w((H, H)),
            "proj_b": jnp.zeros((H,), jnp.float32),
            "ln2_g": jnp.ones((H,), jnp.float32),
            "ln2_b": jnp.zeros((H,), jnp.float32),
            "fc_w": w((H, 4 * H)),
            "fc_b": jnp.zeros((4 * H,), jnp.float32),
            "mlp_proj_w": w((4 * H, H)),
            "mlp_proj_b": jnp.zeros((H,), jnp.float32),
        })
    return p


# ------------------------ one-time weight packing (hoisted) -------------------

def pack_params(params, cfg):
    H = cfg.hidden_size
    A = cfg.act_num
    S = cfg.context_length
    T = 3 * S
    dh = H // cfg.n_head
    GP = 8                      # zero-pad goal features so the matmul has K>=8
    SW = max(4 * H, 128)        # bias-slab width
    bf16 = jnp.bfloat16
    lay = params["layers"]

    scale = 1.0 / math.sqrt(dh)
    qscale = jnp.concatenate([jnp.full((H,), scale, jnp.float32),
                              jnp.ones((2 * H,), jnp.float32)])

    def row(v):
        v = jnp.asarray(v, jnp.float32).reshape(-1)
        return jnp.pad(v, (0, SW - v.shape[0]))

    rows = [row(params["obs_fc_b"]), row(params["goal_b"]),
            row(params["cln_g"]), row(params["cln_b"]),
            row(params["lnf_g"]), row(params["lnf_b"]),
            row(params["dec_b"])]
    for lp in lay:
        rows += [row(lp["ln1_g"]), row(lp["ln1_b"]),
                 row(lp["ln2_g"]), row(lp["ln2_b"]),
                 row(lp["proj_b"]), row(lp["mlp_proj_b"]),
                 row(lp["attn_b"] * qscale), row(lp["fc_b"])]
    bias_slab = jnp.stack(rows, axis=0)                  # [7+8L, SW] f32

    # grouped (goal|obs|act) layout: row j*S+t <-> interleaved position 3t+j
    idx = jnp.arange(T)
    pos = 3 * (idx % S) + idx // S
    causal = (pos[None, :] <= pos[:, None]).astype(jnp.float32)
    wpe = params["wpe"][:T].reshape(S, 3, H).transpose(1, 0, 2).reshape(T, H)

    st = lambda k: jnp.stack([lp[k] for lp in lay], axis=0)

    return {
        "conv_w_t": params["conv_w"].reshape(cfg.conv_channels, -1).astype(bf16),
        "conv_b": params["conv_b"].reshape(-1, 1).astype(jnp.float32),
        "obs_fc_w": params["obs_fc_w"].astype(bf16),     # [OC*OHW, H], NCHW flatten
        "goal_w": jnp.pad(params["goal_w"],
                          ((0, GP - cfg.goal_dim), (0, 0))).astype(bf16),
        "act_embed": params["act_embed"].astype(jnp.float32),
        "time_embed": params["time_embed"].astype(jnp.float32),
        "wpe": wpe.astype(jnp.float32),
        "causal": causal,
        "bias_slab": bias_slab,
        "qkv_w": (st("attn_w") * qscale[None, None, :]).astype(bf16),  # [L,H,3H]
        "proj_w": st("proj_w").astype(bf16),                           # [L,H,H]
        "fc_w": st("fc_w").astype(bf16),                               # [L,H,4H]
        "mlp_w": st("mlp_proj_w").astype(bf16),                        # [L,4H,H]
        "dec_w": jnp.pad(params["dec_w"],
                         ((0, 0), (0, 128 - A))).astype(bf16),         # [H,128]
    }


# ----------------------------------- forward ----------------------------------

def forward(packed, cfg, observations, actions, goals, timesteps,
            attention_mask=None):
    B, S = observations.shape[0], observations.shape[1]
    T = 3 * S
    if attention_mask is None:
        attention_mask = jnp.ones((B, S), dtype=jnp.int32)

    # --- observation encoder: im2col patches (glue) -> lane-dense conv kernel
    obs = observations.reshape(B * S, cfg.obs_channel, cfg.obs_height,
                               cfg.obs_width).astype(jnp.float32)
    patches = lax.conv_general_dilated_patches(
        obs, filter_shape=(cfg.conv_kernel, cfg.conv_kernel),
        window_strides=(cfg.conv_stride, cfg.conv_stride), padding="VALID",
        dimension_numbers=("NCHW", "OIHW", "NCHW"))       # [BS, CKK, oh, ow]
    BS, CKK, oh, ow = patches.shape
    OHW = oh * ow
    patches_t = patches.transpose(1, 0, 2, 3).reshape(CKK, BS * OHW)
    conv_t = conv_relu_pallas(packed["conv_w_t"],
                              patches_t.astype(jnp.bfloat16),
                              packed["conv_b"])           # [OC, BS*OHW] bf16
    OC = conv_t.shape[0]
    conv_feat = conv_t.reshape(OC, B, S, OHW).transpose(1, 2, 0, 3)
    conv_feat = conv_feat.reshape(B, S, OC * OHW)         # matches obs_fc_w order

    # --- embedding gathers (plain JAX glue) ---
    act_emb = jnp.take(packed["act_embed"], actions.astype(jnp.int32), axis=0)
    time_emb = jnp.take(packed["time_embed"], timesteps.astype(jnp.int32),
                        axis=0)

    GP = packed["goal_w"].shape[0]
    goals_p = jnp.pad(goals.astype(jnp.float32),
                      ((0, 0), (0, 0), (0, GP - cfg.goal_dim)))
    goals_p = goals_p.astype(jnp.bfloat16)
    mask_g = jnp.tile(attention_mask.astype(jnp.float32),
                      (1, 3)).reshape(B, 1, T)

    logits_pad = dt_transformer_pallas(cfg, conv_feat, goals_p, act_emb,
                                       time_emb, mask_g, packed)
    return logits_pad[..., :cfg.act_num]


# ------------------------------------ main -------------------------------------

if __name__ == "__main__":
    cfg = Config()
    key = jax.random.PRNGKey(0)
    k_obs, k_act, k_goal, k_t, k_param = jax.random.split(key, 5)

    params = init_params(cfg, k_param)
    packed = pack_params(params, cfg)      # hoisted: runs once, not per step

    B, S = 2, cfg.context_length
    observations = jax.random.normal(
        k_obs, (B, S, cfg.obs_channel, cfg.obs_height, cfg.obs_width),
        jnp.float32)
    actions = jax.random.randint(k_act, (B, S), 0, cfg.act_num)
    goals = jax.random.normal(k_goal, (B, S, cfg.goal_dim), jnp.float32)
    timesteps = jax.random.randint(k_t, (B, S), 0, cfg.max_ep_len)

    fwd = jax.jit(lambda pk, o, a, g, t: forward(pk, cfg, o, a, g, t))
    logits = fwd(packed, observations, actions, goals, timesteps)
    logits = jax.block_until_ready(logits)

    assert logits.shape == (B, S, cfg.act_num), logits.shape
    assert logits.dtype == jnp.float32
    assert bool(jnp.all(jnp.isfinite(logits)))
    print("KERNEL_OK")
</pallas_src>

<mosaic_0001>
module attributes {stable_mosaic.version = 11 : i64} {
  func.func @_conv_relu_kernel(%arg0: i32, %arg1: memref<16x48xbf16, #tpu.memory_space<vmem>>, %arg2: memref<48x784xbf16, #tpu.memory_space<vmem>>, %arg3: memref<16x1xf32, #tpu.memory_space<vmem>>, %arg4: memref<16x784xbf16, #tpu.memory_space<vmem>>) attributes {dimension_semantics = [#tpu.dimension_semantics<arbitrary>], iteration_bounds = array<i64: 1>, scalar_prefetch = 0 : i64, scratch_operands = 0 : i64, tpu.core_type = #tpu.core_type<tc>, window_params = [{pipeline_mode = #tpu.pipeline_mode<synchronous>, transform_indices = @transform_0, window_bounds = array<i64: 16, 48>}, {pipeline_mode = #tpu.pipeline_mode<synchronous>, transform_indices = @transform_1, window_bounds = array<i64: 48, 784>}, {pipeline_mode = #tpu.pipeline_mode<synchronous>, transform_indices = @transform_2, window_bounds = array<i64: 16, 1>}, {pipeline_mode = #tpu.pipeline_mode<synchronous>, transform_indices = @transform_3, window_bounds = array<i64: 16, 784>}]} {
    %c0 = arith.constant 0 : index
    %c0_0 = arith.constant 0 : index
    %0 = vector.load %arg1[%c0, %c0_0] : memref<16x48xbf16, #tpu.memory_space<vmem>>, vector<16x48xbf16>
    %c0_1 = arith.constant 0 : index
    %c0_2 = arith.constant 0 : index
    %1 = vector.load %arg2[%c0_1, %c0_2] : memref<48x784xbf16, #tpu.memory_space<vmem>>, vector<48x784xbf16>
    %cst = arith.constant dense<0.000000e+00> : vector<16x784xf32>
    %2 = tpu.matmul %0, %1, %cst {dimension_numbers = #tpu.dot_dimension_numbers<[1], [0], [0], [1], [0, 0, 1, 1], [], []>} : vector<16x48xbf16>, vector<48x784xbf16>, vector<16x784xf32> -> vector<16x784xf32>
    %c0_3 = arith.constant 0 : index
    %c0_4 = arith.constant 0 : index
    %3 = vector.load %arg3[%c0_3, %c0_4] : memref<16x1xf32, #tpu.memory_space<vmem>>, vector<16x1xf32>
    %4 = vector.broadcast %3 : vector<16x1xf32> to vector<16x784xf32>
    %5 = arith.addf %2, %4 : vector<16x784xf32>
    %cst_5 = arith.constant 0.000000e+00 : f32
    %6 = vector.broadcast %cst_5 : f32 to vector<16x784xf32>
    %7 = arith.maximumf %5, %6 : vector<16x784xf32>
    %8 = arith.truncf %7 : vector<16x784xf32> to vector<16x784xbf16>
    %c0_6 = arith.constant 0 : index
    %c0_7 = arith.constant 0 : index
    %9 = vector.load %arg4[%c0_6, %c0_7] : memref<16x784xbf16, #tpu.memory_space<vmem>>, vector<16x784xbf16>
    tpu.vector_store %arg4[%c0_6, %c0_7], %8 {strides = array<i32>} : memref<16x784xbf16, #tpu.memory_space<vmem>>, vector<16x784xbf16>,
    return
  }
  func.func @transform_0(%arg0: i32) -> (i32, i32) {
    %c0_i32 = arith.constant 0 : i32
    %c0_i32_0 = arith.constant 0 : i32
    %c0_i32_1 = arith.constant 0 : i32
    return %c0_i32, %c0_i32_0 : i32, i32
  }
  func.func @transform_1(%arg0: i32) -> (i32, i32) {
    %c0_i32 = arith.constant 0 : i32
    %c0_i32_0 = arith.constant 0 : i32
    %c0_i32_1 = arith.constant 0 : i32
    return %c0_i32, %c0_i32_0 : i32, i32
  }
  func.func @transform_2(%arg0: i32) -> (i32, i32) {
    %c0_i32 = arith.constant 0 : i32
    %c0_i32_0 = arith.constant 0 : i32
    %c0_i32_1 = arith.constant 0 : i32
    return %c0_i32, %c0_i32_0 : i32, i32
  }
  func.func @transform_3(%arg0: i32) -> (i32, i32) {
    %c0_i32 = arith.constant 0 : i32
    %c0_i32_0 = arith.constant 0 : i32
    %c0_i32_1 = arith.constant 0 : i32
    return %c0_i32, %c0_i32_0 : i32, i32
  }
}

module attributes {stable_mosaic.version = 11 : i64} {
  func.func @_dt_forward_kernel(%arg0: i32, %arg1: memref<1x8x784xbf16, #tpu.memory_space<vmem>>, %arg2: memref<1x8x8xbf16, #tpu.memory_space<vmem>>, %arg3: memref<1x8x64xf32, #tpu.memory_space<vmem>>, %arg4: memref<1x8x64xf32, #tpu.memory_space<vmem>>, %arg5: memref<1x1x24xf32, #tpu.memory_space<vmem>>, %arg6: memref<24x24xf32, #tpu.memory_space<vmem>>, %arg7: memref<23x256xf32, #tpu.memory_space<vmem>>, %arg8: memref<784x64xbf16, #tpu.memory_space<vmem>>, %arg9: memref<8x64xbf16, #tpu.memory_space<vmem>>, %arg10: memref<24x64xf32, #tpu.memory_space<vmem>>, %arg11: memref<2x64x192xbf16, #tpu.memory_space<vmem>>, %arg12: memref<2x64x64xbf16, #tpu.memory_space<vmem>>, %arg13: memref<2x64x256xbf16, #tpu.memory_space<vmem>>, %arg14: memref<2x256x64xbf16, #tpu.memory_space<vmem>>, %arg15: memref<64x128xbf16, #tpu.memory_space<vmem>>, %arg16: memref<1x8x128xf32, #tpu.memory_space<vmem>>, %arg17: memref<24x64xf32, #tpu.memory_space<vmem>>, %arg18: memref<24x64xf32, #tpu.memory_space<vmem>>) attributes {dimension_semantics = [#tpu.dimension_semantics<parallel>], iteration_bounds = array<i64: 2>, scalar_prefetch = 0 : i64, scratch_operands = 2 : i64, tpu.core_type = #tpu.core_type<tc>, window_params = [{transform_indices = @transform_0, window_bounds = array<i64: 1, 8, 784>}, {transform_indices = @transform_1, window_bounds = array<i64: 1, 8, 8>}, {transform_indices = @transform_2, window_bounds = array<i64: 1, 8, 64>}, {transform_indices = @transform_3, window_bounds = array<i64: 1, 8, 64>}, {transform_indices = @transform_4, window_bounds = array<i64: 1, 1, 24>}, {pipeline_mode = #tpu.pipeline_mode<synchronous>, transform_indices = @transform_5, window_bounds = array<i64: 24, 24>}, {pipeline_mode = #tpu.pipeline_mode<synchronous>, transform_indices = @transform_6, window_bounds = array<i64: 23, 256>}, {pipeline_mode = #tpu.pipeline_mode<synchronous>, transform_indices = @transform_7, window_bounds = array<i64: 784, 64>}, {pipeline_mode = #tpu.pipeline_mode<synchronous>, transform_indices = @transform_8, window_bounds = array<i64: 8, 64>}, {pipeline_mode = #tpu.pipeline_mode<synchronous>, transform_indices = @transform_9, window_bounds = array<i64: 24, 64>}, {pipeline_mode = #tpu.pipeline_mode<synchronous>, transform_indices = @transform_10, window_bounds = array<i64: 2, 64, 192>}, {pipeline_mode = #tpu.pipeline_mode<synchronous>, transform_indices = @transform_11, window_bounds = array<i64: 2, 64, 64>}, {pipeline_mode = #tpu.pipeline_mode<synchronous>, transform_indices = @transform_12, window_bounds = array<i64: 2, 64, 256>}, {pipeline_mode = #tpu.pipeline_mode<synchronous>, transform_indices = @transform_13, window_bounds = array<i64: 2, 256, 64>}, {pipeline_mode = #tpu.pipeline_mode<synchronous>, transform_indices = @transform_14, window_bounds = array<i64: 64, 128>}, {transform_indices = @transform_15, window_bounds = array<i64: 1, 8, 128>}]} {
    %c0 = arith.constant 0 : index
    %c0_0 = arith.constant 0 : index
    %c0_1 = arith.constant 0 : index
    %0 = vector.load %arg4[%c0, %c0_0, %c0_1] : memref<1x8x64xf32, #tpu.memory_space<vmem>>, vector<1x8x64xf32>
    %1 = vector.shape_cast %0 : vector<1x8x64xf32> to vector<8x64xf32>
    %c0_2 = arith.constant 0 : index
    %c0_3 = arith.constant 0 : index
    %c0_4 = arith.constant 0 : index
    %2 = vector.load %arg1[%c0_2, %c0_3, %c0_4] : memref<1x8x784xbf16, #tpu.memory_space<vmem>>, vector<1x8x784xbf16>
    %3 = vector.shape_cast %2 : vector<1x8x784xbf16> to vector<8x784xbf16>
    %c0_5 = arith.constant 0 : index
    %c0_6 = arith.constant 0 : index
    %4 = vector.load %arg8[%c0_5, %c0_6] : memref<784x64xbf16, #tpu.memory_space<vmem>>, vector<784x64xbf16>
    %cst = arith.constant dense<0.000000e+00> : vector<8x64xf32>
    %5 = tpu.matmul %3, %4, %cst {dimension_numbers = #tpu.dot_dimension_numbers<[1], [0], [0], [1], [0, 0, 1, 1], [], []>} : vector<8x784xbf16>, vector<784x64xbf16>, vector<8x64xf32> -> vector<8x64xf32>
    %c0_7 = arith.constant 0 : index
    %c0_8 = arith.constant 0 : index
    %6 = vector.load %arg7[%c0_7, %c0_8] : memref<23x256xf32, #tpu.memory_space<vmem>>, vector<1x64xf32>
    %7 = vector.broadcast %6 : vector<1x64xf32> to vector<8x64xf32>
    %8 = arith.addf %5, %7 : vector<8x64xf32>
    %cst_9 = arith.constant 0.000000e+00 : f32
    %9 = vector.broadcast %cst_9 : f32 to vector<8x64xf32>
    %10 = arith.maximumf %8, %9 : vector<8x64xf32>
    %c0_10 = arith.constant 0 : index
    %c0_11 = arith.constant 0 : index
    %c0_12 = arith.constant 0 : index
    %11 = vector.load %arg2[%c0_10, %c0_11, %c0_12] : memref<1x8x8xbf16, #tpu.memory_space<vmem>>, vector<1x8x8xbf16>
    %12 = vector.shape_cast %11 : vector<1x8x8xbf16> to vector<8x8xbf16>
    %c0_13 = arith.constant 0 : index
    %c0_14 = arith.constant 0 : index
    %13 = vector.load %arg9[%c0_13, %c0_14] : memref<8x64xbf16, #tpu.memory_space<vmem>>, vector<8x64xbf16>
    %cst_15 = arith.constant dense<0.000000e+00> : vector<8x64xf32>
    %14 = tpu.matmul %12, %13, %cst_15 {dimension_numbers = #tpu.dot_dimension_numbers<[1], [0], [0], [1], [0, 0, 1, 1], [], []>} : vector<8x8xbf16>, vector<8x64xbf16>, vector<8x64xf32> -> vector<8x64xf32>
    %c1 = arith.constant 1 : index
    %c0_16 = arith.constant 0 : index
    %15 = vector.load %arg7[%c1, %c0_16] : memref<23x256xf32, #tpu.memory_space<vmem>>, vector<1x64xf32>
    %16 = vector.broadcast %15 : vector<1x64xf32> to vector<8x64xf32>
    %17 = arith.addf %14, %16 : vector<8x64xf32>
    %c0_17 = arith.constant 0 : index
    %c0_18 = arith.constant 0 : index
    %c0_19 = arith.constant 0 : index
    %18 = vector.load %arg3[%c0_17, %c0_18, %c0_19] : memref<1x8x64xf32, #tpu.memory_space<vmem>>, vector<1x8x64xf32>
    %19 = vector.shape_cast %18 : vector<1x8x64xf32> to vector<8x64xf32>
    %20 = arith.addf %17, %1 : vector<8x64xf32>
    %c0_20 = arith.constant 0 : index
    %c0_21 = arith.constant 0 : index
    %21 = vector.load %arg17[%c0_20, %c0_21] : memref<24x64xf32, #tpu.memory_space<vmem>>, vector<8x64xf32>
    tpu.vector_store %arg17[%c0_20, %c0_21], %20 {strides = array<i32>} : memref<24x64xf32, #tpu.memory_space<vmem>>, vector<8x64xf32>,
    %22 = arith.addf %10, %1 : vector<8x64xf32>
    %c8 = arith.constant 8 : index
    %c0_22 = arith.constant 0 : index
    %23 = vector.load %arg17[%c8, %c0_22] : memref<24x64xf32, #tpu.memory_space<vmem>>, vector<8x64xf32>
    tpu.vector_store %arg17[%c8, %c0_22], %22 {strides = array<i32>} : memref<24x64xf32, #tpu.memory_space<vmem>>, vector<8x64xf32>,
    %24 = arith.addf %19, %1 : vector<8x64xf32>
    %c16 = arith.constant 16 : index
    %c0_23 = arith.constant 0 : index
    %25 = vector.load %arg17[%c16, %c0_23] : memref<24x64xf32, #tpu.memory_space<vmem>>, vector<8x64xf32>
    tpu.vector_store %arg17[%c16, %c0_23], %24 {strides = array<i32>} : memref<24x64xf32, #tpu.memory_space<vmem>>, vector<8x64xf32>,
    %c0_24 = arith.constant 0 : index
    %c0_25 = arith.constant 0 : index
    %26 = vector.load %arg17[%c0_24, %c0_25] : memref<24x64xf32, #tpu.memory_space<vmem>>, vector<24x64xf32>
    %c2 = arith.constant 2 : index
    %c0_26 = arith.constant 0 : index
    %27 = vector.load %arg7[%c2, %c0_26] : memref<23x256xf32, #tpu.memory_space<vmem>>, vector<1x64xf32>
    %c3 = arith.constant 3 : index
    %c0_27 = arith.constant 0 : index
    %28 = vector.load %arg7[%c3, %c0_27] : memref<23x256xf32, #tpu.memory_space<vmem>>, vector<1x64xf32>
    %cst_28 = arith.constant dense<0.000000e+00> : vector<24xf32>
    %29 = vector.multi_reduction <add>, %26, %cst_28 [1] : vector<24x64xf32> to vector<24xf32>
    %30 = vector.shape_cast %29 : vector<24xf32> to vector<24x1xf32>
    %cst_29 = arith.constant 6.400000e+01 : f32
    %31 = vector.broadcast %cst_29 : f32 to vector<24x1xf32>
    %32 = arith.divf %30, %31 : vector<24x1xf32>
    %33 = vector.broadcast %32 : vector<24x1xf32> to vector<24x64xf32>
    %34 = arith.subf %26, %33 : vector<24x64xf32>
    %35 = arith.mulf %34, %34 : vector<24x64xf32>
    %cst_30 = arith.constant dense<0.000000e+00> : vector<24xf32>
    %36 = vector.multi_reduction <add>, %35, %cst_30 [1] : vector<24x64xf32> to vector<24xf32>
    %37 = vector.shape_cast %36 : vector<24xf32> to vector<24x1xf32>
    %cst_31 = arith.constant 6.400000e+01 : f32
    %38 = vector.broadcast %cst_31 : f32 to vector<24x1xf32>
    %39 = arith.divf %37, %38 : vector<24x1xf32>
    %cst_32 = arith.constant 9.99999974E-6 : f32
    %40 = vector.broadcast %cst_32 : f32 to vector<24x1xf32>
    %41 = arith.addf %39, %40 : vector<24x1xf32>
    %42 = math.rsqrt %41 : vector<24x1xf32>
    %43 = vector.broadcast %42 : vector<24x1xf32> to vector<24x64xf32>
    %44 = arith.mulf %34, %43 : vector<24x64xf32>
    %45 = vector.broadcast %27 : vector<1x64xf32> to vector<24x64xf32>
    %46 = arith.mulf %44, %45 : vector<24x64xf32>
    %47 = vector.broadcast %28 : vector<1x64xf32> to vector<24x64xf32>
    %48 = arith.addf %46, %47 : vector<24x64xf32>
    %c0_33 = arith.constant 0 : index
    %c0_34 = arith.constant 0 : index
    %49 = vector.load %arg10[%c0_33, %c0_34] : memref<24x64xf32, #tpu.memory_space<vmem>>, vector<24x64xf32>
    %50 = arith.addf %48, %49 : vector<24x64xf32>
    %c0_35 = arith.constant 0 : index
    %c0_36 = arith.constant 0 : index
    %51 = vector.load %arg6[%c0_35, %c0_36] : memref<24x24xf32, #tpu.memory_space<vmem>>, vector<24x24xf32>
    %c0_37 = arith.constant 0 : index
    %c0_38 = arith.constant 0 : index
    %c0_39 = arith.constant 0 : index
    %52 = vector.load %arg5[%c0_37, %c0_38, %c0_39] : memref<1x1x24xf32, #tpu.memory_space<vmem>>, vector<1x1x24xf32>
    %53 = vector.shape_cast %52 : vector<1x1x24xf32> to vector<1x24xf32>
    %54 = vector.broadcast %53 : vector<1x24xf32> to vector<24x24xf32>
    %55 = arith.mulf %51, %54 : vector<24x24xf32>
    %cst_40 = arith.constant 5.000000e-01 : f32
    %56 = vector.broadcast %cst_40 : f32 to vector<24x24xf32>
    %57 = arith.cmpf ogt, %55, %56 : vector<24x24xf32>
    %cst_41 = arith.constant 0.000000e+00 : f32
    %cst_42 = arith.constant -1.000000e+09 : f32
    %58 = vector.broadcast %cst_41 : f32 to vector<24x24xf32>
    %59 = vector.broadcast %cst_42 : f32 to vector<24x24xf32>
    %60 = arith.select %57, %58, %59 : vector<24x24xi1>, vector<24x24xf32>
    %c7 = arith.constant 7 : index
    %c0_43 = arith.constant 0 : index
    %61 = vector.load %arg7[%c7, %c0_43] : memref<23x256xf32, #tpu.memory_space<vmem>>, vector<1x64xf32>
    %c8_44 = arith.constant 8 : index
    %c0_45 = arith.constant 0 : index
    %62 = vector.load %arg7[%c8_44, %c0_45] : memref<23x256xf32, #tpu.memory_space<vmem>>, vector<1x64xf32>
    %cst_46 = arith.constant dense<0.000000e+00> : vector<24xf32>
    %63 = vector.multi_reduction <add>, %50, %cst_46 [1] : vector<24x64xf32> to vector<24xf32>
    %64 = vector.shape_cast %63 : vector<24xf32> to vector<24x1xf32>
    %cst_47 = arith.constant 6.400000e+01 : f32
    %65 = vector.broadcast %cst_47 : f32 to vector<24x1xf32>
    %66 = arith.divf %64, %65 : vector<24x1xf32>
    %67 = vector.broadcast %66 : vector<24x1xf32> to vector<24x64xf32>
    %68 = arith.subf %50, %67 : vector<24x64xf32>
    %69 = arith.mulf %68, %68 : vector<24x64xf32>
    %cst_48 = arith.constant dense<0.000000e+00> : vector<24xf32>
    %70 = vector.multi_reduction <add>, %69, %cst_48 [1] : vector<24x64xf32> to vector<24xf32>
    %71 = vector.shape_cast %70 : vector<24xf32> to vector<24x1xf32>
    %cst_49 = arith.constant 6.400000e+01 : f32
    %72 = vector.broadcast %cst_49 : f32 to vector<24x1xf32>
    %73 = arith.divf %71, %72 : vector<24x1xf32>
    %cst_50 = arith.constant 9.99999974E-6 : f32
    %74 = vector.broadcast %cst_50 : f32 to vector<24x1xf32>
    %75 = arith.addf %73, %74 : vector<24x1xf32>
    %76 = math.rsqrt %75 : vector<24x1xf32>
    %77 = vector.broadcast %76 : vector<24x1xf32> to vector<24x64xf32>
    %78 = arith.mulf %68, %77 : vector<24x64xf32>
    %79 = vector.broadcast %61 : vector<1x64xf32> to vector<24x64xf32>
    %80 = arith.mulf %78, %79 : vector<24x64xf32>
    %81 = vector.broadcast %62 : vector<1x64xf32> to vector<24x64xf32>
    %82 = arith.addf %80, %81 : vector<24x64xf32>
    %83 = arith.truncf %82 : vector<24x64xf32> to vector<24x64xbf16>
    %c0_51 = arith.constant 0 : index
    %c0_52 = arith.constant 0 : index
    %c0_53 = arith.constant 0 : index
    %84 = vector.load %arg11[%c0_51, %c0_52, %c0_53] : memref<2x64x192xbf16, #tpu.memory_space<vmem>>, vector<1x64x192xbf16>
    %85 = vector.shape_cast %84 : vector<1x64x192xbf16> to vector<64x192xbf16>
    %cst_54 = arith.constant dense<0.000000e+00> : vector<24x192xf32>
    %86 = tpu.matmul %83, %85, %cst_54 {dimension_numbers = #tpu.dot_dimension_numbers<[1], [0], [0], [1], [0, 0, 1, 1], [], []>} : vector<24x64xbf16>, vector<64x192xbf16>, vector<24x192xf32> -> vector<24x192xf32>
    %c13 = arith.constant 13 : index
    %c0_55 = arith.constant 0 : index
    %87 = vector.load %arg7[%c13, %c0_55] : memref<23x256xf32, #tpu.memory_space<vmem>>, vector<1x192xf32>
    %88 = vector.broadcast %87 : vector<1x192xf32> to vector<24x192xf32>
    %89 = arith.addf %86, %88 : vector<24x192xf32>
    %90 = vector.extract_strided_slice %89 {offsets = [0, 64], sizes = [24, 64], strides = [1, 1]} : vector<24x192xf32> to vector<24x64xf32>
    %91 = tpu.transpose %90, [1, 0] : vector<24x64xf32> -> vector<64x24xf32>
    %92 = vector.extract_strided_slice %89 {offsets = [0, 0], sizes = [24, 16], strides = [1, 1]} : vector<24x192xf32> to vector<24x16xf32>
    %93 = vector.extract_strided_slice %89 {offsets = [0, 128], sizes = [24, 16], strides = [1, 1]} : vector<24x192xf32> to vector<24x16xf32>
    %94 = vector.extract_strided_slice %91 {offsets = [0, 0], sizes = [16, 24], strides = [1, 1]} : vector<64x24xf32> to vector<16x24xf32>
    %cst_56 = arith.constant dense<0.000000e+00> : vector<24x24xf32>
    %95 = tpu.matmul %92, %94, %cst_56 {dimension_numbers = #tpu.dot_dimension_numbers<[1], [0], [0], [1], [0, 0, 1, 1], [], []>} : vector<24x16xf32>, vector<16x24xf32>, vector<24x24xf32> -> vector<24x24xf32>
    %96 = arith.addf %95, %60 : vector<24x24xf32>
    %cst_57 = arith.constant dense<0xFF800000> : vector<24xf32>
    %97 = vector.multi_reduction <maximumf>, %96, %cst_57 [1] : vector<24x24xf32> to vector<24xf32>
    %98 = vector.shape_cast %97 : vector<24xf32> to vector<24x1xf32>
    %99 = vector.broadcast %98 : vector<24x1xf32> to vector<24x24xf32>
    %100 = arith.subf %96, %99 : vector<24x24xf32>
    %101 = math.exp %100 : vector<24x24xf32>
    %cst_58 = arith.constant dense<0.000000e+00> : vector<24xf32>
    %102 = vector.multi_reduction <add>, %101, %cst_58 [1] : vector<24x24xf32> to vector<24xf32>
    %103 = vector.shape_cast %102 : vector<24xf32> to vector<24x1xf32>
    %104 = tpu.reciprocal %103 {approx = true} : vector<24x1xf32> -> vector<24x1xf32>
    %105 = vector.broadcast %104 : vector<24x1xf32> to vector<24x24xf32>
    %106 = arith.mulf %101, %105 : vector<24x24xf32>
    %cst_59 = arith.constant dense<0.000000e+00> : vector<24x16xf32>
    %107 = tpu.matmul %106, %93, %cst_59 {dimension_numbers = #tpu.dot_dimension_numbers<[1], [0], [0], [1], [0, 0, 1, 1], [], []>} : vector<24x24xf32>, vector<24x16xf32>, vector<24x16xf32> -> vector<24x16xf32>
    %c0_60 = arith.constant 0 : index
    %c0_61 = arith.constant 0 : index
    %108 = vector.load %arg18[%c0_60, %c0_61] : memref<24x64xf32, #tpu.memory_space<vmem>>, vector<24x16xf32>
    tpu.vector_store %arg18[%c0_60, %c0_61], %107 {strides = array<i32>} : memref<24x64xf32, #tpu.memory_space<vmem>>, vector<24x16xf32>,
    %109 = vector.extract_strided_slice %89 {offsets = [0, 16], sizes = [24, 16], strides = [1, 1]} : vector<24x192xf32> to vector<24x16xf32>
    %110 = vector.extract_strided_slice %89 {offsets = [0, 144], sizes = [24, 16], strides = [1, 1]} : vector<24x192xf32> to vector<24x16xf32>
    %111 = vector.extract_strided_slice %91 {offsets = [16, 0], sizes = [16, 24], strides = [1, 1]} : vector<64x24xf32> to vector<16x24xf32>
    %cst_62 = arith.constant dense<0.000000e+00> : vector<24x24xf32>
    %112 = tpu.matmul %109, %111, %cst_62 {dimension_numbers = #tpu.dot_dimension_numbers<[1], [0], [0], [1], [0, 0, 1, 1], [], []>} : vector<24x16xf32>, vector<16x24xf32>, vector<24x24xf32> -> vector<24x24xf32>
    %113 = arith.addf %112, %60 : vector<24x24xf32>
    %cst_63 = arith.constant dense<0xFF800000> : vector<24xf32>
    %114 = vector.multi_reduction <maximumf>, %113, %cst_63 [1] : vector<24x24xf32> to vector<24xf32>
    %115 = vector.shape_cast %114 : vector<24xf32> to vector<24x1xf32>
    %116 = vector.broadcast %115 : vector<24x1xf32> to vector<24x24xf32>
    %117 = arith.subf %113, %116 : vector<24x24xf32>
    %118 = math.exp %117 : vector<24x24xf32>
    %cst_64 = arith.constant dense<0.000000e+00> : vector<24xf32>
    %119 = vector.multi_reduction <add>, %118, %cst_64 [1] : vector<24x24xf32> to vector<24xf32>
    %120 = vector.shape_cast %119 : vector<24xf32> to vector<24x1xf32>
    %121 = tpu.reciprocal %120 {approx = true} : vector<24x1xf32> -> vector<24x1xf32>
    %122 = vector.broadcast %121 : vector<24x1xf32> to vector<24x24xf32>
    %123 = arith.mulf %118, %122 : vector<24x24xf32>
    %cst_65 = arith.constant dense<0.000000e+00> : vector<24x16xf32>
    %124 = tpu.matmul %123, %110, %cst_65 {dimension_numbers = #tpu.dot_dimension_numbers<[1], [0], [0], [1], [0, 0, 1, 1], [], []>} : vector<24x24xf32>, vector<24x16xf32>, vector<24x16xf32> -> vector<24x16xf32>
    %c0_66 = arith.constant 0 : index
    %c16_67 = arith.constant 16 : index
    %125 = vector.load %arg18[%c0_66, %c16_67] : memref<24x64xf32, #tpu.memory_space<vmem>>, vector<24x16xf32>
    tpu.vector_store %arg18[%c0_66, %c16_67], %124 {strides = array<i32>} : memref<24x64xf32, #tpu.memory_space<vmem>>, vector<24x16xf32>,
    %126 = vector.extract_strided_slice %89 {offsets = [0, 32], sizes = [24, 16], strides = [1, 1]} : vector<24x192xf32> to vector<24x16xf32>
    %127 = vector.extract_strided_slice %89 {offsets = [0, 160], sizes = [24, 16], strides = [1, 1]} : vector<24x192xf32> to vector<24x16xf32>
    %128 = vector.extract_strided_slice %91 {offsets = [32, 0], sizes = [16, 24], strides = [1, 1]} : vector<64x24xf32> to vector<16x24xf32>
    %cst_68 = arith.constant dense<0.000000e+00> : vector<24x24xf32>
    %129 = tpu.matmul %126, %128, %cst_68 {dimension_numbers = #tpu.dot_dimension_numbers<[1], [0], [0], [1], [0, 0, 1, 1], [], []>} : vector<24x16xf32>, vector<16x24xf32>, vector<24x24xf32> -> vector<24x24xf32>
    %130 = arith.addf %129, %60 : vector<24x24xf32>
    %cst_69 = arith.constant dense<0xFF800000> : vector<24xf32>
    %131 = vector.multi_reduction <maximumf>, %130, %cst_69 [1] : vector<24x24xf32> to vector<24xf32>
    %132 = vector.shape_cast %131 : vector<24xf32> to vector<24x1xf32>
    %133 = vector.broadcast %132 : vector<24x1xf32> to vector<24x24xf32>
    %134 = arith.subf %130, %133 : vector<24x24xf32>
    %135 = math.exp %134 : vector<24x24xf32>
    %cst_70 = arith.constant dense<0.000000e+00> : vector<24xf32>
    %136 = vector.multi_reduction <add>, %135, %cst_70 [1] : vector<24x24xf32> to vector<24xf32>
    %137 = vector.shape_cast %136 : vector<24xf32> to vector<24x1xf32>
    %138 = tpu.reciprocal %137 {approx = true} : vector<24x1xf32> -> vector<24x1xf32>
    %139 = vector.broadcast %138 : vector<24x1xf32> to vector<24x24xf32>
    %140 = arith.mulf %135, %139 : vector<24x24xf32>
    %cst_71 = arith.constant dense<0.000000e+00> : vector<24x16xf32>
    %141 = tpu.matmul %140, %127, %cst_71 {dimension_numbers = #tpu.dot_dimension_numbers<[1], [0], [0], [1], [0, 0, 1, 1], [], []>} : vector<24x24xf32>, vector<24x16xf32>, vector<24x16xf32> -> vector<24x16xf32>
    %c0_72 = arith.constant 0 : index
    %c32 = arith.constant 32 : index
    %142 = vector.load %arg18[%c0_72, %c32] : memref<24x64xf32, #tpu.memory_space<vmem>>, vector<24x16xf32>
    tpu.vector_store %arg18[%c0_72, %c32], %141 {strides = array<i32>} : memref<24x64xf32, #tpu.memory_space<vmem>>, vector<24x16xf32>,
    %143 = vector.extract_strided_slice %89 {offsets = [0, 48], sizes = [24, 16], strides = [1, 1]} : vector<24x192xf32> to vector<24x16xf32>
    %144 = vector.extract_strided_slice %89 {offsets = [0, 176], sizes = [24, 16], strides = [1, 1]} : vector<24x192xf32> to vector<24x16xf32>
    %145 = vector.extract_strided_slice %91 {offsets = [48, 0], sizes = [16, 24], strides = [1, 1]} : vector<64x24xf32> to vector<16x24xf32>
    %cst_73 = arith.constant dense<0.000000e+00> : vector<24x24xf32>
    %146 = tpu.matmul %143, %145, %cst_73 {dimension_numbers = #tpu.dot_dimension_numbers<[1], [0], [0], [1], [0, 0, 1, 1], [], []>} : vector<24x16xf32>, vector<16x24xf32>, vector<24x24xf32> -> vector<24x24xf32>
    %147 = arith.addf %146, %60 : vector<24x24xf32>
    %cst_74 = arith.constant dense<0xFF800000> : vector<24xf32>
    %148 = vector.multi_reduction <maximumf>, %147, %cst_74 [1] : vector<24x24xf32> to vector<24xf32>
    %149 = vector.shape_cast %148 : vector<24xf32> to vector<24x1xf32>
    %150 = vector.broadcast %149 : vector<24x1xf32> to vector<24x24xf32>
    %151 = arith.subf %147, %150 : vector<24x24xf32>
    %152 = math.exp %151 : vector<24x24xf32>
    %cst_75 = arith.constant dense<0.000000e+00> : vector<24xf32>
    %153 = vector.multi_reduction <add>, %152, %cst_75 [1] : vector<24x24xf32> to vector<24xf32>
    %154 = vector.shape_cast %153 : vector<24xf32> to vector<24x1xf32>
    %155 = tpu.reciprocal %154 {approx = true} : vector<24x1xf32> -> vector<24x1xf32>
    %156 = vector.broadcast %155 : vector<24x1xf32> to vector<24x24xf32>
    %157 = arith.mulf %152, %156 : vector<24x24xf32>
    %cst_76 = arith.constant dense<0.000000e+00> : vector<24x16xf32>
    %158 = tpu.matmul %157, %144, %cst_76 {dimension_numbers = #tpu.dot_dimension_numbers<[1], [0], [0], [1], [0, 0, 1, 1], [], []>} : vector<24x24xf32>, vector<24x16xf32>, vector<24x16xf32> -> vector<24x16xf32>
    %c0_77 = arith.constant 0 : index
    %c48 = arith.constant 48 : index
    %159 = vector.load %arg18[%c0_77, %c48] : memref<24x64xf32, #tpu.memory_space<vmem>>, vector<24x16xf32>
    tpu.vector_store %arg18[%c0_77, %c48], %158 {strides = array<i32>} : memref<24x64xf32, #tpu.memory_space<vmem>>, vector<24x16xf32>,
    %c0_78 = arith.constant 0 : index
    %c0_79 = arith.constant 0 : index
    %160 = vector.load %arg18[%c0_78, %c0_79] : memref<24x64xf32, #tpu.memory_space<vmem>>, vector<24x64xf32>
    %161 = arith.truncf %160 : vector<24x64xf32> to vector<24x64xbf16>
    %c0_80 = arith.constant 0 : index
    %c0_81 = arith.constant 0 : index
    %c0_82 = arith.constant 0 : index
    %162 = vector.load %arg12[%c0_80, %c0_81, %c0_82] : memref<2x64x64xbf16, #tpu.memory_space<vmem>>, vector<1x64x64xbf16>
    %163 = vector.shape_cast %162 : vector<1x64x64xbf16> to vector<64x64xbf16>
    %cst_83 = arith.constant dense<0.000000e+00> : vector<24x64xf32>
    %164 = tpu.matmul %161, %163, %cst_83 {dimension_numbers = #tpu.dot_dimension_numbers<[1], [0], [0], [1], [0, 0, 1, 1], [], []>} : vector<24x64xbf16>, vector<64x64xbf16>, vector<24x64xf32> -> vector<24x64xf32>
    %c11 = arith.constant 11 : index
    %c0_84 = arith.constant 0 : index
    %165 = vector.load %arg7[%c11, %c0_84] : memref<23x256xf32, #tpu.memory_space<vmem>>, vector<1x64xf32>
    %166 = vector.broadcast %165 : vector<1x64xf32> to vector<24x64xf32>
    %167 = arith.addf %164, %166 : vector<24x64xf32>
    %168 = arith.addf %50, %167 : vector<24x64xf32>
    %c9 = arith.constant 9 : index
    %c0_85 = arith.constant 0 : index
    %169 = vector.load %arg7[%c9, %c0_85] : memref<23x256xf32, #tpu.memory_space<vmem>>, vector<1x64xf32>
    %c10 = arith.constant 10 : index
    %c0_86 = arith.constant 0 : index
    %170 = vector.load %arg7[%c10, %c0_86] : memref<23x256xf32, #tpu.memory_space<vmem>>, vector<1x64xf32>
    %cst_87 = arith.constant dense<0.000000e+00> : vector<24xf32>
    %171 = vector.multi_reduction <add>, %168, %cst_87 [1] : vector<24x64xf32> to vector<24xf32>
    %172 = vector.shape_cast %171 : vector<24xf32> to vector<24x1xf32>
    %cst_88 = arith.constant 6.400000e+01 : f32
    %173 = vector.broadcast %cst_88 : f32 to vector<24x1xf32>
    %174 = arith.divf %172, %173 : vector<24x1xf32>
    %175 = vector.broadcast %174 : vector<24x1xf32> to vector<24x64xf32>
    %176 = arith.subf %168, %175 : vector<24x64xf32>
    %177 = arith.mulf %176, %176 : vector<24x64xf32>
    %cst_89 = arith.constant dense<0.000000e+00> : vector<24xf32>
    %178 = vector.multi_reduction <add>, %177, %cst_89 [1] : vector<24x64xf32> to vector<24xf32>
    %179 = vector.shape_cast %178 : vector<24xf32> to vector<24x1xf32>
    %cst_90 = arith.constant 6.400000e+01 : f32
    %180 = vector.broadcast %cst_90 : f32 to vector<24x1xf32>
    %181 = arith.divf %179, %180 : vector<24x1xf32>
    %cst_91 = arith.constant 9.99999974E-6 : f32
    %182 = vector.broadcast %cst_91 : f32 to vector<24x1xf32>
    %183 = arith.addf %181, %182 : vector<24x1xf32>
    %184 = math.rsqrt %183 : vector<24x1xf32>
    %185 = vector.broadcast %184 : vector<24x1xf32> to vector<24x64xf32>
    %186 = arith.mulf %176, %185 : vector<24x64xf32>
    %187 = vector.broadcast %169 : vector<1x64xf32> to vector<24x64xf32>
    %188 = arith.mulf %186, %187 : vector<24x64xf32>
    %189 = vector.broadcast %170 : vector<1x64xf32> to vector<24x64xf32>
    %190 = arith.addf %188, %189 : vector<24x64xf32>
    %191 = arith.truncf %190 : vector<24x64xf32> to vector<24x64xbf16>
    %c0_92 = arith.constant 0 : index
    %c0_93 = arith.constant 0 : index
    %c0_94 = arith.constant 0 : index
    %192 = vector.load %arg13[%c0_92, %c0_93, %c0_94] : memref<2x64x256xbf16, #tpu.memory_space<vmem>>, vector<1x64x256xbf16>
    %193 = vector.shape_cast %192 : vector<1x64x256xbf16> to vector<64x256xbf16>
    %cst_95 = arith.constant dense<0.000000e+00> : vector<24x256xf32>
    %194 = tpu.matmul %191, %193, %cst_95 {dimension_numbers = #tpu.dot_dimension_numbers<[1], [0], [0], [1], [0, 0, 1, 1], [], []>} : vector<24x64xbf16>, vector<64x256xbf16>, vector<24x256xf32> -> vector<24x256xf32>
    %c14 = arith.constant 14 : index
    %c0_96 = arith.constant 0 : index
    %195 = vector.load %arg7[%c14, %c0_96] : memref<23x256xf32, #tpu.memory_space<vmem>>, vector<1x256xf32>
    %196 = vector.broadcast %195 : vector<1x256xf32> to vector<24x256xf32>
    %197 = arith.addf %194, %196 : vector<24x256xf32>
    %cst_97 = arith.constant 5.000000e-01 : f32
    %198 = vector.broadcast %cst_97 : f32 to vector<24x256xf32>
    %199 = arith.mulf %198, %197 : vector<24x256xf32>
    %cst_98 = arith.constant 4.471500e-02 : f32
    %200 = vector.broadcast %cst_98 : f32 to vector<24x256xf32>
    %201 = arith.mulf %200, %197 : vector<24x256xf32>
    %202 = arith.mulf %201, %197 : vector<24x256xf32>
    %203 = arith.mulf %202, %197 : vector<24x256xf32>
    %204 = arith.addf %197, %203 : vector<24x256xf32>
    %cst_99 = arith.constant 0.797884583 : f32
    %205 = vector.broadcast %cst_99 : f32 to vector<24x256xf32>
    %206 = arith.mulf %205, %204 : vector<24x256xf32>
    %207 = math.tanh %206 : vector<24x256xf32>
    %cst_100 = arith.constant 1.000000e+00 : f32
    %208 = vector.broadcast %cst_100 : f32 to vector<24x256xf32>
    %209 = arith.addf %208, %207 : vector<24x256xf32>
    %210 = arith.mulf %199, %209 : vector<24x256xf32>
    %211 = arith.truncf %210 : vector<24x256xf32> to vector<24x256xbf16>
    %c0_101 = arith.constant 0 : index
    %c0_102 = arith.constant 0 : index
    %c0_103 = arith.constant 0 : index
    %212 = vector.load %arg14[%c0_101, %c0_102, %c0_103] : memref<2x256x64xbf16, #tpu.memory_space<vmem>>, vector<1x256x64xbf16>
    %213 = vector.shape_cast %212 : vector<1x256x64xbf16> to vector<256x64xbf16>
    %cst_104 = arith.constant dense<0.000000e+00> : vector<24x64xf32>
    %214 = tpu.matmul %211, %213, %cst_104 {dimension_numbers = #tpu.dot_dimension_numbers<[1], [0], [0], [1], [0, 0, 1, 1], [], []>} : vector<24x256xbf16>, vector<256x64xbf16>, vector<24x64xf32> -> vector<24x64xf32>
    %c12 = arith.constant 12 : index
    %c0_105 = arith.constant 0 : index
    %215 = vector.load %arg7[%c12, %c0_105] : memref<23x256xf32, #tpu.memory_space<vmem>>, vector<1x64xf32>
    %216 = vector.broadcast %215 : vector<1x64xf32> to vector<24x64xf32>
    %217 = arith.addf %214, %216 : vector<24x64xf32>
    %218 = arith.addf %168, %217 : vector<24x64xf32>
    %c15 = arith.constant 15 : index
    %c0_106 = arith.constant 0 : index
    %219 = vector.load %arg7[%c15, %c0_106] : memref<23x256xf32, #tpu.memory_space<vmem>>, vector<1x64xf32>
    %c16_107 = arith.constant 16 : index
    %c0_108 = arith.constant 0 : index
    %220 = vector.load %arg7[%c16_107, %c0_108] : memref<23x256xf32, #tpu.memory_space<vmem>>, vector<1x64xf32>
    %cst_109 = arith.constant dense<0.000000e+00> : vector<24xf32>
    %221 = vector.multi_reduction <add>, %218, %cst_109 [1] : vector<24x64xf32> to vector<24xf32>
    %222 = vector.shape_cast %221 : vector<24xf32> to vector<24x1xf32>
    %cst_110 = arith.constant 6.400000e+01 : f32
    %223 = vector.broadcast %cst_110 : f32 to vector<24x1xf32>
    %224 = arith.divf %222, %223 : vector<24x1xf32>
    %225 = vector.broadcast %224 : vector<24x1xf32> to vector<24x64xf32>
    %226 = arith.subf %218, %225 : vector<24x64xf32>
    %227 = arith.mulf %226, %226 : vector<24x64xf32>
    %cst_111 = arith.constant dense<0.000000e+00> : vector<24xf32>
    %228 = vector.multi_reduction <add>, %227, %cst_111 [1] : vector<24x64xf32> to vector<24xf32>
    %229 = vector.shape_cast %228 : vector<24xf32> to vector<24x1xf32>
    %cst_112 = arith.constant 6.400000e+01 : f32
    %230 = vector.broadcast %cst_112 : f32 to vector<24x1xf32>
    %231 = arith.divf %229, %230 : vector<24x1xf32>
    %cst_113 = arith.constant 9.99999974E-6 : f32
    %232 = vector.broadcast %cst_113 : f32 to vector<24x1xf32>
    %233 = arith.addf %231, %232 : vector<24x1xf32>
    %234 = math.rsqrt %233 : vector<24x1xf32>
    %235 = vector.broadcast %234 : vector<24x1xf32> to vector<24x64xf32>
    %236 = arith.mulf %226, %235 : vector<24x64xf32>
    %237 = vector.broadcast %219 : vector<1x64xf32> to vector<24x64xf32>
    %238 = arith.mulf %236, %237 : vector<24x64xf32>
    %239 = vector.broadcast %220 : vector<1x64xf32> to vector<24x64xf32>
    %240 = arith.addf %238, %239 : vector<24x64xf32>
    %241 = arith.truncf %240 : vector<24x64xf32> to vector<24x64xbf16>
    %c1_114 = arith.constant 1 : index
    %c0_115 = arith.constant 0 : index
    %c0_116 = arith.constant 0 : index
    %242 = vector.load %arg11[%c1_114, %c0_115, %c0_116] : memref<2x64x192xbf16, #tpu.memory_space<vmem>>, vector<1x64x192xbf16>
    %243 = vector.shape_cast %242 : vector<1x64x192xbf16> to vector<64x192xbf16>
    %cst_117 = arith.constant dense<0.000000e+00> : vector<24x192xf32>
    %244 = tpu.matmul %241, %243, %cst_117 {dimension_numbers = #tpu.dot_dimension_numbers<[1], [0], [0], [1], [0, 0, 1, 1], [], []>} : vector<24x64xbf16>, vector<64x192xbf16>, vector<24x192xf32> -> vector<24x192xf32>
    %c21 = arith.constant 21 : index
    %c0_118 = arith.constant 0 : index
    %245 = vector.load %arg7[%c21, %c0_118] : memref<23x256xf32, #tpu.memory_space<vmem>>, vector<1x192xf32>
    %246 = vector.broadcast %245 : vector<1x192xf32> to vector<24x192xf32>
    %247 = arith.addf %244, %246 : vector<24x192xf32>
    %248 = vector.extract_strided_slice %247 {offsets = [0, 64], sizes = [24, 64], strides = [1, 1]} : vector<24x192xf32> to vector<24x64xf32>
    %249 = tpu.transpose %248, [1, 0] : vector<24x64xf32> -> vector<64x24xf32>
    %250 = vector.extract_strided_slice %247 {offsets = [0, 0], sizes = [24, 16], strides = [1, 1]} : vector<24x192xf32> to vector<24x16xf32>
    %251 = vector.extract_strided_slice %247 {offsets = [0, 128], sizes = [24, 16], strides = [1, 1]} : vector<24x192xf32> to vector<24x16xf32>
    %252 = vector.extract_strided_slice %249 {offsets = [0, 0], sizes = [16, 24], strides = [1, 1]} : vector<64x24xf32> to vector<16x24xf32>
    %cst_119 = arith.constant dense<0.000000e+00> : vector<24x24xf32>
    %253 = tpu.matmul %250, %252, %cst_119 {dimension_numbers = #tpu.dot_dimension_numbers<[1], [0], [0], [1], [0, 0, 1, 1], [], []>} : vector<24x16xf32>, vector<16x24xf32>, vector<24x24xf32> -> vector<24x24xf32>
    %254 = arith.addf %253, %60 : vector<24x24xf32>
    %cst_120 = arith.constant dense<0xFF800000> : vector<24xf32>
    %255 = vector.multi_reduction <maximumf>, %254, %cst_120 [1] : vector<24x24xf32> to vector<24xf32>
    %256 = vector.shape_cast %255 : vector<24xf32> to vector<24x1xf32>
    %257 = vector.broadcast %256 : vector<24x1xf32> to vector<24x24xf32>
    %258 = arith.subf %254, %257 : vector<24x24xf32>
    %259 = math.exp %258 : vector<24x24xf32>
    %cst_121 = arith.constant dense<0.000000e+00> : vector<24xf32>
    %260 = vector.multi_reduction <add>, %259, %cst_121 [1] : vector<24x24xf32> to vector<24xf32>
    %261 = vector.shape_cast %260 : vector<24xf32> to vector<24x1xf32>
    %262 = tpu.reciprocal %261 {approx = true} : vector<24x1xf32> -> vector<24x1xf32>
    %263 = vector.broadcast %262 : vector<24x1xf32> to vector<24x24xf32>
    %264 = arith.mulf %259, %263 : vector<24x24xf32>
    %cst_122 = arith.constant dense<0.000000e+00> : vector<24x16xf32>
    %265 = tpu.matmul %264, %251, %cst_122 {dimension_numbers = #tpu.dot_dimension_numbers<[1], [0], [0], [1], [0, 0, 1, 1], [], []>} : vector<24x24xf32>, vector<24x16xf32>, vector<24x16xf32> -> vector<24x16xf32>
    %c0_123 = arith.constant 0 : index
    %c0_124 = arith.constant 0 : index
    %266 = vector.load %arg18[%c0_123, %c0_124] : memref<24x64xf32, #tpu.memory_space<vmem>>, vector<24x16xf32>
    tpu.vector_store %arg18[%c0_123, %c0_124], %265 {strides = array<i32>} : memref<24x64xf32, #tpu.memory_space<vmem>>, vector<24x16xf32>,
    %267 = vector.extract_strided_slice %247 {offsets = [0, 16], sizes = [24, 16], strides = [1, 1]} : vector<24x192xf32> to vector<24x16xf32>
    %268 = vector.extract_strided_slice %247 {offsets = [0, 144], sizes = [24, 16], strides = [1, 1]} : vector<24x192xf32> to vector<24x16xf32>
    %269 = vector.extract_strided_slice %249 {offsets = [16, 0], sizes = [16, 24], strides = [1, 1]} : vector<64x24xf32> to vector<16x24xf32>
    %cst_125 = arith.constant dense<0.000000e+00> : vector<24x24xf32>
    %270 = tpu.matmul %267, %269, %cst_125 {dimension_numbers = #tpu.dot_dimension_numbers<[1], [0], [0], [1], [0, 0, 1, 1], [], []>} : vector<24x16xf32>, vector<16x24xf32>, vector<24x24xf32> -> vector<24x24xf32>
    %271 = arith.addf %270, %60 : vector<24x24xf32>
    %cst_126 = arith.constant dense<0xFF800000> : vector<24xf32>
    %272 = vector.multi_reduction <maximumf>, %271, %cst_126 [1] : vector<24x24xf32> to vector<24xf32>
    %273 = vector.shape_cast %272 : vector<24xf32> to vector<24x1xf32>
    %274 = vector.broadcast %273 : vector<24x1xf32> to vector<24x24xf32>
    %275 = arith.subf %271, %274 : vector<24x24xf32>
    %276 = math.exp %275 : vector<24x24xf32>
    %cst_127 = arith.constant dense<0.000000e+00> : vector<24xf32>
    %277 = vector.multi_reduction <add>, %276, %cst_127 [1] : vector<24x24xf32> to vector<24xf32>
    %278 = vector.shape_cast %277 : vector<24xf32> to vector<24x1xf32>
    %279 = tpu.reciprocal %278 {approx = true} : vector<24x1xf32> -> vector<24x1xf32>
    %280 = vector.broadcast %279 : vector<24x1xf32> to vector<24x24xf32>
    %281 = arith.mulf %276, %280 : vector<24x24xf32>
    %cst_128 = arith.constant dense<0.000000e+00> : vector<24x16xf32>
    %282 = tpu.matmul %281, %268, %cst_128 {dimension_numbers = #tpu.dot_dimension_numbers<[1], [0], [0], [1], [0, 0, 1, 1], [], []>} : vector<24x24xf32>, vector<24x16xf32>, vector<24x16xf32> -> vector<24x16xf32>
    %c0_129 = arith.constant 0 : index
    %c16_130 = arith.constant 16 : index
    %283 = vector.load %arg18[%c0_129, %c16_130] : memref<24x64xf32, #tpu.memory_space<vmem>>, vector<24x16xf32>
    tpu.vector_store %arg18[%c0_129, %c16_130], %282 {strides = array<i32>} : memref<24x64xf32, #tpu.memory_space<vmem>>, vector<24x16xf32>,
    %284 = vector.extract_strided_slice %247 {offsets = [0, 32], sizes = [24, 16], strides = [1, 1]} : vector<24x192xf32> to vector<24x16xf32>
    %285 = vector.extract_strided_slice %247 {offsets = [0, 160], sizes = [24, 16], strides = [1, 1]} : vector<24x192xf32> to vector<24x16xf32>
    %286 = vector.extract_strided_slice %249 {offsets = [32, 0], sizes = [16, 24], strides = [1, 1]} : vector<64x24xf32> to vector<16x24xf32>
    %cst_131 = arith.constant dense<0.000000e+00> : vector<24x24xf32>
    %287 = tpu.matmul %284, %286, %cst_131 {dimension_numbers = #tpu.dot_dimension_numbers<[1], [0], [0], [1], [0, 0, 1, 1], [], []>} : vector<24x16xf32>, vector<16x24xf32>, vector<24x24xf32> -> vector<24x24xf32>
    %288 = arith.addf %287, %60 : vector<24x24xf32>
    %cst_132 = arith.constant dense<0xFF800000> : vector<24xf32>
    %289 = vector.multi_reduction <maximumf>, %288, %cst_132 [1] : vector<24x24xf32> to vector<24xf32>
    %290 = vector.shape_cast %289 : vector<24xf32> to vector<24x1xf32>
    %291 = vector.broadcast %290 : vector<24x1xf32> to vector<24x24xf32>
    %292 = arith.subf %288, %291 : vector<24x24xf32>
    %293 = math.exp %292 : vector<24x24xf32>
    %cst_133 = arith.constant dense<0.000000e+00> : vector<24xf32>
    %294 = vector.multi_reduction <add>, %293, %cst_133 [1] : vector<24x24xf32> to vector<24xf32>
    %295 = vector.shape_cast %294 : vector<24xf32> to vector<24x1xf32>
    %296 = tpu.reciprocal %295 {approx = true} : vector<24x1xf32> -> vector<24x1xf32>
    %297 = vector.broadcast %296 : vector<24x1xf32> to vector<24x24xf32>
    %298 = arith.mulf %293, %297 : vector<24x24xf32>
    %cst_134 = arith.constant dense<0.000000e+00> : vector<24x16xf32>
    %299 = tpu.matmul %298, %285, %cst_134 {dimension_numbers = #tpu.dot_dimension_numbers<[1], [0], [0], [1], [0, 0, 1, 1], [], []>} : vector<24x24xf32>, vector<24x16xf32>, vector<24x16xf32> -> vector<24x16xf32>
    %c0_135 = arith.constant 0 : index
    %c32_136 = arith.constant 32 : index
    %300 = vector.load %arg18[%c0_135, %c32_136] : memref<24x64xf32, #tpu.memory_space<vmem>>, vector<24x16xf32>
    tpu.vector_store %arg18[%c0_135, %c32_136], %299 {strides = array<i32>} : memref<24x64xf32, #tpu.memory_space<vmem>>, vector<24x16xf32>,
    %301 = vector.extract_strided_slice %247 {offsets = [0, 48], sizes = [24, 16], strides = [1, 1]} : vector<24x192xf32> to vector<24x16xf32>
    %302 = vector.extract_strided_slice %247 {offsets = [0, 176], sizes = [24, 16], strides = [1, 1]} : vector<24x192xf32> to vector<24x16xf32>
    %303 = vector.extract_strided_slice %249 {offsets = [48, 0], sizes = [16, 24], strides = [1, 1]} : vector<64x24xf32> to vector<16x24xf32>
    %cst_137 = arith.constant dense<0.000000e+00> : vector<24x24xf32>
    %304 = tpu.matmul %301, %303, %cst_137 {dimension_numbers = #tpu.dot_dimension_numbers<[1], [0], [0], [1], [0, 0, 1, 1], [], []>} : vector<24x16xf32>, vector<16x24xf32>, vector<24x24xf32> -> vector<24x24xf32>
    %305 = arith.addf %304, %60 : vector<24x24xf32>
    %cst_138 = arith.constant dense<0xFF800000> : vector<24xf32>
    %306 = vector.multi_reduction <maximumf>, %305, %cst_138 [1] : vector<24x24xf32> to vector<24xf32>
    %307 = vector.shape_cast %306 : vector<24xf32> to vector<24x1xf32>
    %308 = vector.broadcast %307 : vector<24x1xf32> to vector<24x24xf32>
    %309 = arith.subf %305, %308 : vector<24x24xf32>
    %310 = math.exp %309 : vector<24x24xf32>
    %cst_139 = arith.constant dense<0.000000e+00> : vector<24xf32>
    %311 = vector.multi_reduction <add>, %310, %cst_139 [1] : vector<24x24xf32> to vector<24xf32>
    %312 = vector.shape_cast %311 : vector<24xf32> to vector<24x1xf32>
    %313 = tpu.reciprocal %312 {approx = true} : vector<24x1xf32> -> vector<24x1xf32>
    %314 = vector.broadcast %313 : vector<24x1xf32> to vector<24x24xf32>
    %315 = arith.mulf %310, %314 : vector<24x24xf32>
    %cst_140 = arith.constant dense<0.000000e+00> : vector<24x16xf32>
    %316 = tpu.matmul %315, %302, %cst_140 {dimension_numbers = #tpu.dot_dimension_numbers<[1], [0], [0], [1], [0, 0, 1, 1], [], []>} : vector<24x24xf32>, vector<24x16xf32>, vector<24x16xf32> -> vector<24x16xf32>
    %c0_141 = arith.constant 0 : index
    %c48_142 = arith.constant 48 : index
    %317 = vector.load %arg18[%c0_141, %c48_142] : memref<24x64xf32, #tpu.memory_space<vmem>>, vector<24x16xf32>
    tpu.vector_store %arg18[%c0_141, %c48_142], %316 {strides = array<i32>} : memref<24x64xf32, #tpu.memory_space<vmem>>, vector<24x16xf32>,
    %c0_143 = arith.constant 0 : index
    %c0_144 = arith.constant 0 : index
    %318 = vector.load %arg18[%c0_143, %c0_144] : memref<24x64xf32, #tpu.memory_space<vmem>>, vector<24x64xf32>
    %319 = arith.truncf %318 : vector<24x64xf32> to vector<24x64xbf16>
    %c1_145 = arith.constant 1 : index
    %c0_146 = arith.constant 0 : index
    %c0_147 = arith.constant 0 : index
    %320 = vector.load %arg12[%c1_145, %c0_146, %c0_147] : memref<2x64x64xbf16, #tpu.memory_space<vmem>>, vector<1x64x64xbf16>
    %321 = vector.shape_cast %320 : vector<1x64x64xbf16> to vector<64x64xbf16>
    %cst_148 = arith.constant dense<0.000000e+00> : vector<24x64xf32>
    %322 = tpu.matmul %319, %321, %cst_148 {dimension_numbers = #tpu.dot_dimension_numbers<[1], [0], [0], [1], [0, 0, 1, 1], [], []>} : vector<24x64xbf16>, vector<64x64xbf16>, vector<24x64xf32> -> vector<24x64xf32>
    %c19 = arith.constant 19 : index
    %c0_149 = arith.constant 0 : index
    %323 = vector.load %arg7[%c19, %c0_149] : memref<23x256xf32, #tpu.memory_space<vmem>>, vector<1x64xf32>
    %324 = vector.broadcast %323 : vector<1x64xf32> to vector<24x64xf32>
    %325 = arith.addf %322, %324 : vector<24x64xf32>
    %326 = arith.addf %218, %325 : vector<24x64xf32>
    %c17 = arith.constant 17 : index
    %c0_150 = arith.constant 0 : index
    %327 = vector.load %arg7[%c17, %c0_150] : memref<23x256xf32, #tpu.memory_space<vmem>>, vector<1x64xf32>
    %c18 = arith.constant 18 : index
    %c0_151 = arith.constant 0 : index
    %328 = vector.load %arg7[%c18, %c0_151] : memref<23x256xf32, #tpu.memory_space<vmem>>, vector<1x64xf32>
    %cst_152 = arith.constant dense<0.000000e+00> : vector<24xf32>
    %329 = vector.multi_reduction <add>, %326, %cst_152 [1] : vector<24x64xf32> to vector<24xf32>
    %330 = vector.shape_cast %329 : vector<24xf32> to vector<24x1xf32>
    %cst_153 = arith.constant 6.400000e+01 : f32
    %331 = vector.broadcast %cst_153 : f32 to vector<24x1xf32>
    %332 = arith.divf %330, %331 : vector<24x1xf32>
    %333 = vector.broadcast %332 : vector<24x1xf32> to vector<24x64xf32>
    %334 = arith.subf %326, %333 : vector<24x64xf32>
    %335 = arith.mulf %334, %334 : vector<24x64xf32>
    %cst_154 = arith.constant dense<0.000000e+00> : vector<24xf32>
    %336 = vector.multi_reduction <add>, %335, %cst_154 [1] : vector<24x64xf32> to vector<24xf32>
    %337 = vector.shape_cast %336 : vector<24xf32> to vector<24x1xf32>
    %cst_155 = arith.constant 6.400000e+01 : f32
    %338 = vector.broadcast %cst_155 : f32 to vector<24x1xf32>
    %339 = arith.divf %337, %338 : vector<24x1xf32>
    %cst_156 = arith.constant 9.99999974E-6 : f32
    %340 = vector.broadcast %cst_156 : f32 to vector<24x1xf32>
    %341 = arith.addf %339, %340 : vector<24x1xf32>
    %342 = math.rsqrt %341 : vector<24x1xf32>
    %343 = vector.broadcast %342 : vector<24x1xf32> to vector<24x64xf32>
    %344 = arith.mulf %334, %343 : vector<24x64xf32>
    %345 = vector.broadcast %327 : vector<1x64xf32> to vector<24x64xf32>
    %346 = arith.mulf %344, %345 : vector<24x64xf32>
    %347 = vector.broadcast %328 : vector<1x64xf32> to vector<24x64xf32>
    %348 = arith.addf %346, %347 : vector<24x64xf32>
    %349 = arith.truncf %348 : vector<24x64xf32> to vector<24x64xbf16>
    %c1_157 = arith.constant 1 : index
    %c0_158 = arith.constant 0 : index
    %c0_159 = arith.constant 0 : index
    %350 = vector.load %arg13[%c1_157, %c0_158, %c0_159] : memref<2x64x256xbf16, #tpu.memory_space<vmem>>, vector<1x64x256xbf16>
    %351 = vector.shape_cast %350 : vector<1x64x256xbf16> to vector<64x256xbf16>
    %cst_160 = arith.constant dense<0.000000e+00> : vector<24x256xf32>
    %352 = tpu.matmul %349, %351, %cst_160 {dimension_numbers = #tpu.dot_dimension_numbers<[1], [0], [0], [1], [0, 0, 1, 1], [], []>} : vector<24x64xbf16>, vector<64x256xbf16>, vector<24x256xf32> -> vector<24x256xf32>
    %c22 = arith.constant 22 : index
    %c0_161 = arith.constant 0 : index
    %353 = vector.load %arg7[%c22, %c0_161] : memref<23x256xf32, #tpu.memory_space<vmem>>, vector<1x256xf32>
    %354 = vector.broadcast %353 : vector<1x256xf32> to vector<24x256xf32>
    %355 = arith.addf %352, %354 : vector<24x256xf32>
    %cst_162 = arith.constant 5.000000e-01 : f32
    %356 = vector.broadcast %cst_162 : f32 to vector<24x256xf32>
    %357 = arith.mulf %356, %355 : vector<24x256xf32>
    %cst_163 = arith.constant 4.471500e-02 : f32
    %358 = vector.broadcast %cst_163 : f32 to vector<24x256xf32>
    %359 = arith.mulf %358, %355 : vector<24x256xf32>
    %360 = arith.mulf %359, %355 : vector<24x256xf32>
    %361 = arith.mulf %360, %355 : vector<24x256xf32>
    %362 = arith.addf %355, %361 : vector<24x256xf32>
    %cst_164 = arith.constant 0.797884583 : f32
    %363 = vector.broadcast %cst_164 : f32 to vector<24x256xf32>
    %364 = arith.mulf %363, %362 : vector<24x256xf32>
    %365 = math.tanh %364 : vector<24x256xf32>
    %cst_165 = arith.constant 1.000000e+00 : f32
    %366 = vector.broadcast %cst_165 : f32 to vector<24x256xf32>
    %367 = arith.addf %366, %365 : vector<24x256xf32>
    %368 = arith.mulf %357, %367 : vector<24x256xf32>
    %369 = arith.truncf %368 : vector<24x256xf32> to vector<24x256xbf16>
    %c1_166 = arith.constant 1 : index
    %c0_167 = arith.constant 0 : index
    %c0_168 = arith.constant 0 : index
    %370 = vector.load %arg14[%c1_166, %c0_167, %c0_168] : memref<2x256x64xbf16, #tpu.memory_space<vmem>>, vector<1x256x64xbf16>
    %371 = vector.shape_cast %370 : vector<1x256x64xbf16> to vector<256x64xbf16>
    %cst_169 = arith.constant dense<0.000000e+00> : vector<24x64xf32>
    %372 = tpu.matmul %369, %371, %cst_169 {dimension_numbers = #tpu.dot_dimension_numbers<[1], [0], [0], [1], [0, 0, 1, 1], [], []>} : vector<24x256xbf16>, vector<256x64xbf16>, vector<24x64xf32> -> vector<24x64xf32>
    %c20 = arith.constant 20 : index
    %c0_170 = arith.constant 0 : index
    %373 = vector.load %arg7[%c20, %c0_170] : memref<23x256xf32, #tpu.memory_space<vmem>>, vector<1x64xf32>
    %374 = vector.broadcast %373 : vector<1x64xf32> to vector<24x64xf32>
    %375 = arith.addf %372, %374 : vector<24x64xf32>
    %376 = arith.addf %326, %375 : vector<24x64xf32>
    %c4 = arith.constant 4 : index
    %c0_171 = arith.constant 0 : index
    %377 = vector.load %arg7[%c4, %c0_171] : memref<23x256xf32, #tpu.memory_space<vmem>>, vector<1x64xf32>
    %c5 = arith.constant 5 : index
    %c0_172 = arith.constant 0 : index
    %378 = vector.load %arg7[%c5, %c0_172] : memref<23x256xf32, #tpu.memory_space<vmem>>, vector<1x64xf32>
    %cst_173 = arith.constant dense<0.000000e+00> : vector<24xf32>
    %379 = vector.multi_reduction <add>, %376, %cst_173 [1] : vector<24x64xf32> to vector<24xf32>
    %380 = vector.shape_cast %379 : vector<24xf32> to vector<24x1xf32>
    %cst_174 = arith.constant 6.400000e+01 : f32
    %381 = vector.broadcast %cst_174 : f32 to vector<24x1xf32>
    %382 = arith.divf %380, %381 : vector<24x1xf32>
    %383 = vector.broadcast %382 : vector<24x1xf32> to vector<24x64xf32>
    %384 = arith.subf %376, %383 : vector<24x64xf32>
    %385 = arith.mulf %384, %384 : vector<24x64xf32>
    %cst_175 = arith.constant dense<0.000000e+00> : vector<24xf32>
    %386 = vector.multi_reduction <add>, %385, %cst_175 [1] : vector<24x64xf32> to vector<24xf32>
    %387 = vector.shape_cast %386 : vector<24xf32> to vector<24x1xf32>
    %cst_176 = arith.constant 6.400000e+01 : f32
    %388 = vector.broadcast %cst_176 : f32 to vector<24x1xf32>
    %389 = arith.divf %387, %388 : vector<24x1xf32>
    %cst_177 = arith.constant 9.99999974E-6 : f32
    %390 = vector.broadcast %cst_177 : f32 to vector<24x1xf32>
    %391 = arith.addf %389, %390 : vector<24x1xf32>
    %392 = math.rsqrt %391 : vector<24x1xf32>
    %393 = vector.broadcast %392 : vector<24x1xf32> to vector<24x64xf32>
    %394 = arith.mulf %384, %393 : vector<24x64xf32>
    %395 = vector.broadcast %377 : vector<1x64xf32> to vector<24x64xf32>
    %396 = arith.mulf %394, %395 : vector<24x64xf32>
    %397 = vector.broadcast %378 : vector<1x64xf32> to vector<24x64xf32>
    %398 = arith.addf %396, %397 : vector<24x64xf32>
    %399 = vector.extract_strided_slice %398 {offsets = [8, 0], sizes = [8, 64], strides = [1, 1]} : vector<24x64xf32> to vector<8x64xf32>
    %400 = arith.truncf %399 : vector<8x64xf32> to vector<8x64xbf16>
    %c0_178 = arith.constant 0 : index
    %c0_179 = arith.constant 0 : index
    %401 = vector.load %arg15[%c0_178, %c0_179] : memref<64x128xbf16, #tpu.memory_space<vmem>>, vector<64x128xbf16>
    %cst_180 = arith.constant dense<0.000000e+00> : vector<8x128xf32>
    %402 = tpu.matmul %400, %401, %cst_180 {dimension_numbers = #tpu.dot_dimension_numbers<[1], [0], [0], [1], [0, 0, 1, 1], [], []>} : vector<8x64xbf16>, vector<64x128xbf16>, vector<8x128xf32> -> vector<8x128xf32>
    %c6 = arith.constant 6 : index
    %c0_181 = arith.constant 0 : index
    %403 = vector.load %arg7[%c6, %c0_181] : memref<23x256xf32, #tpu.memory_space<vmem>>, vector<1x128xf32>
    %404 = vector.broadcast %403 : vector<1x128xf32> to vector<8x128xf32>
    %405 = arith.addf %402, %404 : vector<8x128xf32>
    %c0_182 = arith.constant 0 : index
    %c0_183 = arith.constant 0 : index
    %c0_184 = arith.constant 0 : index
    %406 = vector.load %arg16[%c0_182, %c0_183, %c0_184] : memref<1x8x128xf32, #tpu.memory_space<vmem>>, vector<1x8x128xf32>
    %407 = vector.shape_cast %406 : vector<1x8x128xf32> to vector<8x128xf32>
    %408 = vector.shape_cast %405 : vector<8x128xf32> to vector<1x8x128xf32>
    tpu.vector_store %arg16[%c0_182, %c0_183, %c0_184], %408 {strides = array<i32>} : memref<1x8x128xf32, #tpu.memory_space<vmem>>, vector<1x8x128xf32>,
    return
  }
  func.func @transform_0(%arg0: i32) -> (i32, i32, i32) {
    %c0_i32 = arith.constant 0 : i32
    %c0_i32_0 = arith.constant 0 : i32
    %c0_i32_1 = arith.constant 0 : i32
    return %arg0, %c0_i32, %c0_i32_0 : i32, i32, i32
  }
  func.func @transform_1(%arg0: i32) -> (i32, i32, i32) {
    %c0_i32 = arith.constant 0 : i32
    %c0_i32_0 = arith.constant 0 : i32
    %c0_i32_1 = arith.constant 0 : i32
    return %arg0, %c0_i32, %c0_i32_0 : i32, i32, i32
  }
  func.func @transform_2(%arg0: i32) -> (i32, i32, i32) {
    %c0_i32 = arith.constant 0 : i32
    %c0_i32_0 = arith.constant 0 : i32
    %c0_i32_1 = arith.constant 0 : i32
    return %arg0, %c0_i32, %c0_i32_0 : i32, i32, i32
  }
  func.func @transform_3(%arg0: i32) -> (i32, i32, i32) {
    %c0_i32 = arith.constant 0 : i32
    %c0_i32_0 = arith.constant 0 : i32
    %c0_i32_1 = arith.constant 0 : i32
    return %arg0, %c0_i32, %c0_i32_0 : i32, i32, i32
  }
  func.func @transform_4(%arg0: i32) -> (i32, i32, i32) {
    %c0_i32 = arith.constant 0 : i32
    %c0_i32_0 = arith.constant 0 : i32
    %c0_i32_1 = arith.constant 0 : i32
    return %arg0, %c0_i32, %c0_i32_0 : i32, i32, i32
  }
  func.func @transform_5(%arg0: i32) -> (i32, i32) {
    %c0_i32 = arith.constant 0 : i32
    %c0_i32_0 = arith.constant 0 : i32
    %c0_i32_1 = arith.constant 0 : i32
    return %c0_i32, %c0_i32_0 : i32, i32
  }
  func.func @transform_6(%arg0: i32) -> (i32, i32) {
    %c0_i32 = arith.constant 0 : i32
    %c0_i32_0 = arith.constant 0 : i32
    %c0_i32_1 = arith.constant 0 : i32
    return %c0_i32, %c0_i32_0 : i32, i32
  }
  func.func @transform_7(%arg0: i32) -> (i32, i32) {
    %c0_i32 = arith.constant 0 : i32
    %c0_i32_0 = arith.constant 0 : i32
    %c0_i32_1 = arith.constant 0 : i32
    return %c0_i32, %c0_i32_0 : i32, i32
  }
  func.func @transform_8(%arg0: i32) -> (i32, i32) {
    %c0_i32 = arith.constant 0 : i32
    %c0_i32_0 = arith.constant 0 : i32
    %c0_i32_1 = arith.constant 0 : i32
    return %c0_i32, %c0_i32_0 : i32, i32
  }
  func.func @transform_9(%arg0: i32) -> (i32, i32) {
    %c0_i32 = arith.constant 0 : i32
    %c0_i32_0 = arith.constant 0 : i32
    %c0_i32_1 = arith.constant 0 : i32
    return %c0_i32, %c0_i32_0 : i32, i32
  }
  func.func @transform_10(%arg0: i32) -> (i32, i32, i32) {
    %c0_i32 = arith.constant 0 : i32
    %c0_i32_0 = arith.constant 0 : i32
    %c0_i32_1 = arith.constant 0 : i32
    %c0_i32_2 = arith.constant 0 : i32
    return %c0_i32, %c0_i32_0, %c0_i32_1 : i32, i32, i32
  }
  func.func @transform_11(%arg0: i32) -> (i32, i32, i32) {
    %c0_i32 = arith.constant 0 : i32
    %c0_i32_0 = arith.constant 0 : i32
    %c0_i32_1 = arith.constant 0 : i32
    %c0_i32_2 = arith.constant 0 : i32
    return %c0_i32, %c0_i32_0, %c0_i32_1 : i32, i32, i32
  }
  func.func @transform_12(%arg0: i32) -> (i32, i32, i32) {
    %c0_i32 = arith.constant 0 : i32
    %c0_i32_0 = arith.constant 0 : i32
    %c0_i32_1 = arith.constant 0 : i32
    %c0_i32_2 = arith.constant 0 : i32
    return %c0_i32, %c0_i32_0, %c0_i32_1 : i32, i32, i32
  }
  func.func @transform_13(%arg0: i32) -> (i32, i32, i32) {
    %c0_i32 = arith.constant 0 : i32
    %c0_i32_0 = arith.constant 0 : i32
    %c0_i32_1 = arith.constant 0 : i32
    %c0_i32_2 = arith.constant 0 : i32
    return %c0_i32, %c0_i32_0, %c0_i32_1 : i32, i32, i32
  }
  func.func @transform_14(%arg0: i32) -> (i32, i32) {
    %c0_i32 = arith.constant 0 : i32
    %c0_i32_0 = arith.constant 0 : i32
    %c0_i32_1 = arith.constant 0 : i32
    return %c0_i32, %c0_i32_0 : i32, i32
  }
  func.func @transform_15(%arg0: i32) -> (i32, i32, i32) {
    %c0_i32 = arith.constant 0 : i32
    %c0_i32_0 = arith.constant 0 : i32
    %c0_i32_1 = arith.constant 0 : i32
    return %arg0, %c0_i32, %c0_i32_0 : i32, i32, i32
  }
}

</mosaic_0001>

<llo_original>
// kernel: _lambda_.2
$region0: #{_lambda_.2}
  #allocation0 [shape = 'u32[]', space=smem, size = 0x4, offset = 0x4, fixed_abs, tag = 'smem constant byte address 0x4 - core index']
  #allocation1 [shape = 'u32[144,128]{1,0:T(1,128)}', space=vmem, size = 0x12000, scoped, tag = 'internal scratch']
  %s0 = inlined_call_operand.vmem [shape: bf16[16,48], index: 0, kind: input, shape index: {}]
  %s1 = inlined_call_operand.vmem [shape: bf16[48,784], index: 1, kind: input, shape index: {}]
  %s2 = inlined_call_operand.vmem [shape: f32[16,1], index: 2, kind: input, shape index: {}]
  %s3 = inlined_call_operand.vmem [shape: bf16[16,784], index: 3, kind: output, shape index: {}]
  %s4 = sld [smem:[#allocation0]]
  $region22: #{_lambda_.2} parent=0
    _
  %s6 = ssub.s32 1, %s4
  %s7 = scalar_select 0, %s6, %s4
  // Predicated region
  $region2: #{_lambda_.2} parent=0 // pred_check
    _
  $region3: #{_lambda_.2} parent=0 // pred_check_branch
    %9 = sbr.rel (0) target = $region5
  $region4: #{_lambda_.2} parent=0 // pred_region
    _
  $region5: #{_lambda_.2} parent=0 // pred_fallthru
    _
  // Predicated region
  $region6: #{_lambda_.2} parent=0 // pred_check
    _
  $region7: #{_lambda_.2} parent=0 // pred_check_branch
    %11 = sbr.rel (0) target = $region9
  $region8: #{_lambda_.2} parent=0 // pred_region
    _
  $region9: #{_lambda_.2} parent=0 // pred_fallthru
    _
  // Predicated region
  $region10: #{_lambda_.2} parent=0 // pred_check
    _
  $region11: #{_lambda_.2} parent=0 // pred_check_branch
    %13 = sbr.rel (0) target = $region13
  $region12: #{_lambda_.2} parent=0 // pred_region
    _
  $region13: #{_lambda_.2} parent=0 // pred_fallthru
    _
  %v15 = vld [vmem:[%s0] sm:$0xf]
  %v16 = vld [vmem:[%s0 + $0x4] sm:$0xf]
  %v17 = vld [vmem:[%s1] sm:$0xff]
  %v18 = vld [vmem:[%s1 + $0x8] sm:$0xff]
  %v19 = vld [vmem:[%s1 + $0x10] sm:$0xff]
  %v20 = vld [vmem:[%s1 + $0x18] sm:$0xf]
  %v21 = vld [vmem:[%s1 + $0x1c] sm:$0xff]
  %v22 = vld [vmem:[%s1 + $0x24] sm:$0xff]
  %v23 = vld [vmem:[%s1 + $0x2c] sm:$0xff]
  %v24 = vld [vmem:[%s1 + $0x34] sm:$0xf]
  %v25 = vld [vmem:[%s1 + $0x38] sm:$0xff]
  %v26 = vld [vmem:[%s1 + $0x40] sm:$0xff]
  %v27 = vld [vmem:[%s1 + $0x48] sm:$0xff]
  %v28 = vld [vmem:[%s1 + $0x50] sm:$0xf]
  %v29 = vld [vmem:[%s1 + $0x54] sm:$0xff]
  %v30 = vld [vmem:[%s1 + $0x5c] sm:$0xff]
  %v31 = vld [vmem:[%s1 + $0x64] sm:$0xff]
  %v32 = vld [vmem:[%s1 + $0x6c] sm:$0xf]
  %v33 = vld [vmem:[%s1 + $0x70] sm:$0xff]
  %v34 = vld [vmem:[%s1 + $0x78] sm:$0xff]
  %v35 = vld [vmem:[%s1 + $0x80] sm:$0xff]
  %v36 = vld [vmem:[%s1 + $0x88] sm:$0xf]
  %v37 = vld [vmem:[%s1 + $0x8c] sm:$0xff]
  %v38 = vld [vmem:[%s1 + $0x94] sm:$0xff]
  %v39 = vld [vmem:[%s1 + $0x9c] sm:$0xff]
  %v40 = vld [vmem:[%s1 + $0xa4] sm:$0xf]
  %v41 = vld [vmem:[%s2] sm:$0xff]
  %v42 = vld [vmem:[%s2 + $0x8] sm:$0xff]
  %44 = vset.pattern.permute.xlu0 0
  %45 = vperm.xlu0 %44, %v41
  %v46 = vpop.permute.xlu0 %45
  %49 = vset.pattern.permute.xlu0 0
  %50 = vperm.xlu0 %49, %v42
  %v51 = vpop.permute.xlu0 %50
  %v55 = vunpack.c.l.b16 %v15
  %v56 = vunpack.c.l.b16 %v16
  %v57 = vpack.c.b16 %v56, %v55
  %v82 = vunpack.c.l.b16 %v17
  %v83 = vunpack.c.h.b16 %v17
  %v84 = vunpack.c.l.b16 %v18
  %v85 = vunpack.c.h.b16 %v18
  %v86 = vunpack.c.l.b16 %v19
  %v87 = vunpack.c.h.b16 %v19
  %v88 = vunpack.c.l.b16 %v20
  %v89 = vunpack.c.l.b16 %v21
  %v90 = vunpack.c.h.b16 %v21
  %v91 = vunpack.c.l.b16 %v22
  %v92 = vunpack.c.h.b16 %v22
  %v93 = vunpack.c.l.b16 %v23
  %v94 = vunpack.c.h.b16 %v23
  %v95 = vunpack.c.l.b16 %v24
  %v96 = vunpack.c.l.b16 %v25
  %v97 = vunpack.c.h.b16 %v25
  %v98 = vunpack.c.l.b16 %v26
  %v99 = vunpack.c.h.b16 %v26
  %v100 = vunpack.c.l.b16 %v27
  %v101 = vunpack.c.h.b16 %v27
  %v102 = vunpack.c.l.b16 %v28
  %v103 = vunpack.c.l.b16 %v29
  %v104 = vunpack.c.h.b16 %v29
  %v105 = vunpack.c.l.b16 %v30
  %v106 = vunpack.c.h.b16 %v30
  %v107 = vunpack.c.l.b16 %v31
  %v108 = vunpack.c.h.b16 %v31
  %v109 = vunpack.c.l.b16 %v32
  %v110 = vunpack.c.l.b16 %v33
  %v111 = vunpack.c.h.b16 %v33
  %v112 = vunpack.c.l.b16 %v34
  %v113 = vunpack.c.h.b16 %v34
  %v114 = vunpack.c.l.b16 %v35
  %v115 = vunpack.c.h.b16 %v35
  %v116 = vunpack.c.l.b16 %v36
  %v117 = vunpack.c.l.b16 %v37
  %v118 = vunpack.c.h.b16 %v37
  %v119 = vunpack.c.l.b16 %v38
  %v120 = vunpack.c.h.b16 %v38
  %v121 = vunpack.c.l.b16 %v39
  %v122 = vunpack.c.h.b16 %v39
  %v123 = vunpack.c.l.b16 %v40
  %v124 = vpack.c.b16 %v89, %v82
  %v125 = vpack.c.b16 %v90, %v83
  %v126 = vpack.c.b16 %v91, %v84
  %v127 = vpack.c.b16 %v92, %v85
  %v128 = vpack.c.b16 %v93, %v86
  %v129 = vpack.c.b16 %v94, %v87
  %v130 = vpack.c.b16 %v95, %v88
  %v131 = vpack.c.b16 %v103, %v96
  %v132 = vpack.c.b16 %v104, %v97
  %v133 = vpack.c.b16 %v105, %v98
  %v134 = vpack.c.b16 %v106, %v99
  %v135 = vpack.c.b16 %v107, %v100
  %v136 = vpack.c.b16 %v108, %v101
  %v137 = vpack.c.b16 %v109, %v102
  %v138 = vpack.c.b16 %v117, %v110
  %v139 = vpack.c.b16 %v118, %v111
  %v140 = vpack.c.b16 %v119, %v112
  %v141 = vpack.c.b16 %v120, %v113
  %v142 = vpack.c.b16 %v121, %v114
  %v143 = vpack.c.b16 %v122, %v115
  %v144 = vpack.c.b16 %v123, %v116
  %vm166 = vcmask 392192
  %v168 = vsel %vm166, %v57, 0
  %170 = vmatprep.subr.bf16.mxu0 0
  %171 = vmatpush1.bf16.msra.mxu0 0
  %172 = vmatprep.subr.bf16.mxu0 0
  %173 = vmatpush1.bf16.msra.mxu0 0
  %174 = vmatprep.subr.bf16.mxu0 0
  %175 = vmatpush1.bf16.msra.mxu0 0
  %176 = vmatprep.subr.bf16.mxu0 0
  %177 = vmatpush1.bf16.msra.mxu0 0
  %178 = vmatprep.subr.bf16.mxu0 0
  %179 = vmatpush1.bf16.msra.mxu0 0
  %180 = vmatprep.subr.bf16.mxu0 %v139
  %181 = vmatpush1.bf16.msra.mxu0 %v138
  %182 = vmatprep.subr.bf16.mxu0 %v132
  %183 = vmatpush1.bf16.msra.mxu0 %v131
  %184 = vmatprep.subr.bf16.mxu0 %v125
  %185 = vmatpush1.bf16.msra.mxu0 %v124
  %186 = vmatprep.subr.bf16.mxu0 0
  %187 = vmatpush2.bf16.msra.mxu0 0
  %188 = vmatprep.subr.bf16.mxu0 0
  %189 = vmatpush2.bf16.msra.mxu0 0
  %190 = vmatprep.subr.bf16.mxu0 0
  %191 = vmatpush2.bf16.msra.mxu0 0
  %192 = vmatprep.subr.bf16.mxu0 0
  %193 = vmatpush2.bf16.msra.mxu0 0
  %194 = vmatprep.subr.bf16.mxu0 0
  %195 = vmatpush2.bf16.msra.mxu0 0
  %196 = vmatprep.subr.bf16.mxu0 0
  %197 = vmatpush2.bf16.msra.mxu0 0
  %198 = vmatprep.subr.bf16.mxu0 0
  %199 = vmatpush2.bf16.msra.mxu0 0
  %200 = vmatprep.subr.bf16.mxu0 0
  %201 = vmatpush2.bf16.msra.mxu0 0
  %202 = vmatprep.mubr.bf16.mxu0 0
  %203 = vmatmul.mubr.bf16.gmra.mxu0 %v168
  %v204 = vpop.f32.mrf.mxu0
  %v205 = vadd.f32 %v46, %v204
  %v206 = vpop.f32.mrf.mxu0
  %v207 = vadd.f32 %v46, %v206
  %v208 = vpop.f32.mrf.mxu0
  %v209 = vadd.f32 %v51, %v208
  %v210 = vpop.f32.mrf.mxu0
  %v211 = vadd.f32 %v51, %v210
  %212 = vdwg.mxu0
  %213 = vmatprep.subr.bf16.mxu0 0
  %214 = vmatpush1.bf16.msra.mxu0 0
  %215 = vmatprep.subr.bf16.mxu0 0
  %216 = vmatpush1.bf16.msra.mxu0 0
  %217 = vmatprep.subr.bf16.mxu0 0
  %218 = vmatpush1.bf16.msra.mxu0 0
  %219 = vmatprep.subr.bf16.mxu0 0
  %220 = vmatpush1.bf16.msra.mxu0 0
  %221 = vmatprep.subr.bf16.mxu0 0
  %222 = vmatpush1.bf16.msra.mxu0 0
  %223 = vmatprep.subr.bf16.mxu0 %v141
  %224 = vmatpush1.bf16.msra.mxu0 %v140
  %225 = vmatprep.subr.bf16.mxu0 %v134
  %226 = vmatpush1.bf16.msra.mxu0 %v133
  %227 = vmatprep.subr.bf16.mxu0 %v127
  %228 = vmatpush1.bf16.msra.mxu0 %v126
  %229 = vmatprep.subr.bf16.mxu0 0
  %230 = vmatpush2.bf16.msra.mxu0 0
  %231 = vmatprep.subr.bf16.mxu0 0
  %232 = vmatpush2.bf16.msra.mxu0 0
  %233 = vmatprep.subr.bf16.mxu0 0
  %234 = vmatpush2.bf16.msra.mxu0 0
  %235 = vmatprep.subr.bf16.mxu0 0
  %236 = vmatpush2.bf16.msra.mxu0 0
  %237 = vmatprep.subr.bf16.mxu0 0
  %238 = vmatpush2.bf16.msra.mxu0 0
  %239 = vmatprep.subr.bf16.mxu0 0
  %240 = vmatpush2.bf16.msra.mxu0 0
  %241 = vmatprep.subr.bf16.mxu0 0
  %242 = vmatpush2.bf16.msra.mxu0 0
  %243 = vmatprep.subr.bf16.mxu0 0
  %244 = vmatpush2.bf16.msra.mxu0 0
  %245 = vmatprep.mubr.bf16.mxu0 0
  %246 = vmatmul.mubr.bf16.gmra.mxu0 %v168
  %v247 = vpop.f32.mrf.mxu0
  %v248 = vadd.f32 %v46, %v247
  %v249 = vpop.f32.mrf.mxu0
  %v250 = vadd.f32 %v46, %v249
  %v251 = vpop.f32.mrf.mxu0
  %v252 = vadd.f32 %v51, %v251
  %v253 = vpop.f32.mrf.mxu0
  %v254 = vadd.f32 %v51, %v253
  %255 = vdwg.mxu0
  %256 = vmatprep.subr.bf16.mxu0 0
  %257 = vmatpush1.bf16.msra.mxu0 0
  %258 = vmatprep.subr.bf16.mxu0 0
  %259 = vmatpush1.bf16.msra.mxu0 0
  %260 = vmatprep.subr.bf16.mxu0 0
  %261 = vmatpush1.bf16.msra.mxu0 0
  %262 = vmatprep.subr.bf16.mxu0 0
  %263 = vmatpush1.bf16.msra.mxu0 0
  %264 = vmatprep.subr.bf16.mxu0 0
  %265 = vmatpush1.bf16.msra.mxu0 0
  %266 = vmatprep.subr.bf16.mxu0 %v143
  %267 = vmatpush1.bf16.msra.mxu0 %v142
  %268 = vmatprep.subr.bf16.mxu0 %v136
  %269 = vmatpush1.bf16.msra.mxu0 %v135
  %270 = vmatprep.subr.bf16.mxu0 %v129
  %271 = vmatpush1.bf16.msra.mxu0 %v128
  %272 = vmatprep.subr.bf16.mxu0 0
  %273 = vmatpush2.bf16.msra.mxu0 0
  %274 = vmatprep.subr.bf16.mxu0 0
  %275 = vmatpush2.bf16.msra.mxu0 0
  %276 = vmatprep.subr.bf16.mxu0 0
  %277 = vmatpush2.bf16.msra.mxu0 0
  %278 = vmatprep.subr.bf16.mxu0 0
  %279 = vmatpush2.bf16.msra.mxu0 0
  %280 = vmatprep.subr.bf16.mxu0 0
  %281 = vmatpush2.bf16.msra.mxu0 0
  %282 = vmatprep.subr.bf16.mxu0 0
  %283 = vmatpush2.bf16.msra.mxu0 0
  %284 = vmatprep.subr.bf16.mxu0 0
  %285 = vmatpush2.bf16.msra.mxu0 0
  %286 = vmatprep.subr.bf16.mxu0 0
  %287 = vmatpush2.bf16.msra.mxu0 0
  %288 = vmatprep.mubr.bf16.mxu0 0
  %289 = vmatmul.mubr.bf16.gmra.mxu0 %v168
  %v290 = vpop.f32.mrf.mxu0
  %v291 = vadd.f32 %v46, %v290
  %v292 = vpop.f32.mrf.mxu0
  %v293 = vadd.f32 %v46, %v292
  %v294 = vpop.f32.mrf.mxu0
  %v295 = vadd.f32 %v51, %v294
  %v296 = vpop.f32.mrf.mxu0
  %v297 = vadd.f32 %v51, %v296
  %298 = vdwg.mxu0
  %299 = vmatprep.subr.bf16.mxu0 0
  %300 = vmatpush1.bf16.msra.mxu0 0
  %301 = vmatprep.subr.bf16.mxu0 0
  %302 = vmatpush1.bf16.msra.mxu0 0
  %303 = vmatprep.subr.bf16.mxu0 0
  %304 = vmatpush1.bf16.msra.mxu0 0
  %305 = vmatprep.subr.bf16.mxu0 0
  %306 = vmatpush1.bf16.msra.mxu0 0
  %307 = vmatprep.subr.bf16.mxu0 0
  %308 = vmatpush1.bf16.msra.mxu0 0
  %309 = vmatprep.subr.bf16.mxu0 0
  %310 = vmatpush1.bf16.msra.mxu0 %v144
  %311 = vmatprep.subr.bf16.mxu0 0
  %312 = vmatpush1.bf16.msra.mxu0 %v137
  %313 = vmatprep.subr.bf16.mxu0 0
  %314 = vmatpush1.bf16.msra.mxu0 %v130
  %315 = vmatprep.subr.bf16.mxu0 0
  %316 = vmatpush2.bf16.msra.mxu0 0
  %317 = vmatprep.subr.bf16.mxu0 0
  %318 = vmatpush2.bf16.msra.mxu0 0
  %319 = vmatprep.subr.bf16.mxu0 0
  %320 = vmatpush2.bf16.msra.mxu0 0
  %321 = vmatprep.subr.bf16.mxu0 0
  %322 = vmatpush2.bf16.msra.mxu0 0
  %323 = vmatprep.subr.bf16.mxu0 0
  %324 = vmatpush2.bf16.msra.mxu0 0
  %325 = vmatprep.subr.bf16.mxu0 0
  %326 = vmatpush2.bf16.msra.mxu0 0
  %327 = vmatprep.subr.bf16.mxu0 0
  %328 = vmatpush2.bf16.msra.mxu0 0
  %329 = vmatprep.subr.bf16.mxu0 0
  %330 = vmatpush2.bf16.msra.mxu0 0
  %331 = vmatprep.mubr.bf16.mxu0 0
  %332 = vmatmul.mubr.bf16.gmra.mxu0 %v168
  %v333 = vpop.f32.mrf.mxu0
  %v334 = vadd.f32 %v46, %v333
  %v335 = vpop.f32.mrf.mxu0
  %v336 = vpop.f32.mrf.mxu0
  %v337 = vadd.f32 %v51, %v336
  %v338 = vpop.f32.mrf.mxu0
  %339 = vdwg.mxu0
  %v340 = vmax.f32 %v205, 0.0
  %v341 = vmax.f32 %v207, 0.0
  %v342 = vmax.f32 %v248, 0.0
  %v343 = vmax.f32 %v250, 0.0
  %v344 = vmax.f32 %v291, 0.0
  %v345 = vmax.f32 %v293, 0.0
  %v346 = vmax.f32 %v334, 0.0
  %v347 = vmax.f32 %v209, 0.0
  %v348 = vmax.f32 %v211, 0.0
  %v349 = vmax.f32 %v252, 0.0
  %v350 = vmax.f32 %v254, 0.0
  %v351 = vmax.f32 %v295, 0.0
  %v352 = vmax.f32 %v297, 0.0
  %v353 = vmax.f32 %v337, 0.0
  %v354 = vpack.c.bf16 %v347, %v340
  %v355 = vpack.c.bf16 %v348, %v341
  %v356 = vpack.c.bf16 %v349, %v342
  %v357 = vpack.c.bf16 %v350, %v343
  %v358 = vpack.c.bf16 %v351, %v344
  %v359 = vpack.c.bf16 %v352, %v345
  %v360 = vpack.c.bf16 %v353, %v346
  %v368 = vunpack.c.l.b16 %v354
  %v369 = vunpack.c.l.b16 %v355
  %v370 = vunpack.c.l.b16 %v356
  %v371 = vunpack.c.l.b16 %v357
  %v372 = vunpack.c.l.b16 %v358
  %v373 = vunpack.c.l.b16 %v359
  %v374 = vunpack.c.l.b16 %v360
  %v375 = vunpack.c.h.b16 %v354
  %v376 = vunpack.c.h.b16 %v355
  %v377 = vunpack.c.h.b16 %v356
  %v378 = vunpack.c.h.b16 %v357
  %v379 = vunpack.c.h.b16 %v358
  %v380 = vunpack.c.h.b16 %v359
  %v381 = vunpack.c.h.b16 %v360
  %v382 = vpack.c.b16 %v369, %v368
  %v383 = vpack.c.b16 %v371, %v370
  %v384 = vpack.c.b16 %v373, %v372
  %v385 = vpack.c.b16 %v374, %v374
  %v386 = vpack.c.b16 %v376, %v375
  %v387 = vpack.c.b16 %v378, %v377
  %v388 = vpack.c.b16 %v380, %v379
  %v389 = vpack.c.b16 %v381, %v381
  %398 = vst [vmem:[%s3] sm:$0xff] %v382
  %399 = vst [vmem:[%s3 + $0x8] sm:$0xff] %v383
  %400 = vst [vmem:[%s3 + $0x10] sm:$0xff] %v384
  %vm401 = vcmask 125952
  %402 = vst.msk [vmem:[%s3 + $0x18] sm:$0xf] %vm401, %v385
  %403 = vst [vmem:[%s3 + $0x1c] sm:$0xff] %v386
  %404 = vst [vmem:[%s3 + $0x24] sm:$0xff] %v387
  %405 = vst [vmem:[%s3 + $0x2c] sm:$0xff] %v388
  %406 = vst.msk [vmem:[%s3 + $0x34] sm:$0xf] %vm401, %v389
  // Predicated region
  $region14: #{_lambda_.2} parent=0 // pred_check
    _
  $region15: #{_lambda_.2} parent=0 // pred_check_branch
    %408 = sbr.rel (0) target = $region17
  $region16: #{_lambda_.2} parent=0 // pred_region
    _
  $region17: #{_lambda_.2} parent=0 // pred_fallthru
    _
  // Predicated region
  $region18: #{_lambda_.2} parent=0 // pred_check
    _
  $region19: #{_lambda_.2} parent=0 // pred_check_branch
    %410 = sbr.rel (0) target = $region21
  $region20: #{_lambda_.2} parent=0 // pred_region
    _
  $region21: #{_lambda_.2} parent=0 // pred_fallthru
    _

// kernel: tile.1
$region0: #{tile.1}
  #allocation0 [shape = 's32[1]{0}', space=sflag, size = 0x4, scoped, tag = 'scoped memory for tile.1']
  %s0 = inlined_call_operand.<no memory space> [shape: f32[], index: 0, kind: input, shape index: {}]
  %s1 = inlined_call_operand.vmem [shape: f32[2,1,24], index: 1, kind: output, shape index: {}]
  %v2 = vstv %s0
  %3 = vst [vmem:[%s1] sm:$0x1] %v2
  %s4 = scalar_lea.vmem %s1, 1
  %5 = vst [vmem:[%s4] sm:$0x1] %v2

// kernel: _lambda_.3
$region0: #{_lambda_.3}
  #allocation0 [shape = 'u32[]', space=smem, size = 0x4, offset = 0x4, fixed_abs, tag = 'smem constant byte address 0x4 - core index']
  #allocation1 [shape = 'u32[144,128]{1,0:T(1,128)}', space=vmem, size = 0x12000, scoped, tag = 'internal scratch']
  #allocation2 [shape = 'f32[24,64]{1,0:T(8,128)}', space=vmem, size = 0x3000, scoped, tag = 'scratch operand']
  #allocation3 [shape = 'f32[24,64]{1,0:T(8,128)}', space=vmem, size = 0x3000, scoped, tag = 'scratch operand']
  %s0 = inlined_call_operand.vmem [shape: bf16[2,8,784], index: 0, kind: input, shape index: {}]
  %s1 = inlined_call_operand.vmem [shape: bf16[2,8,8], index: 1, kind: input, shape index: {}]
  %s2 = inlined_call_operand.vmem [shape: f32[2,8,64], index: 2, kind: input, shape index: {}]
  %s3 = inlined_call_operand.vmem [shape: f32[2,8,64], index: 3, kind: input, shape index: {}]
  %s4 = inlined_call_operand.vmem [shape: f32[2,1,24], index: 4, kind: input, shape index: {}]
  %s5 = inlined_call_operand.vmem [shape: f32[24,24], index: 5, kind: input, shape index: {}]
  %s6 = inlined_call_operand.vmem [shape: f32[23,256], index: 6, kind: input, shape index: {}]
  %s7 = inlined_call_operand.vmem [shape: bf16[784,64], index: 7, kind: input, shape index: {}]
  %s8 = inlined_call_operand.vmem [shape: bf16[8,64], index: 8, kind: input, shape index: {}]
  %s9 = inlined_call_operand.vmem [shape: f32[24,64], index: 9, kind: input, shape index: {}]
  %s10 = inlined_call_operand.vmem [shape: bf16[2,64,192], index: 10, kind: input, shape index: {}]
  %s11 = inlined_call_operand.vmem [shape: bf16[2,64,64], index: 11, kind: input, shape index: {}]
  %s12 = inlined_call_operand.vmem [shape: bf16[2,64,256], index: 12, kind: input, shape index: {}]
  %s13 = inlined_call_operand.vmem [shape: bf16[2,256,64], index: 13, kind: input, shape index: {}]
  %s14 = inlined_call_operand.vmem [shape: bf16[64,128], index: 14, kind: input, shape index: {}]
  %s15 = inlined_call_operand.vmem [shape: f32[2,8,128], index: 15, kind: output, shape index: {}]
  %s16 = sld [smem:[#allocation0]]
  $region93: #{_lambda_.3} parent=0
    _
  %s18 = ssub.s32 1, %s16
  %s19 = scalar_select 0, %s18, %s16
  loop: start=0, step=1, limit=4
  $region2: #{_lambda_.3} parent=0 // loop_pre_header
    _
  $region3: #{_lambda_.3} parent=0 // loop_header
    %s21 = sphi 0, %s25
    %p22 = scmp.ge.s32.totalorder %s21, 4
    %s31 = sphi 0, %s33
    %s34 = sphi 0, %s31
    %s35 = sphi 0, %s34
    %s51 = sphi 0, %s35
    %s57 = sphi 0, %s59
    %s60 = sphi 0, %s57
    %s61 = sphi 0, %s60
    %s77 = sphi 0, %s61
    %s83 = sphi 0, %s85
    %s86 = sphi 0, %s83
    %s87 = sphi 0, %s86
    %s103 = sphi 0, %s87
    %s109 = sphi 0, %s111
    %s112 = sphi 0, %s109
    %s113 = sphi 0, %s112
    %s129 = sphi 0, %s113
    %s135 = sphi 0, %s137
    %s138 = sphi 0, %s135
    %s139 = sphi 0, %s138
    %s155 = sphi 0, %s139
    %s159 = sphi 0, %s159
    %s161 = sphi 0, %s159
    %s162 = sphi 0, %s161
    %s176 = sphi 0, %s162
    %s180 = sphi 0, %s180
    %s182 = sphi 0, %s180
    %s183 = sphi 0, %s182
    %s197 = sphi 0, %s183
    %s201 = sphi 0, %s201
    %s203 = sphi 0, %s201
    %s204 = sphi 0, %s203
    %s218 = sphi 0, %s204
    %s222 = sphi 0, %s222
    %s224 = sphi 0, %s222
    %s225 = sphi 0, %s224
    %s239 = sphi 0, %s225
    %s243 = sphi 0, %s243
    %s245 = sphi 0, %s243
    %s246 = sphi 0, %s245
    %s260 = sphi 0, %s246
    %s264 = sphi 0, %s264
    %s266 = sphi 0, %s264
    %s267 = sphi 0, %s266
    %s281 = sphi 0, %s267
    %s285 = sphi 0, %s285
    %s287 = sphi 0, %s285
    %s288 = sphi 0, %s287
    %s302 = sphi 0, %s288
    %s306 = sphi 0, %s306
    %s308 = sphi 0, %s306
    %s309 = sphi 0, %s308
    %s323 = sphi 0, %s309
    %s327 = sphi 0, %s327
    %s329 = sphi 0, %s327
    %s330 = sphi 0, %s329
    %s344 = sphi 0, %s330
    %s348 = sphi 0, %s348
    %s350 = sphi 0, %s348
    %s351 = sphi 0, %s350
    %s365 = sphi 0, %s351
    %s371 = sphi 0, %s373
    %s374 = sphi 0, %s371
    %s375 = sphi 0, %s374
    %s391 = sphi 0, %s375
  $region4: #{_lambda_.3} parent=0 // loop_header_branch
    %24 = sbr.rel (%p22) target = $region8
  $region5: #{_lambda_.3} parent=0 // loop_body
    %s26 = ssub.s32 %s21, 1
    %s27 = ssub.s32 %s21, 2
    %s28 = sadd.s32 %s21, 1
    %s29 = ssub.s32 %s21, %s28
    %p30 = scmp.eq.s32.totalorder %s29, 0
    %s32 = sadd.s32 %s31, 1
    %s33 = scalar_select %p30, %s31, %s32
    %p36 = pneg %p30
    %p37 = scmp.eq.s32.totalorder %s21, 1
    %p38 = por %p36, %p37
    %p39 = scmp.ne.s32.totalorder %s31, %s34
    %p40 = scmp.eq.s32.totalorder %s21, 0
    %p41 = por %p39, %p40
    %p42 = scmp.ne.s32.totalorder %s31, %s34
    %p43 = scmp.eq.s32.totalorder %s26, 1
    %p44 = por %p42, %p43
    %p45 = scmp.ne.s32.totalorder %s34, %s35
    %p46 = scmp.eq.s32.totalorder %s26, 0
    %p47 = por %p45, %p46
    %p48 = scmp.ne.s32.totalorder %s34, %s35
    %p49 = scmp.eq.s32.totalorder %s27, 1
    %p50 = por %p48, %p49
    %p52 = scmp.ne.s32.totalorder %s35, %s51
    %p53 = scmp.eq.s32.totalorder %s27, 0
    %p54 = por %p52, %p53
    %s55 = ssub.s32 %s21, %s28
    %p56 = scmp.eq.s32.totalorder %s55, 0
    %s58 = sadd.s32 %s57, 1
    %s59 = scalar_select %p56, %s57, %s58
    %p62 = pneg %p56
    %p63 = scmp.eq.s32.totalorder %s21, 1
    %p64 = por %p62, %p63
    %p65 = scmp.ne.s32.totalorder %s57, %s60
    %p66 = scmp.eq.s32.totalorder %s21, 0
    %p67 = por %p65, %p66
    %p68 = scmp.ne.s32.totalorder %s57, %s60
    %p69 = scmp.eq.s32.totalorder %s26, 1
    %p70 = por %p68, %p69
    %p71 = scmp.ne.s32.totalorder %s60, %s61
    %p72 = scmp.eq.s32.totalorder %s26, 0
    %p73 = por %p71, %p72
    %p74 = scmp.ne.s32.totalorder %s60, %s61
    %p75 = scmp.eq.s32.totalorder %s27, 1
    %p76 = por %p74, %p75
    %p78 = scmp.ne.s32.totalorder %s61, %s77
    %p79 = scmp.eq.s32.totalorder %s27, 0
    %p80 = por %p78, %p79
    %s81 = ssub.s32 %s21, %s28
    %p82 = scmp.eq.s32.totalorder %s81, 0
    %s84 = sadd.s32 %s83, 1
    %s85 = scalar_select %p82, %s83, %s84
    %p88 = pneg %p82
    %p89 = scmp.eq.s32.totalorder %s21, 1
    %p90 = por %p88, %p89
    %p91 = scmp.ne.s32.totalorder %s83, %s86
    %p92 = scmp.eq.s32.totalorder %s21, 0
    %p93 = por %p91, %p92
    %p94 = scmp.ne.s32.totalorder %s83, %s86
    %p95 = scmp.eq.s32.totalorder %s26, 1
    %p96 = por %p94, %p95
    %p97 = scmp.ne.s32.totalorder %s86, %s87
    %p98 = scmp.eq.s32.totalorder %s26, 0
    %p99 = por %p97, %p98
    %p100 = scmp.ne.s32.totalorder %s86, %s87
    %p101 = scmp.eq.s32.totalorder %s27, 1
    %p102 = por %p100, %p101
    %p104 = scmp.ne.s32.totalorder %s87, %s103
    %p105 = scmp.eq.s32.totalorder %s27, 0
    %p106 = por %p104, %p105
    %s107 = ssub.s32 %s21, %s28
    %p108 = scmp.eq.s32.totalorder %s107, 0
    %s110 = sadd.s32 %s109, 1
    %s111 = scalar_select %p108, %s109, %s110
    %p114 = pneg %p108
    %p115 = scmp.eq.s32.totalorder %s21, 1
    %p116 = por %p114, %p115
    %p117 = scmp.ne.s32.totalorder %s109, %s112
    %p118 = scmp.eq.s32.totalorder %s21, 0
    %p119 = por %p117, %p118
    %p120 = scmp.ne.s32.totalorder %s109, %s112
    %p121 = scmp.eq.s32.totalorder %s26, 1
    %p122 = por %p120, %p121
    %p123 = scmp.ne.s32.totalorder %s112, %s113
    %p124 = scmp.eq.s32.totalorder %s26, 0
    %p125 = por %p123, %p124
    %p126 = scmp.ne.s32.totalorder %s112, %s113
    %p127 = scmp.eq.s32.totalorder %s27, 1
    %p128 = por %p126, %p127
    %p130 = scmp.ne.s32.totalorder %s113, %s129
    %p131 = scmp.eq.s32.totalorder %s27, 0
    %p132 = por %p130, %p131
    %s133 = ssub.s32 %s21, %s28
    %p134 = scmp.eq.s32.totalorder %s133, 0
    %s136 = sadd.s32 %s135, 1
    %s137 = scalar_select %p134, %s135, %s136
    %p140 = pneg %p134
    %p141 = scmp.eq.s32.totalorder %s21, 1
    %p142 = por %p140, %p141
    %p143 = scmp.ne.s32.totalorder %s135, %s138
    %p144 = scmp.eq.s32.totalorder %s21, 0
    %p145 = por %p143, %p144
    %p146 = scmp.ne.s32.totalorder %s135, %s138
    %p147 = scmp.eq.s32.totalorder %s26, 1
    %p148 = por %p146, %p147
    %p149 = scmp.ne.s32.totalorder %s138, %s139
    %p150 = scmp.eq.s32.totalorder %s26, 0
    %p151 = por %p149, %p150
    %p152 = scmp.ne.s32.totalorder %s138, %s139
    %p153 = scmp.eq.s32.totalorder %s27, 1
    %p154 = por %p152, %p153
    %p156 = scmp.ne.s32.totalorder %s139, %s155
    %p157 = scmp.eq.s32.totalorder %s27, 0
    %p158 = por %p156, %p157
    %s160 = sadd.s32 %s159, 1
    %p163 = scmp.eq.s32.totalorder %s21, 1
    %p164 = scmp.ne.s32.totalorder %s159, %s161
    %p165 = scmp.eq.s32.totalorder %s21, 0
    %p166 = por %p164, %p165
    %p167 = scmp.ne.s32.totalorder %s159, %s161
    %p168 = scmp.eq.s32.totalorder %s26, 1
    %p169 = por %p167, %p168
    %p170 = scmp.ne.s32.totalorder %s161, %s162
    %p171 = scmp.eq.s32.totalorder %s26, 0
    %p172 = por %p170, %p171
    %p173 = scmp.ne.s32.totalorder %s161, %s162
    %p174 = scmp.eq.s32.totalorder %s27, 1
    %p175 = por %p173, %p174
    %p177 = scmp.ne.s32.totalorder %s162, %s176
    %p178 = scmp.eq.s32.totalorder %s27, 0
    %p179 = por %p177, %p178
    %s181 = sadd.s32 %s180, 1
    %p184 = scmp.eq.s32.totalorder %s21, 1
    %p185 = scmp.ne.s32.totalorder %s180, %s182
    %p186 = scmp.eq.s32.totalorder %s21, 0
    %p187 = por %p185, %p186
    %p188 = scmp.ne.s32.totalorder %s180, %s182
    %p189 = scmp.eq.s32.totalorder %s26, 1
    %p190 = por %p188, %p189
    %p191 = scmp.ne.s32.totalorder %s182, %s183
    %p192 = scmp.eq.s32.totalorder %s26, 0
    %p193 = por %p191, %p192
    %p194 = scmp.ne.s32.totalorder %s182, %s183
    %p195 = scmp.eq.s32.totalorder %s27, 1
    %p196 = por %p194, %p195
    %p198 = scmp.ne.s32.totalorder %s183, %s197
    %p199 = scmp.eq.s32.totalorder %s27, 0
    %p200 = por %p198, %p199
    %s202 = sadd.s32 %s201, 1
    %p205 = scmp.eq.s32.totalorder %s21, 1
    %p206 = scmp.ne.s32.totalorder %s201, %s203
    %p207 = scmp.eq.s32.totalorder %s21, 0
    %p208 = por %p206, %p207
    %p209 = scmp.ne.s32.totalorder %s201, %s203
    %p210 = scmp.eq.s32.totalorder %s26, 1
    %p211 = por %p209, %p210
    %p212 = scmp.ne.s32.totalorder %s203, %s204
    %p213 = scmp.eq.s32.totalorder %s26, 0
    %p214 = por %p212, %p213
    %p215 = scmp.ne.s32.totalorder %s203, %s204
    %p216 = scmp.eq.s32.totalorder %s27, 1
    %p217 = por %p215, %p216
    %p219 = scmp.ne.s32.totalorder %s204, %s218
    %p220 = scmp.eq.s32.totalorder %s27, 0
    %p221 = por %p219, %p220
    %s223 = sadd.s32 %s222, 1
    %p226 = scmp.eq.s32.totalorder %s21, 1
    %p227 = scmp.ne.s32.totalorder %s222, %s224
    %p228 = scmp.eq.s32.totalorder %s21, 0
    %p229 = por %p227, %p228
    %p230 = scmp.ne.s32.totalorder %s222, %s224
    %p231 = scmp.eq.s32.totalorder %s26, 1
    %p232 = por %p230, %p231
    %p233 = scmp.ne.s32.totalorder %s224, %s225
    %p234 = scmp.eq.s32.totalorder %s26, 0
    %p235 = por %p233, %p234
    %p236 = scmp.ne.s32.totalorder %s224, %s225
    %p237 = scmp.eq.s32.totalorder %s27, 1
    %p238 = por %p236, %p237
    %p240 = scmp.ne.s32.totalorder %s225, %s239
    %p241 = scmp.eq.s32.totalorder %s27, 0
    %p242 = por %p240, %p241
    %s244 = sadd.s32 %s243, 1
    %p247 = scmp.eq.s32.totalorder %s21, 1
    %p248 = scmp.ne.s32.totalorder %s243, %s245
    %p249 = scmp.eq.s32.totalorder %s21, 0
    %p250 = por %p248, %p249
    %p251 = scmp.ne.s32.totalorder %s243, %s245
    %p252 = scmp.eq.s32.totalorder %s26, 1
    %p253 = por %p251, %p252
    %p254 = scmp.ne.s32.totalorder %s245, %s246
    %p255 = scmp.eq.s32.totalorder %s26, 0
    %p256 = por %p254, %p255
    %p257 = scmp.ne.s32.totalorder %s245, %s246
    %p258 = scmp.eq.s32.totalorder %s27, 1
    %p259 = por %p257, %p258
    %p261 = scmp.ne.s32.totalorder %s246, %s260
    %p262 = scmp.eq.s32.totalorder %s27, 0
    %p263 = por %p261, %p262
    %s265 = sadd.s32 %s264, 1
    %p268 = scmp.eq.s32.totalorder %s21, 1
    %p269 = scmp.ne.s32.totalorder %s264, %s266
    %p270 = scmp.eq.s32.totalorder %s21, 0
    %p271 = por %p269, %p270
    %p272 = scmp.ne.s32.totalorder %s264, %s266
    %p273 = scmp.eq.s32.totalorder %s26, 1
    %p274 = por %p272, %p273
    %p275 = scmp.ne.s32.totalorder %s266, %s267
    %p276 = scmp.eq.s32.totalorder %s26, 0
    %p277 = por %p275, %p276
    %p278 = scmp.ne.s32.totalorder %s266, %s267
    %p279 = scmp.eq.s32.totalorder %s27, 1
    %p280 = por %p278, %p279
    %p282 = scmp.ne.s32.totalorder %s267, %s281
    %p283 = scmp.eq.s32.totalorder %s27, 0
    %p284 = por %p282, %p283
    %s286 = sadd.s32 %s285, 1
    %p289 = scmp.eq.s32.totalorder %s21, 1
    %p290 = scmp.ne.s32.totalorder %s285, %s287
    %p291 = scmp.eq.s32.totalorder %s21, 0
    %p292 = por %p290, %p291
    %p293 = scmp.ne.s32.totalorder %s285, %s287
    %p294 = scmp.eq.s32.totalorder %s26, 1
    %p295 = por %p293, %p294
    %p296 = scmp.ne.s32.totalorder %s287, %s288
    %p297 = scmp.eq.s32.totalorder %s26, 0
    %p298 = por %p296, %p297
    %p299 = scmp.ne.s32.totalorder %s287, %s288
    %p300 = scmp.eq.s32.totalorder %s27, 1
    %p301 = por %p299, %p300
    %p303 = scmp.ne.s32.totalorder %s288, %s302
    %p304 = scmp.eq.s32.totalorder %s27, 0
    %p305 = por %p303, %p304
    %s307 = sadd.s32 %s306, 1
    %p310 = scmp.eq.s32.totalorder %s21, 1
    %p311 = scmp.ne.s32.totalorder %s306, %s308
    %p312 = scmp.eq.s32.totalorder %s21, 0
    %p313 = por %p311, %p312
    %p314 = scmp.ne.s32.totalorder %s306, %s308
    %p315 = scmp.eq.s32.totalorder %s26, 1
    %p316 = por %p314, %p315
    %p317 = scmp.ne.s32.totalorder %s308, %s309
    %p318 = scmp.eq.s32.totalorder %s26, 0
    %p319 = por %p317, %p318
    %p320 = scmp.ne.s32.totalorder %s308, %s309
    %p321 = scmp.eq.s32.totalorder %s27, 1
    %p322 = por %p320, %p321
    %p324 = scmp.ne.s32.totalorder %s309, %s323
    %p325 = scmp.eq.s32.totalorder %s27, 0
    %p326 = por %p324, %p325
    %s328 = sadd.s32 %s327, 1
    %p331 = scmp.eq.s32.totalorder %s21, 1
    %p332 = scmp.ne.s32.totalorder %s327, %s329
    %p333 = scmp.eq.s32.totalorder %s21, 0
    %p334 = por %p332, %p333
    %p335 = scmp.ne.s32.totalorder %s327, %s329
    %p336 = scmp.eq.s32.totalorder %s26, 1
    %p337 = por %p335, %p336
    %p338 = scmp.ne.s32.totalorder %s329, %s330
    %p339 = scmp.eq.s32.totalorder %s26, 0
    %p340 = por %p338, %p339
    %p341 = scmp.ne.s32.totalorder %s329, %s330
    %p342 = scmp.eq.s32.totalorder %s27, 1
    %p343 = por %p341, %p342
    %p345 = scmp.ne.s32.totalorder %s330, %s344
    %p346 = scmp.eq.s32.totalorder %s27, 0
    %p347 = por %p345, %p346
    %s349 = sadd.s32 %s348, 1
    %p352 = scmp.eq.s32.totalorder %s21, 1
    %p353 = scmp.ne.s32.totalorder %s348, %s350
    %p354 = scmp.eq.s32.totalorder %s21, 0
    %p355 = por %p353, %p354
    %p356 = scmp.ne.s32.totalorder %s348, %s350
    %p357 = scmp.eq.s32.totalorder %s26, 1
    %p358 = por %p356, %p357
    %p359 = scmp.ne.s32.totalorder %s350, %s351
    %p360 = scmp.eq.s32.totalorder %s26, 0
    %p361 = por %p359, %p360
    %p362 = scmp.ne.s32.totalorder %s350, %s351
    %p363 = scmp.eq.s32.totalorder %s27, 1
    %p364 = por %p362, %p363
    %p366 = scmp.ne.s32.totalorder %s351, %s365
    %p367 = scmp.eq.s32.totalorder %s27, 0
    %p368 = por %p366, %p367
    %s369 = ssub.s32 %s21, %s28
    %p370 = scmp.eq.s32.totalorder %s369, 0
    %s372 = sadd.s32 %s371, 1
    %s373 = scalar_select %p370, %s371, %s372
    %p376 = pneg %p370
    %p377 = scmp.eq.s32.totalorder %s21, 1
    %p378 = por %p376, %p377
    %p379 = scmp.ne.s32.totalorder %s371, %s374
    %p380 = scmp.eq.s32.totalorder %s21, 0
    %p381 = por %p379, %p380
    %p382 = scmp.ne.s32.totalorder %s371, %s374
    %p383 = scmp.eq.s32.totalorder %s26, 1
    %p384 = por %p382, %p383
    %p385 = scmp.ne.s32.totalorder %s374, %s375
    %p386 = scmp.eq.s32.totalorder %s26, 0
    %p387 = por %p385, %p386
    %p388 = scmp.ne.s32.totalorder %s374, %s375
    %p389 = scmp.eq.s32.totalorder %s27, 1
    %p390 = por %p388, %p389
    %p392 = scmp.ne.s32.totalorder %s375, %s391
    %p393 = scmp.eq.s32.totalorder %s27, 0
    %p394 = por %p392, %p393
    %p395 = scmp.le.s32.totalorder 1, %s21
    %p396 = scmp.lt.s32.totalorder %s21, 3
    %p397 = pnand %p395, %p396
    %p398 = pneg %p397
    // Predicated region
    $region9: #{_lambda_.3} parent=5 // pred_check
      _
    $region10: #{_lambda_.3} parent=5 // pred_check_branch
      %400 = sbr.rel (%p397) target = $region12
    $region11: #{_lambda_.3} parent=5 // pred_region
      %s401 = ssub.s32 %s21, 1
      // Predicated region
      $region13: #{_lambda_.3} parent=11 // pred_check
        %p402 = pneg %p172
      $region14: #{_lambda_.3} parent=11 // pred_check_branch
        %404 = sbr.rel (%p402) target = $region16
      $region15: #{_lambda_.3} parent=11 // pred_region
        _
      $region16: #{_lambda_.3} parent=11 // pred_fallthru
        _
      // Predicated region
      $region17: #{_lambda_.3} parent=11 // pred_check
        %p405 = pneg %p193
      $region18: #{_lambda_.3} parent=11 // pred_check_branch
        %407 = sbr.rel (%p405) target = $region20
      $region19: #{_lambda_.3} parent=11 // pred_region
        _
      $region20: #{_lambda_.3} parent=11 // pred_fallthru
        _
      // Predicated region
      $region21: #{_lambda_.3} parent=11 // pred_check
        %p408 = pneg %p214
      $region22: #{_lambda_.3} parent=11 // pred_check_branch
        %410 = sbr.rel (%p408) target = $region24
      $region23: #{_lambda_.3} parent=11 // pred_region
        _
      $region24: #{_lambda_.3} parent=11 // pred_fallthru
        _
      // Predicated region
      $region25: #{_lambda_.3} parent=11 // pred_check
        %p411 = pneg %p235
      $region26: #{_lambda_.3} parent=11 // pred_check_branch
        %413 = sbr.rel (%p411) target = $region28
      $region27: #{_lambda_.3} parent=11 // pred_region
        _
      $region28: #{_lambda_.3} parent=11 // pred_fallthru
        _
      // Predicated region
      $region29: #{_lambda_.3} parent=11 // pred_check
        %p414 = pneg %p256
      $region30: #{_lambda_.3} parent=11 // pred_check_branch
        %416 = sbr.rel (%p414) target = $region32
      $region31: #{_lambda_.3} parent=11 // pred_region
        _
      $region32: #{_lambda_.3} parent=11 // pred_fallthru
        _
      // Predicated region
      $region33: #{_lambda_.3} parent=11 // pred_check
        %p417 = pneg %p277
      $region34: #{_lambda_.3} parent=11 // pred_check_branch
        %419 = sbr.rel (%p417) target = $region36
      $region35: #{_lambda_.3} parent=11 // pred_region
        _
      $region36: #{_lambda_.3} parent=11 // pred_fallthru
        _
      // Predicated region
      $region37: #{_lambda_.3} parent=11 // pred_check
        %p420 = pneg %p298
      $region38: #{_lambda_.3} parent=11 // pred_check_branch
        %422 = sbr.rel (%p420) target = $region40
      $region39: #{_lambda_.3} parent=11 // pred_region
        _
      $region40: #{_lambda_.3} parent=11 // pred_fallthru
        _
      // Predicated region
      $region41: #{_lambda_.3} parent=11 // pred_check
        %p423 = pneg %p319
      $region42: #{_lambda_.3} parent=11 // pred_check_branch
        %425 = sbr.rel (%p423) target = $region44
      $region43: #{_lambda_.3} parent=11 // pred_region
        _
      $region44: #{_lambda_.3} parent=11 // pred_fallthru
        _
      // Predicated region
      $region45: #{_lambda_.3} parent=11 // pred_check
        %p426 = pneg %p340
      $region46: #{_lambda_.3} parent=11 // pred_check_branch
        %428 = sbr.rel (%p426) target = $region48
      $region47: #{_lambda_.3} parent=11 // pred_region
        _
      $region48: #{_lambda_.3} parent=11 // pred_fallthru
        _
      // Predicated region
      $region49: #{_lambda_.3} parent=11 // pred_check
        %p429 = pneg %p361
      $region50: #{_lambda_.3} parent=11 // pred_check_branch
        %431 = sbr.rel (%p429) target = $region52
      $region51: #{_lambda_.3} parent=11 // pred_region
        _
      $region52: #{_lambda_.3} parent=11 // pred_fallthru
        _
    $region12: #{_lambda_.3} parent=5 // pred_fallthru
      _
    %p432 = scmp.lt.s32.totalorder %s21, 2
    // Predicated region
    $region53: #{_lambda_.3} parent=5 // pred_check
      %p433 = pneg %p432
    $region54: #{_lambda_.3} parent=5 // pred_check_branch
      %435 = sbr.rel (%p433) target = $region56
    $region55: #{_lambda_.3} parent=5 // pred_region
      // Predicated region
      $region57: #{_lambda_.3} parent=55 // pred_check
        %p436 = pneg %p41
      $region58: #{_lambda_.3} parent=55 // pred_check_branch
        %438 = sbr.rel (%p436) target = $region60
      $region59: #{_lambda_.3} parent=55 // pred_region
        %p439 = scmp.lt.s32.totalorder %s21, 1
        %s440 = scalar_select %p439, %s21, 1
        %s441 = smul.addr %s440, 7
        %s442 = smul.addr %s441, 4
        %s443 = scalar_lea.vmem %s0, %s442
      $region60: #{_lambda_.3} parent=55 // pred_fallthru
        _
      // Predicated region
      $region61: #{_lambda_.3} parent=55 // pred_check
        %p444 = pneg %p67
      $region62: #{_lambda_.3} parent=55 // pred_check_branch
        %446 = sbr.rel (%p444) target = $region64
      $region63: #{_lambda_.3} parent=55 // pred_region
        %p447 = scmp.lt.s32.totalorder %s21, 1
        %s448 = scalar_select %p447, %s21, 1
        %s449 = smul.addr %s448, 4
        %s450 = scalar_lea.vmem %s1, %s449
      $region64: #{_lambda_.3} parent=55 // pred_fallthru
        _
      // Predicated region
      $region65: #{_lambda_.3} parent=55 // pred_check
        %p451 = pneg %p93
      $region66: #{_lambda_.3} parent=55 // pred_check_branch
        %453 = sbr.rel (%p451) target = $region68
      $region67: #{_lambda_.3} parent=55 // pred_region
        %p454 = scmp.lt.s32.totalorder %s21, 1
        %s455 = scalar_select %p454, %s21, 1
        %s456 = smul.addr %s455, 8
        %s457 = scalar_lea.vmem %s2, %s456
      $region68: #{_lambda_.3} parent=55 // pred_fallthru
        _
      // Predicated region
      $region69: #{_lambda_.3} parent=55 // pred_check
        %p458 = pneg %p119
      $region70: #{_lambda_.3} parent=55 // pred_check_branch
        %460 = sbr.rel (%p458) target = $region72
      $region71: #{_lambda_.3} parent=55 // pred_region
        %p461 = scmp.lt.s32.totalorder %s21, 1
        %s462 = scalar_select %p461, %s21, 1
        %s463 = smul.addr %s462, 8
        %s464 = scalar_lea.vmem %s3, %s463
      $region72: #{_lambda_.3} parent=55 // pred_fallthru
        _
      // Predicated region
      $region73: #{_lambda_.3} parent=55 // pred_check
        %p465 = pneg %p145
      $region74: #{_lambda_.3} parent=55 // pred_check_branch
        %467 = sbr.rel (%p465) target = $region76
      $region75: #{_lambda_.3} parent=55 // pred_region
        %p468 = scmp.lt.s32.totalorder %s21, 1
        %s469 = scalar_select %p468, %s21, 1
        %s470 = scalar_lea.vmem %s4, %s469
      $region76: #{_lambda_.3} parent=55 // pred_fallthru
        _
    $region56: #{_lambda_.3} parent=5 // pred_fallthru
      _
    %p471 = scmp.le.s32.totalorder 1, %s21
    %p472 = scmp.lt.s32.totalorder %s21, 3
    %p473 = pnand %p471, %p472
    %p474 = pneg %p473
    // Predicated region
    $region77: #{_lambda_.3} parent=5 // pred_check
      _
    $region78: #{_lambda_.3} parent=5 // pred_check_branch
      %476 = sbr.rel (%p473) target = $region80
    $region79: #{_lambda_.3} parent=5 // pred_region
      %s477 = ssub.s32 %s21, 1
      %p478 = scmp.lt.s32.totalorder %s26, 1
      %s479 = scalar_select %p478, %s26, 1
      %s480 = smul.addr %s479, 7
      %s481 = smul.addr %s480, 4
      %s482 = scalar_lea.vmem %s0, %s481
      %p483 = pneg %p47
      %p484 = pneg %p44
      %p485 = scmp.lt.s32.totalorder %s26, 1
      %s486 = scalar_select %p485, %s26, 1
      %s487 = smul.addr %s486, 4
      %s488 = scalar_lea.vmem %s1, %s487
      %p489 = pneg %p73
      %p490 = pneg %p70
      %p491 = scmp.lt.s32.totalorder %s26, 1
      %s492 = scalar_select %p491, %s26, 1
      %s493 = smul.addr %s492, 8
      %s494 = scalar_lea.vmem %s2, %s493
      %p495 = pneg %p99
      %p496 = pneg %p96
      %p497 = scmp.lt.s32.totalorder %s26, 1
      %s498 = scalar_select %p497, %s26, 1
      %s499 = smul.addr %s498, 8
      %s500 = scalar_lea.vmem %s3, %s499
      %p501 = pneg %p125
      %p502 = pneg %p122
      %p503 = scmp.lt.s32.totalorder %s26, 1
      %s504 = scalar_select %p503, %s26, 1
      %s505 = scalar_lea.vmem %s4, %s504
      %p506 = pneg %p151
      %p507 = pneg %p148
      %p508 = pneg %p172
      %p509 = pneg %p169
      %p510 = pneg %p193
      %p511 = pneg %p190
      %p512 = pneg %p214
      %p513 = pneg %p211
      %p514 = pneg %p235
      %p515 = pneg %p232
      %p516 = pneg %p256
      %p517 = pneg %p253
      %p518 = pneg %p277
      %p519 = pneg %p274
      %p520 = pneg %p298
      %p521 = pneg %p295
      %p522 = pneg %p319
      %p523 = pneg %p316
      %p524 = pneg %p340
      %p525 = pneg %p337
      %p526 = pneg %p361
      %p527 = pneg %p358
      %p528 = pneg %p387
      %p529 = pneg %p384
      %p530 = scmp.lt.s32.totalorder %s26, 1
      %s531 = scalar_select %p530, %s26, 1
      %s532 = smul.addr %s531, 8
      %s533 = scalar_lea.vmem %s15, %s532
      %p534 = scmp.lt.s32.totalorder %s26, 1
      %s535 = scalar_select %p534, %s26, 1
      %s536 = smul.addr %s535, 7
      %s537 = smul.addr %s536, 4
      %s538 = scalar_lea.vmem %s0, %s537
      %p539 = scmp.lt.s32.totalorder %s26, 1
      %s540 = scalar_select %p539, %s26, 1
      %s541 = smul.addr %s540, 4
      %s542 = scalar_lea.vmem %s1, %s541
      %p543 = scmp.lt.s32.totalorder %s26, 1
      %s544 = scalar_select %p543, %s26, 1
      %s545 = smul.addr %s544, 8
      %s546 = scalar_lea.vmem %s2, %s545
      %p547 = scmp.lt.s32.totalorder %s26, 1
      %s548 = scalar_select %p547, %s26, 1
      %s549 = smul.addr %s548, 8
      %s550 = scalar_lea.vmem %s3, %s549
      %p551 = scmp.lt.s32.totalorder %s26, 1
      %s552 = scalar_select %p551, %s26, 1
      %s553 = scalar_lea.vmem %s4, %s552
      %p554 = scmp.lt.s32.totalorder %s26, 1
      %s555 = scalar_select %p554, %s26, 1
      %s556 = smul.addr %s555, 8
      %s557 = scalar_lea.vmem %s15, %s556
      %v559 = vld [vmem:[%s550] sm:$0xff]
      %v560 = vld [vmem:[%s538] sm:$0xff]
      %v561 = vld [vmem:[%s538 + $0x8] sm:$0xff]
      %v562 = vld [vmem:[%s538 + $0x10] sm:$0xff]
      %v563 = vld [vmem:[%s538 + $0x18] sm:$0xf]
      %v564 = vld [vmem:[%s7] sm:$0xf]
      %v565 = vld [vmem:[%s7 + $0x4] sm:$0xf]
      %v566 = vld [vmem:[%s7 + $0x8] sm:$0xf]
      %v567 = vld [vmem:[%s7 + $0xc] sm:$0xf]
      %v568 = vld [vmem:[%s7 + $0x10] sm:$0xf]
      %v569 = vld [vmem:[%s7 + $0x14] sm:$0xf]
      %v570 = vld [vmem:[%s7 + $0x18] sm:$0xf]
      %v571 = vld [vmem:[%s7 + $0x1c] sm:$0xf]
      %v572 = vld [vmem:[%s7 + $0x20] sm:$0xf]
      %v573 = vld [vmem:[%s7 + $0x24] sm:$0xf]
      %v574 = vld [vmem:[%s7 + $0x28] sm:$0xf]
      %v575 = vld [vmem:[%s7 + $0x2c] sm:$0xf]
      %v576 = vld [vmem:[%s7 + $0x30] sm:$0xf]
      %v577 = vld [vmem:[%s7 + $0x34] sm:$0xf]
      %v578 = vld [vmem:[%s7 + $0x38] sm:$0xf]
      %v579 = vld [vmem:[%s7 + $0x3c] sm:$0xf]
      %v580 = vld [vmem:[%s7 + $0x40] sm:$0xf]
      %v581 = vld [vmem:[%s7 + $0x44] sm:$0xf]
      %v582 = vld [vmem:[%s7 + $0x48] sm:$0xf]
      %v583 = vld [vmem:[%s7 + $0x4c] sm:$0xf]
      %v584 = vld [vmem:[%s7 + $0x50] sm:$0xf]
      %v585 = vld [vmem:[%s7 + $0x54] sm:$0xf]
      %v586 = vld [vmem:[%s7 + $0x58] sm:$0xf]
      %v587 = vld [vmem:[%s7 + $0x5c] sm:$0xf]
      %v588 = vld [vmem:[%s7 + $0x60] sm:$0xf]
      %v589 = vld [vmem:[%s7 + $0x64] sm:$0xf]
      %v590 = vld [vmem:[%s7 + $0x68] sm:$0xf]
      %v591 = vld [vmem:[%s7 + $0x6c] sm:$0xf]
      %v592 = vld [vmem:[%s7 + $0x70] sm:$0xf]
      %v593 = vld [vmem:[%s7 + $0x74] sm:$0xf]
      %v594 = vld [vmem:[%s7 + $0x78] sm:$0xf]
      %v595 = vld [vmem:[%s7 + $0x7c] sm:$0xf]
      %v596 = vld [vmem:[%s7 + $0x80] sm:$0xf]
      %v597 = vld [vmem:[%s7 + $0x84] sm:$0xf]
      %v598 = vld [vmem:[%s7 + $0x88] sm:$0xf]
      %v599 = vld [vmem:[%s7 + $0x8c] sm:$0xf]
      %v600 = vld [vmem:[%s7 + $0x90] sm:$0xf]
      %v601 = vld [vmem:[%s7 + $0x94] sm:$0xf]
      %v602 = vld [vmem:[%s7 + $0x98] sm:$0xf]
      %v603 = vld [vmem:[%s7 + $0x9c] sm:$0xf]
      %v604 = vld [vmem:[%s7 + $0xa0] sm:$0xf]
      %v605 = vld [vmem:[%s7 + $0xa4] sm:$0xf]
      %v606 = vld [vmem:[%s7 + $0xa8] sm:$0xf]
      %v607 = vld [vmem:[%s7 + $0xac] sm:$0xf]
      %v608 = vld [vmem:[%s7 + $0xb0] sm:$0xf]
      %v609 = vld [vmem:[%s7 + $0xb4] sm:$0xf]
      %v610 = vld [vmem:[%s7 + $0xb8] sm:$0xf]
      %v611 = vld [vmem:[%s7 + $0xbc] sm:$0xf]
      %v612 = vld [vmem:[%s7 + $0xc0] sm:$0xf]
      %v613 = vld [vmem:[%s7 + $0xc4] sm:$0xf]
      %v614 = vld [vmem:[%s7 + $0xc8] sm:$0xf]
      %v615 = vld [vmem:[%s7 + $0xcc] sm:$0xf]
      %v616 = vld [vmem:[%s7 + $0xd0] sm:$0xf]
      %v617 = vld [vmem:[%s7 + $0xd4] sm:$0xf]
      %v618 = vld [vmem:[%s7 + $0xd8] sm:$0xf]
      %v619 = vld [vmem:[%s7 + $0xdc] sm:$0xf]
      %v620 = vld [vmem:[%s7 + $0xe0] sm:$0xf]
      %v621 = vld [vmem:[%s7 + $0xe4] sm:$0xf]
      %v622 = vld [vmem:[%s7 + $0xe8] sm:$0xf]
      %v623 = vld [vmem:[%s7 + $0xec] sm:$0xf]
      %v624 = vld [vmem:[%s7 + $0xf0] sm:$0xf]
      %v625 = vld [vmem:[%s7 + $0xf4] sm:$0xf]
      %v626 = vld [vmem:[%s7 + $0xf8] sm:$0xf]
      %v627 = vld [vmem:[%s7 + $0xfc] sm:$0xf]
      %v628 = vld [vmem:[%s7 + $0x100] sm:$0xf]
      %v629 = vld [vmem:[%s7 + $0x104] sm:$0xf]
      %v630 = vld [vmem:[%s7 + $0x108] sm:$0xf]
      %v631 = vld [vmem:[%s7 + $0x10c] sm:$0xf]
      %v632 = vld [vmem:[%s7 + $0x110] sm:$0xf]
      %v633 = vld [vmem:[%s7 + $0x114] sm:$0xf]
      %v634 = vld [vmem:[%s7 + $0x118] sm:$0xf]
      %v635 = vld [vmem:[%s7 + $0x11c] sm:$0xf]
      %v636 = vld [vmem:[%s7 + $0x120] sm:$0xf]
      %v637 = vld [vmem:[%s7 + $0x124] sm:$0xf]
      %v638 = vld [vmem:[%s7 + $0x128] sm:$0xf]
      %v639 = vld [vmem:[%s7 + $0x12c] sm:$0xf]
      %v640 = vld [vmem:[%s7 + $0x130] sm:$0xf]
      %v641 = vld [vmem:[%s7 + $0x134] sm:$0xf]
      %v642 = vld [vmem:[%s7 + $0x138] sm:$0xf]
      %v643 = vld [vmem:[%s7 + $0x13c] sm:$0xf]
      %v644 = vld [vmem:[%s7 + $0x140] sm:$0xf]
      %v645 = vld [vmem:[%s7 + $0x144] sm:$0xf]
      %v646 = vld [vmem:[%s7 + $0x148] sm:$0xf]
      %v647 = vld [vmem:[%s7 + $0x14c] sm:$0xf]
      %v648 = vld [vmem:[%s7 + $0x150] sm:$0xf]
      %v649 = vld [vmem:[%s7 + $0x154] sm:$0xf]
      %v650 = vld [vmem:[%s7 + $0x158] sm:$0xf]
      %v651 = vld [vmem:[%s7 + $0x15c] sm:$0xf]
      %v652 = vld [vmem:[%s7 + $0x160] sm:$0xf]
      %v653 = vld [vmem:[%s7 + $0x164] sm:$0xf]
      %v654 = vld [vmem:[%s7 + $0x168] sm:$0xf]
      %v655 = vld [vmem:[%s7 + $0x16c] sm:$0xf]
      %v656 = vld [vmem:[%s7 + $0x170] sm:$0xf]
      %v657 = vld [vmem:[%s7 + $0x174] sm:$0xf]
      %v658 = vld [vmem:[%s7 + $0x178] sm:$0xf]
      %v659 = vld [vmem:[%s7 + $0x17c] sm:$0xf]
      %v660 = vld [vmem:[%s7 + $0x180] sm:$0xf]
      %v661 = vld [vmem:[%s7 + $0x184] sm:$0xf]
      %v662 = vld [vmem:[%s6] ss:$0 sm:$0xff]
      %v667 = vunpack.c.l.b16 %v560
      %v668 = vunpack.c.h.b16 %v560
      %v669 = vunpack.c.l.b16 %v561
      %v670 = vunpack.c.h.b16 %v561
      %v671 = vunpack.c.l.b16 %v562
      %v672 = vunpack.c.h.b16 %v562
      %v673 = vunpack.c.l.b16 %v563
      %v674 = vpack.c.b16 %v667, %v667
      %v675 = vpack.c.b16 %v668, %v668
      %v676 = vpack.c.b16 %v669, %v669
      %v677 = vpack.c.b16 %v670, %v670
      %v678 = vpack.c.b16 %v671, %v671
      %v679 = vpack.c.b16 %v672, %v672
      %v680 = vpack.c.b16 %v673, %v673
      %v785 = vunpack.c.l.b16 %v564
      %v786 = vunpack.c.l.b16 %v565
      %v787 = vunpack.c.l.b16 %v566
      %v788 = vunpack.c.l.b16 %v567
      %v789 = vunpack.c.l.b16 %v568
      %v790 = vunpack.c.l.b16 %v569
      %v791 = vunpack.c.l.b16 %v570
      %v792 = vunpack.c.l.b16 %v571
      %v793 = vunpack.c.l.b16 %v572
      %v794 = vunpack.c.l.b16 %v573
      %v795 = vunpack.c.l.b16 %v574
      %v796 = vunpack.c.l.b16 %v575
      %v797 = vunpack.c.l.b16 %v576
      %v798 = vunpack.c.l.b16 %v577
      %v799 = vunpack.c.l.b16 %v578
      %v800 = vunpack.c.l.b16 %v579
      %v801 = vunpack.c.l.b16 %v580
      %v802 = vunpack.c.l.b16 %v581
      %v803 = vunpack.c.l.b16 %v582
      %v804 = vunpack.c.l.b16 %v583
      %v805 = vunpack.c.l.b16 %v584
      %v806 = vunpack.c.l.b16 %v585
      %v807 = vunpack.c.l.b16 %v586
      %v808 = vunpack.c.l.b16 %v587
      %v809 = vunpack.c.l.b16 %v588
      %v810 = vunpack.c.l.b16 %v589
      %v811 = vunpack.c.l.b16 %v590
      %v812 = vunpack.c.l.b16 %v591
      %v813 = vunpack.c.l.b16 %v592
      %v814 = vunpack.c.l.b16 %v593
      %v815 = vunpack.c.l.b16 %v594
      %v816 = vunpack.c.l.b16 %v595
      %v817 = vunpack.c.l.b16 %v596
      %v818 = vunpack.c.l.b16 %v597
      %v819 = vunpack.c.l.b16 %v598
      %v820 = vunpack.c.l.b16 %v599
      %v821 = vunpack.c.l.b16 %v600
      %v822 = vunpack.c.l.b16 %v601
      %v823 = vunpack.c.l.b16 %v602
      %v824 = vunpack.c.l.b16 %v603
      %v825 = vunpack.c.l.b16 %v604
      %v826 = vunpack.c.l.b16 %v605
      %v827 = vunpack.c.l.b16 %v606
      %v828 = vunpack.c.l.b16 %v607
      %v829 = vunpack.c.l.b16 %v608
      %v830 = vunpack.c.l.b16 %v609
      %v831 = vunpack.c.l.b16 %v610
      %v832 = vunpack.c.l.b16 %v611
      %v833 = vunpack.c.l.b16 %v612
      %v834 = vunpack.c.l.b16 %v613
      %v835 = vunpack.c.l.b16 %v614
      %v836 = vunpack.c.l.b16 %v615
      %v837 = vunpack.c.l.b16 %v616
      %v838 = vunpack.c.l.b16 %v617
      %v839 = vunpack.c.l.b16 %v618
      %v840 = vunpack.c.l.b16 %v619
      %v841 = vunpack.c.l.b16 %v620
      %v842 = vunpack.c.l.b16 %v621
      %v843 = vunpack.c.l.b16 %v622
      %v844 = vunpack.c.l.b16 %v623
      %v845 = vunpack.c.l.b16 %v624
      %v846 = vunpack.c.l.b16 %v625
      %v847 = vunpack.c.l.b16 %v626
      %v848 = vunpack.c.l.b16 %v627
      %v849 = vunpack.c.l.b16 %v628
      %v850 = vunpack.c.l.b16 %v629
      %v851 = vunpack.c.l.b16 %v630
      %v852 = vunpack.c.l.b16 %v631
      %v853 = vunpack.c.l.b16 %v632
      %v854 = vunpack.c.l.b16 %v633
      %v855 = vunpack.c.l.b16 %v634
      %v856 = vunpack.c.l.b16 %v635
      %v857 = vunpack.c.l.b16 %v636
      %v858 = vunpack.c.l.b16 %v637
      %v859 = vunpack.c.l.b16 %v638
      %v860 = vunpack.c.l.b16 %v639
      %v861 = vunpack.c.l.b16 %v640
      %v862 = vunpack.c.l.b16 %v641
      %v863 = vunpack.c.l.b16 %v642
      %v864 = vunpack.c.l.b16 %v643
      %v865 = vunpack.c.l.b16 %v644
      %v866 = vunpack.c.l.b16 %v645
      %v867 = vunpack.c.l.b16 %v646
      %v868 = vunpack.c.l.b16 %v647
      %v869 = vunpack.c.l.b16 %v648
      %v870 = vunpack.c.l.b16 %v649
      %v871 = vunpack.c.l.b16 %v650
      %v872 = vunpack.c.l.b16 %v651
      %v873 = vunpack.c.l.b16 %v652
      %v874 = vunpack.c.l.b16 %v653
      %v875 = vunpack.c.l.b16 %v654
      %v876 = vunpack.c.l.b16 %v655
      %v877 = vunpack.c.l.b16 %v656
      %v878 = vunpack.c.l.b16 %v657
      %v879 = vunpack.c.l.b16 %v658
      %v880 = vunpack.c.l.b16 %v659
      %v881 = vunpack.c.l.b16 %v660
      %v882 = vunpack.c.l.b16 %v661
      %v883 = vpack.c.b16 %v786, %v785
      %v884 = vpack.c.b16 %v788, %v787
      %v885 = vpack.c.b16 %v790, %v789
      %v886 = vpack.c.b16 %v792, %v791
      %v887 = vpack.c.b16 %v794, %v793
      %v888 = vpack.c.b16 %v796, %v795
      %v889 = vpack.c.b16 %v798, %v797
      %v890 = vpack.c.b16 %v800, %v799
      %v891 = vpack.c.b16 %v802, %v801
      %v892 = vpack.c.b16 %v804, %v803
      %v893 = vpack.c.b16 %v806, %v805
      %v894 = vpack.c.b16 %v808, %v807
      %v895 = vpack.c.b16 %v810, %v809
      %v896 = vpack.c.b16 %v812, %v811
      %v897 = vpack.c.b16 %v814, %v813
      %v898 = vpack.c.b16 %v816, %v815
      %v899 = vpack.c.b16 %v818, %v817
      %v900 = vpack.c.b16 %v820, %v819
      %v901 = vpack.c.b16 %v822, %v821
      %v902 = vpack.c.b16 %v824, %v823
      %v903 = vpack.c.b16 %v826, %v825
      %v904 = vpack.c.b16 %v828, %v827
      %v905 = vpack.c.b16 %v830, %v829
      %v906 = vpack.c.b16 %v832, %v831
      %v907 = vpack.c.b16 %v834, %v833
      %v908 = vpack.c.b16 %v836, %v835
      %v909 = vpack.c.b16 %v838, %v837
      %v910 = vpack.c.b16 %v840, %v839
      %v911 = vpack.c.b16 %v842, %v841
      %v912 = vpack.c.b16 %v844, %v843
      %v913 = vpack.c.b16 %v846, %v845
      %v914 = vpack.c.b16 %v848, %v847
      %v915 = vpack.c.b16 %v850, %v849
      %v916 = vpack.c.b16 %v852, %v851
      %v917 = vpack.c.b16 %v854, %v853
      %v918 = vpack.c.b16 %v856, %v855
      %v919 = vpack.c.b16 %v858, %v857
      %v920 = vpack.c.b16 %v860, %v859
      %v921 = vpack.c.b16 %v862, %v861
      %v922 = vpack.c.b16 %v864, %v863
      %v923 = vpack.c.b16 %v866, %v865
      %v924 = vpack.c.b16 %v868, %v867
      %v925 = vpack.c.b16 %v870, %v869
      %v926 = vpack.c.b16 %v872, %v871
      %v927 = vpack.c.b16 %v874, %v873
      %v928 = vpack.c.b16 %v876, %v875
      %v929 = vpack.c.b16 %v878, %v877
      %v930 = vpack.c.b16 %v880, %v879
      %v931 = vpack.c.b16 %v882, %v881
      %vm981 = vcmask 130048
      %v983 = vsel %vm981, %v680, 0
      %985 = vmatprep.subr.bf16.mxu0 0
      %986 = vmatpush1.bf16.msra.mxu0 %v890
      %987 = vmatprep.subr.bf16.mxu0 0
      %988 = vmatpush1.bf16.msra.mxu0 %v889
      %989 = vmatprep.subr.bf16.mxu0 0
      %990 = vmatpush1.bf16.msra.mxu0 %v888
      %991 = vmatprep.subr.bf16.mxu0 0
      %992 = vmatpush1.bf16.msra.mxu0 %v887
      %993 = vmatprep.subr.bf16.mxu0 0
      %994 = vmatpush1.bf16.msra.mxu0 %v886
      %995 = vmatprep.subr.bf16.mxu0 0
      %996 = vmatpush1.bf16.msra.mxu0 %v885
      %997 = vmatprep.subr.bf16.mxu0 0
      %998 = vmatpush1.bf16.msra.mxu0 %v884
      %999 = vmatprep.subr.bf16.mxu0 0
      %1000 = vmatpush1.bf16.msra.mxu0 %v883
      %1001 = vmatprep.subr.bf16.mxu0 0
      %1002 = vmatpush2.bf16.msra.mxu0 %v898
      %1003 = vmatprep.subr.bf16.mxu0 0
      %1004 = vmatpush2.bf16.msra.mxu0 %v897
      %1005 = vmatprep.subr.bf16.mxu0 0
      %1006 = vmatpush2.bf16.msra.mxu0 %v896
      %1007 = vmatprep.subr.bf16.mxu0 0
      %1008 = vmatpush2.bf16.msra.mxu0 %v895
      %1009 = vmatprep.subr.bf16.mxu0 0
      %1010 = vmatpush2.bf16.msra.mxu0 %v894
      %1011 = vmatprep.subr.bf16.mxu0 0
      %1012 = vmatpush2.bf16.msra.mxu0 %v893
      %1013 = vmatprep.subr.bf16.mxu0 0
      %1014 = vmatpush2.bf16.msra.mxu0 %v892
      %1015 = vmatprep.subr.bf16.mxu0 0
      %1016 = vmatpush2.bf16.msra.mxu0 %v891
      %1017 = vmatprep.mubr.bf16.mxu0 %v675
      %1018 = vmatmul.mubr.bf16.gmra.mxu0 %v674
      %v1019 = vpop.f32.mrf.mxu0
      %v1020 = vadd.f32 %v662, %v1019
      %v1021 = vpop.f32.mrf.mxu0
      %v1022 = vpop.f32.mrf.mxu0
      %v1023 = vpop.f32.mrf.mxu0
      %1024 = vdwg.mxu0
      %1025 = vmatprep.subr.bf16.mxu0 0
      %1026 = vmatpush1.bf16.msra.mxu0 %v906
      %1027 = vmatprep.subr.bf16.mxu0 0
      %1028 = vmatpush1.bf16.msra.mxu0 %v905
      %1029 = vmatprep.subr.bf16.mxu0 0
      %1030 = vmatpush1.bf16.msra.mxu0 %v904
      %1031 = vmatprep.subr.bf16.mxu0 0
      %1032 = vmatpush1.bf16.msra.mxu0 %v903
      %1033 = vmatprep.subr.bf16.mxu0 0
      %1034 = vmatpush1.bf16.msra.mxu0 %v902
      %1035 = vmatprep.subr.bf16.mxu0 0
      %1036 = vmatpush1.bf16.msra.mxu0 %v901
      %1037 = vmatprep.subr.bf16.mxu0 0
      %1038 = vmatpush1.bf16.msra.mxu0 %v900
      %1039 = vmatprep.subr.bf16.mxu0 0
      %1040 = vmatpush1.bf16.msra.mxu0 %v899
      %1041 = vmatprep.subr.bf16.mxu0 0
      %1042 = vmatpush2.bf16.msra.mxu0 %v914
      %1043 = vmatprep.subr.bf16.mxu0 0
      %1044 = vmatpush2.bf16.msra.mxu0 %v913
      %1045 = vmatprep.subr.bf16.mxu0 0
      %1046 = vmatpush2.bf16.msra.mxu0 %v912
      %1047 = vmatprep.subr.bf16.mxu0 0
      %1048 = vmatpush2.bf16.msra.mxu0 %v911
      %1049 = vmatprep.subr.bf16.mxu0 0
      %1050 = vmatpush2.bf16.msra.mxu0 %v910
      %1051 = vmatprep.subr.bf16.mxu0 0
      %1052 = vmatpush2.bf16.msra.mxu0 %v909
      %1053 = vmatprep.subr.bf16.mxu0 0
      %1054 = vmatpush2.bf16.msra.mxu0 %v908
      %1055 = vmatprep.subr.bf16.mxu0 0
      %1056 = vmatpush2.bf16.msra.mxu0 %v907
      %1057 = vmatprep.mubr.bf16.mxu0 %v677
      %1058 = vmatmul.mubr.bf16.gmra.mxu0 %v676
      %v1059 = vpop.f32.mrf.mxu0
      %v1060 = vadd.f32 %v1020, %v1059
      %v1061 = vpop.f32.mrf.mxu0
      %v1062 = vpop.f32.mrf.mxu0
      %v1063 = vpop.f32.mrf.mxu0
      %1064 = vdwg.mxu0
      %1065 = vmatprep.subr.bf16.mxu0 0
      %1066 = vmatpush1.bf16.msra.mxu0 %v922
      %1067 = vmatprep.subr.bf16.mxu0 0
      %1068 = vmatpush1.bf16.msra.mxu0 %v921
      %1069 = vmatprep.subr.bf16.mxu0 0
      %1070 = vmatpush1.bf16.msra.mxu0 %v920
      %1071 = vmatprep.subr.bf16.mxu0 0
      %1072 = vmatpush1.bf16.msra.mxu0 %v919
      %1073 = vmatprep.subr.bf16.mxu0 0
      %1074 = vmatpush1.bf16.msra.mxu0 %v918
      %1075 = vmatprep.subr.bf16.mxu0 0
      %1076 = vmatpush1.bf16.msra.mxu0 %v917
      %1077 = vmatprep.subr.bf16.mxu0 0
      %1078 = vmatpush1.bf16.msra.mxu0 %v916
      %1079 = vmatprep.subr.bf16.mxu0 0
      %1080 = vmatpush1.bf16.msra.mxu0 %v915
      %1081 = vmatprep.subr.bf16.mxu0 0
      %1082 = vmatpush2.bf16.msra.mxu0 %v930
      %1083 = vmatprep.subr.bf16.mxu0 0
      %1084 = vmatpush2.bf16.msra.mxu0 %v929
      %1085 = vmatprep.subr.bf16.mxu0 0
      %1086 = vmatpush2.bf16.msra.mxu0 %v928
      %1087 = vmatprep.subr.bf16.mxu0 0
      %1088 = vmatpush2.bf16.msra.mxu0 %v927
      %1089 = vmatprep.subr.bf16.mxu0 0
      %1090 = vmatpush2.bf16.msra.mxu0 %v926
      %1091 = vmatprep.subr.bf16.mxu0 0
      %1092 = vmatpush2.bf16.msra.mxu0 %v925
      %1093 = vmatprep.subr.bf16.mxu0 0
      %1094 = vmatpush2.bf16.msra.mxu0 %v924
      %1095 = vmatprep.subr.bf16.mxu0 0
      %1096 = vmatpush2.bf16.msra.mxu0 %v923
      %1097 = vmatprep.mubr.bf16.mxu0 %v679
      %1098 = vmatmul.mubr.bf16.gmra.mxu0 %v678
      %v1099 = vpop.f32.mrf.mxu0
      %v1100 = vadd.f32 %v1060, %v1099
      %v1101 = vpop.f32.mrf.mxu0
      %v1102 = vpop.f32.mrf.mxu0
      %v1103 = vpop.f32.mrf.mxu0
      %1104 = vdwg.mxu0
      %1105 = vmatprep.subr.bf16.mxu0 0
      %1106 = vmatpush1.bf16.msra.mxu0 0
      %1107 = vmatprep.subr.bf16.mxu0 0
      %1108 = vmatpush1.bf16.msra.mxu0 0
      %1109 = vmatprep.subr.bf16.mxu0 0
      %1110 = vmatpush1.bf16.msra.mxu0 0
      %1111 = vmatprep.subr.bf16.mxu0 0
      %1112 = vmatpush1.bf16.msra.mxu0 0
      %1113 = vmatprep.subr.bf16.mxu0 0
      %1114 = vmatpush1.bf16.msra.mxu0 0
      %1115 = vmatprep.subr.bf16.mxu0 0
      %1116 = vmatpush1.bf16.msra.mxu0 0
      %1117 = vmatprep.subr.bf16.mxu0 0
      %1118 = vmatpush1.bf16.msra.mxu0 0
      %1119 = vmatprep.subr.bf16.mxu0 0
      %1120 = vmatpush1.bf16.msra.mxu0 %v931
      %1121 = vmatprep.subr.bf16.mxu0 0
      %1122 = vmatpush2.bf16.msra.mxu0 0
      %1123 = vmatprep.subr.bf16.mxu0 0
      %1124 = vmatpush2.bf16.msra.mxu0 0
      %1125 = vmatprep.subr.bf16.mxu0 0
      %1126 = vmatpush2.bf16.msra.mxu0 0
      %1127 = vmatprep.subr.bf16.mxu0 0
      %1128 = vmatpush2.bf16.msra.mxu0 0
      %1129 = vmatprep.subr.bf16.mxu0 0
      %1130 = vmatpush2.bf16.msra.mxu0 0
      %1131 = vmatprep.subr.bf16.mxu0 0
      %1132 = vmatpush2.bf16.msra.mxu0 0
      %1133 = vmatprep.subr.bf16.mxu0 0
      %1134 = vmatpush2.bf16.msra.mxu0 0
      %1135 = vmatprep.subr.bf16.mxu0 0
      %1136 = vmatpush2.bf16.msra.mxu0 0
      %1137 = vmatprep.mubr.bf16.mxu0 0
      %1138 = vmatmul.mubr.bf16.gmra.mxu0 %v983
      %v1139 = vpop.f32.mrf.mxu0
      %v1140 = vadd.f32 %v1100, %v1139
      %v1141 = vpop.f32.mrf.mxu0
      %v1142 = vpop.f32.mrf.mxu0
      %v1143 = vpop.f32.mrf.mxu0
      %1144 = vdwg.mxu0
      %v1145 = vmax.f32 %v1140, 0.0
      %v1146 = vld [vmem:[%s542] sm:$0xf]
      %v1147 = vld [vmem:[%s8] sm:$0xf]
      %v1148 = vld [vmem:[%s6 + $0x1] ss:$0 sm:$0xff]
      %vm1149 = vcmask 64512
      %v1151 = vsel %vm1149, %v1146, 0
      %vm1153 = vcmask 1043456
      %v1155 = vsel %vm1153, %v1147, 0
      %1157 = vmatprep.subr.bf16.mxu0 0
      %1158 = vmatpush1.bf16.msra.mxu0 0
      %1159 = vmatprep.subr.bf16.mxu0 0
      %1160 = vmatpush1.bf16.msra.mxu0 0
      %1161 = vmatprep.subr.bf16.mxu0 0
      %1162 = vmatpush1.bf16.msra.mxu0 0
      %1163 = vmatprep.subr.bf16.mxu0 0
      %1164 = vmatpush1.bf16.msra.mxu0 0
      %1165 = vmatprep.subr.bf16.mxu0 0
      %1166 = vmatpush1.bf16.msra.mxu0 0
      %1167 = vmatprep.subr.bf16.mxu0 0
      %1168 = vmatpush1.bf16.msra.mxu0 0
      %1169 = vmatprep.subr.bf16.mxu0 0
      %1170 = vmatpush1.bf16.msra.mxu0 0
      %1171 = vmatprep.subr.bf16.mxu0 0
      %1172 = vmatpush1.bf16.msra.mxu0 %v1155
      %1173 = vmatprep.subr.bf16.mxu0 0
      %1174 = vmatpush2.bf16.msra.mxu0 0
      %1175 = vmatprep.subr.bf16.mxu0 0
      %1176 = vmatpush2.bf16.msra.mxu0 0
      %1177 = vmatprep.subr.bf16.mxu0 0
      %1178 = vmatpush2.bf16.msra.mxu0 0
      %1179 = vmatprep.subr.bf16.mxu0 0
      %1180 = vmatpush2.bf16.msra.mxu0 0
      %1181 = vmatprep.subr.bf16.mxu0 0
      %1182 = vmatpush2.bf16.msra.mxu0 0
      %1183 = vmatprep.subr.bf16.mxu0 0
      %1184 = vmatpush2.bf16.msra.mxu0 0
      %1185 = vmatprep.subr.bf16.mxu0 0
      %1186 = vmatpush2.bf16.msra.mxu0 0
      %1187 = vmatprep.subr.bf16.mxu0 0
      %1188 = vmatpush2.bf16.msra.mxu0 0
      %1189 = vmatprep.mubr.bf16.mxu0 0
      %1190 = vmatmul.mubr.bf16.gmra.mxu0 %v1151
      %v1191 = vpop.f32.mrf.mxu0
      %v1192 = vadd.f32 %v1148, %v1191
      %v1193 = vpop.f32.mrf.mxu0
      %v1194 = vpop.f32.mrf.mxu0
      %v1195 = vpop.f32.mrf.mxu0
      %1196 = vdwg.mxu0
      %v1197 = vld [vmem:[%s546] sm:$0xff]
      %v1198 = vadd.f32 %v1192, %v559
      %vm1199 = vcmask 523264
      %1200 = vst.msk [vmem:[#allocation2] sm:$0xff] %vm1199, %v1198
      %v1201 = vadd.f32 %v1145, %v559
      %1202 = vst.msk [vmem:[#allocation2 + $0x8] sm:$0xff] %vm1199, %v1201
      %v1203 = vadd.f32 %v1197, %v559
      %1204 = vst.msk [vmem:[#allocation2 + $0x10] sm:$0xff] %vm1199, %v1203
      %v1205 = vld [vmem:[#allocation2] sm:$0xff]
      %v1206 = vld [vmem:[#allocation2 + $0x8] sm:$0xff]
      %v1207 = vld [vmem:[#allocation2 + $0x10] sm:$0xff]
      %v1208 = vld [vmem:[%s6 + $0x2] ss:$0 sm:$0xff]
      %v1209 = vld [vmem:[%s6 + $0x3] ss:$0 sm:$0xff]
      %v1210 = vsel %vm1199, %v1205, 0.0
      %1211 = vadd.xlane.f32.xlu0 %v1210
      %v1212 = vpop.xlane.xlu0 %1211
      %v1213 = vsel %vm1199, %v1206, 0.0
      %1214 = vadd.xlane.f32.xlu0 %v1213
      %v1215 = vpop.xlane.xlu0 %1214
      %v1216 = vsel %vm1199, %v1207, 0.0
      %1217 = vadd.xlane.f32.xlu0 %v1216
      %v1218 = vpop.xlane.xlu0 %1217
      %v1219 = vrcp.pop 64.0
      %v1220 = vmul.f32 %v1212, %v1219
      %v1221 = vmul.f32 %v1215, %v1219
      %v1222 = vmul.f32 %v1218, %v1219
      %v1223 = vsub.f32 %v1205, %v1220
      %v1224 = vsub.f32 %v1206, %v1221
      %v1225 = vsub.f32 %v1207, %v1222
      %v1226 = vmul.f32 %v1223, %v1223
      %v1227 = vmul.f32 %v1224, %v1224
      %v1228 = vmul.f32 %v1225, %v1225
      %v1229 = vsel %vm1199, %v1226, 0.0
      %1230 = vadd.xlane.f32.xlu0 %v1229
      %v1231 = vpop.xlane.xlu0 %1230
      %v1232 = vsel %vm1199, %v1227, 0.0
      %1233 = vadd.xlane.f32.xlu0 %v1232
      %v1234 = vpop.xlane.xlu0 %1233
      %v1235 = vsel %vm1199, %v1228, 0.0
      %1236 = vadd.xlane.f32.xlu0 %v1235
      %v1237 = vpop.xlane.xlu0 %1236
      %v1238 = vmul.f32 %v1231, %v1219
      %v1239 = vmul.f32 %v1234, %v1219
      %v1240 = vmul.f32 %v1237, %v1219
      %v1241 = vadd.f32 %v1238, 1e-05
      %v1242 = vadd.f32 %v1239, 1e-05
      %v1243 = vadd.f32 %v1240, 1e-05
      %v1244 = vrsqrt.pop %v1241
      %v1245 = vrsqrt.pop %v1242
      %v1246 = vrsqrt.pop %v1243
      %v1247 = vmul.f32 %v1223, %v1244
      %v1248 = vmul.f32 %v1224, %v1245
      %v1249 = vmul.f32 %v1225, %v1246
      %v1250 = vmul.f32 %v1247, %v1208
      %v1251 = vmul.f32 %v1248, %v1208
      %v1252 = vmul.f32 %v1249, %v1208
      %v1253 = vadd.f32 %v1250, %v1209
      %v1254 = vadd.f32 %v1251, %v1209
      %v1255 = vadd.f32 %v1252, %v1209
      %v1256 = vld [vmem:[%s9] sm:$0xff]
      %v1257 = vld [vmem:[%s9 + $0x8] sm:$0xff]
      %v1258 = vld [vmem:[%s9 + $0x10] sm:$0xff]
      %v1259 = vadd.f32 %v1253, %v1256
      %v1260 = vadd.f32 %v1254, %v1257
      %v1261 = vadd.f32 %v1255, %v1258
      %v1262 = vld [vmem:[%s5] sm:$0xff]
      %v1263 = vld [vmem:[%s5 + $0x8] sm:$0xff]
      %v1264 = vld [vmem:[%s5 + $0x10] sm:$0xff]
      %v1265 = vld [vmem:[%s553] sm:$0x1]
      %v1267 = vlaneseq
      %v1268 = vshrl.u32 %v1267, 7
      %v1269 = vsub.s32 0, %v1268
      %v1270 = vrot.slane %v1265, %v1269
      %v1272 = vmul.f32 %v1262, %v1270
      %v1273 = vmul.f32 %v1263, %v1270
      %v1274 = vmul.f32 %v1264, %v1270
      %vm1275 = vcmp.gt.f32.partialorder %v1272, 0.5
      %vm1276 = vcmp.gt.f32.partialorder %v1273, 0.5
      %vm1277 = vcmp.gt.f32.partialorder %v1274, 0.5
      %v1278 = vsel %vm1275, 0.0, -1e+09
      %v1279 = vsel %vm1276, 0.0, -1e+09
      %v1280 = vsel %vm1277, 0.0, -1e+09
      %v1281 = vld [vmem:[%s6 + $0x7] ss:$0 sm:$0xff]
      %v1282 = vld [vmem:[%s6 + $0x10] ss:$0 sm:$0xff]
      %v1283 = vsel %vm1199, %v1259, 0.0
      %1284 = vadd.xlane.f32.xlu0 %v1283
      %v1285 = vpop.xlane.xlu0 %1284
      %v1286 = vsel %vm1199, %v1260, 0.0
      %1287 = vadd.xlane.f32.xlu0 %v1286
      %v1288 = vpop.xlane.xlu0 %1287
      %v1289 = vsel %vm1199, %v1261, 0.0
      %1290 = vadd.xlane.f32.xlu0 %v1289
      %v1291 = vpop.xlane.xlu0 %1290
      %v1292 = vmul.f32 %v1285, %v1219
      %v1293 = vmul.f32 %v1288, %v1219
      %v1294 = vmul.f32 %v1291, %v1219
      %v1295 = vsub.f32 %v1259, %v1292
      %v1296 = vsub.f32 %v1260, %v1293
      %v1297 = vsub.f32 %v1261, %v1294
      %v1298 = vmul.f32 %v1295, %v1295
      %v1299 = vmul.f32 %v1296, %v1296
      %v1300 = vmul.f32 %v1297, %v1297
      %v1301 = vsel %vm1199, %v1298, 0.0
      %1302 = vadd.xlane.f32.xlu0 %v1301
      %v1303 = vpop.xlane.xlu0 %1302
      %v1304 = vsel %vm1199, %v1299, 0.0
      %1305 = vadd.xlane.f32.xlu0 %v1304
      %v1306 = vpop.xlane.xlu0 %1305
      %v1307 = vsel %vm1199, %v1300, 0.0
      %1308 = vadd.xlane.f32.xlu0 %v1307
      %v1309 = vpop.xlane.xlu0 %1308
      %v1310 = vmul.f32 %v1303, %v1219
      %v1311 = vmul.f32 %v1306, %v1219
      %v1312 = vmul.f32 %v1309, %v1219
      %v1313 = vadd.f32 %v1310, 1e-05
      %v1314 = vadd.f32 %v1311, 1e-05
      %v1315 = vadd.f32 %v1312, 1e-05
      %v1316 = vrsqrt.pop %v1313
      %v1317 = vrsqrt.pop %v1314
      %v1318 = vrsqrt.pop %v1315
      %v1319 = vmul.f32 %v1295, %v1316
      %v1320 = vmul.f32 %v1296, %v1317
      %v1321 = vmul.f32 %v1297, %v1318
      %v1322 = vmul.f32 %v1319, %v1281
      %v1323 = vmul.f32 %v1320, %v1281
      %v1324 = vmul.f32 %v1321, %v1281
      %v1325 = vadd.f32 %v1322, %v1282
      %v1326 = vadd.f32 %v1323, %v1282
      %v1327 = vadd.f32 %v1324, %v1282
      %v1328 = vpack.c.bf16 %v1326, %v1325
      %v1329 = vpack.c.bf16 %v1327, %v1327
      %v1330 = vld [vmem:[%s10] sm:$0xff]
      %v1331 = vld [vmem:[%s10 + $0x8] sm:$0xff]
      %v1332 = vld [vmem:[%s10 + $0x10] sm:$0xff]
      %v1333 = vld [vmem:[%s10 + $0x18] sm:$0xff]
      %v1334 = vld [vmem:[%s10 + $0x20] sm:$0xff]
      %v1335 = vld [vmem:[%s10 + $0x28] sm:$0xff]
      %v1336 = vld [vmem:[%s10 + $0x30] sm:$0xff]
      %v1337 = vld [vmem:[%s10 + $0x38] sm:$0xff]
      %s1338 = scalar_lea.vmem %s6, 21
      %v1339 = vld [vmem:[%s1338] ss:$8 sm:$0x3]
      %v1341 = vlaneseq
      %v1342 = vshrl.u32 %v1341, 7
      %v1343 = vsub.s32 0, %v1342
      %v1344 = vrot.slane %v1339, %v1343
      %v1345 = vlaneseq
      %v1346 = vshrl.u32 %v1345, 7
      %v1347 = vsub.s32 1, %v1346
      %v1348 = vrot.slane %v1339, %v1347
      %v1359 = vunpack.c.l.b16 %v1330
      %v1360 = vunpack.c.h.b16 %v1330
      %v1361 = vunpack.c.l.b16 %v1331
      %v1362 = vunpack.c.h.b16 %v1331
      %v1363 = vunpack.c.l.b16 %v1332
      %v1364 = vunpack.c.h.b16 %v1332
      %v1365 = vunpack.c.l.b16 %v1333
      %v1366 = vunpack.c.h.b16 %v1333
      %v1367 = vunpack.c.l.b16 %v1334
      %v1368 = vunpack.c.h.b16 %v1334
      %v1369 = vunpack.c.l.b16 %v1335
      %v1370 = vunpack.c.h.b16 %v1335
      %v1371 = vunpack.c.l.b16 %v1336
      %v1372 = vunpack.c.h.b16 %v1336
      %v1373 = vunpack.c.l.b16 %v1337
      %v1374 = vunpack.c.h.b16 %v1337
      %v1375 = vpack.c.b16 %v1361, %v1359
      %v1376 = vpack.c.b16 %v1362, %v1360
      %v1377 = vpack.c.b16 %v1365, %v1363
      %v1378 = vpack.c.b16 %v1366, %v1364
      %v1379 = vpack.c.b16 %v1369, %v1367
      %v1380 = vpack.c.b16 %v1370, %v1368
      %v1381 = vpack.c.b16 %v1373, %v1371
      %v1382 = vpack.c.b16 %v1374, %v1372
      %v1392 = vsel %vm1199, %v1328, 0
      %v1395 = vsel %vm1199, %v1329, 0
      %1397 = vmatprep.subr.bf16.mxu0 0
      %1398 = vmatpush1.bf16.msra.mxu0 0
      %1399 = vmatprep.subr.bf16.mxu0 0
      %1400 = vmatpush1.bf16.msra.mxu0 0
      %1401 = vmatprep.subr.bf16.mxu0 0
      %1402 = vmatpush1.bf16.msra.mxu0 0
      %1403 = vmatprep.subr.bf16.mxu0 0
      %1404 = vmatpush1.bf16.msra.mxu0 0
      %1405 = vmatprep.subr.bf16.mxu0 %v1382
      %1406 = vmatpush1.bf16.msra.mxu0 %v1381
      %1407 = vmatprep.subr.bf16.mxu0 %v1380
      %1408 = vmatpush1.bf16.msra.mxu0 %v1379
      %1409 = vmatprep.subr.bf16.mxu0 %v1378
      %1410 = vmatpush1.bf16.msra.mxu0 %v1377
      %1411 = vmatprep.subr.bf16.mxu0 %v1376
      %1412 = vmatpush1.bf16.msra.mxu0 %v1375
      %1413 = vmatprep.subr.bf16.mxu0 0
      %1414 = vmatpush2.bf16.msra.mxu0 0
      %1415 = vmatprep.subr.bf16.mxu0 0
      %1416 = vmatpush2.bf16.msra.mxu0 0
      %1417 = vmatprep.subr.bf16.mxu0 0
      %1418 = vmatpush2.bf16.msra.mxu0 0
      %1419 = vmatprep.subr.bf16.mxu0 0
      %1420 = vmatpush2.bf16.msra.mxu0 0
      %1421 = vmatprep.subr.bf16.mxu0 0
      %1422 = vmatpush2.bf16.msra.mxu0 0
      %1423 = vmatprep.subr.bf16.mxu0 0
      %1424 = vmatpush2.bf16.msra.mxu0 0
      %1425 = vmatprep.subr.bf16.mxu0 0
      %1426 = vmatpush2.bf16.msra.mxu0 0
      %1427 = vmatprep.subr.bf16.mxu0 0
      %1428 = vmatpush2.bf16.msra.mxu0 0
      %1429 = vmatprep.mubr.bf16.mxu0 0
      %1430 = vmatmul.mubr.bf16.gmra.mxu0 %v1392
      %v1431 = vpop.f32.mrf.mxu0
      %v1432 = vadd.f32 %v1344, %v1431
      %v1433 = vpop.f32.mrf.mxu0
      %v1434 = vadd.f32 %v1348, %v1433
      %v1435 = vpop.f32.mrf.mxu0
      %v1436 = vadd.f32 %v1344, %v1435
      %v1437 = vpop.f32.mrf.mxu0
      %v1438 = vadd.f32 %v1348, %v1437
      %1439 = vmatprep.mubr.bf16.mxu0 0
      %1440 = vmatmul.mubr.bf16.gmra.mxu0 %v1395
      %v1441 = vpop.f32.mrf.mxu0
      %v1442 = vadd.f32 %v1344, %v1441
      %v1443 = vpop.f32.mrf.mxu0
      %v1444 = vadd.f32 %v1348, %v1443
      %v1445 = vpop.f32.mrf.mxu0
      %v1446 = vpop.f32.mrf.mxu0
      %1447 = vdwg.mxu0
      %1451 = vrot.lane.b32.xlu0 %v1432, 64
      %v1452 = vpop.permute.xlu0 %1451
      %1453 = vrot.lane.b32.xlu0 %v1436, 64
      %v1454 = vpop.permute.xlu0 %1453
      %1455 = vrot.lane.b32.xlu0 %v1442, 64
      %v1456 = vpop.permute.xlu0 %1455
      %v1457 = vsel %vm981, %v1432, 0
      %v1459 = vsel %vm981, %v1436, 0
      %v1461 = vsel %vm981, %v1442, 0
      %v1463 = vsel %vm981, %v1452, 0
      %v1465 = vsel %vm981, %v1454, 0
      %v1467 = vsel %vm981, %v1456, 0
      %1469 = vmatprep.subr.mxu0 0.0
      %1470 = vmatpush1.xpose.msra.mxu0 0.0
      %1471 = vmatprep.subr.mxu0 0.0
      %1472 = vmatpush1.xpose.msra.mxu0 0.0
      %1473 = vmatprep.subr.mxu0 0.0
      %1474 = vmatpush1.xpose.msra.mxu0 0.0
      %1475 = vmatprep.subr.mxu0 0.0
      %1476 = vmatpush1.xpose.msra.mxu0 0.0
      %1477 = vmatprep.subr.mxu0 0.0
      %1478 = vmatpush1.xpose.msra.mxu0 0.0
      %1479 = vmatprep.subr.mxu0 0.0
      %1480 = vmatpush1.xpose.msra.mxu0 0.0
      %1481 = vmatprep.subr.mxu0 0.0
      %1482 = vmatpush1.xpose.msra.mxu0 0.0
      %1483 = vmatprep.subr.mxu0 0.0
      %1484 = vmatpush1.xpose.msra.mxu0 0.0
      %1485 = vmatprep.subr.mxu0 0.0
      %1486 = vmatpush1.xpose.msra.mxu0 0.0
      %1487 = vmatprep.subr.mxu0 0.0
      %1488 = vmatpush1.xpose.msra.mxu0 0.0
      %1489 = vmatprep.subr.mxu0 0.0
      %1490 = vmatpush1.xpose.msra.mxu0 0.0
      %1491 = vmatprep.subr.mxu0 0.0
      %1492 = vmatpush1.xpose.msra.mxu0 0.0
      %1493 = vmatprep.subr.mxu0 0.0
      %1494 = vmatpush1.xpose.msra.mxu0 0.0
      %1495 = vmatprep.subr.mxu0 0.0
      %1496 = vmatpush1.xpose.msra.mxu0 %v1467
      %1497 = vmatprep.subr.mxu0 0.0
      %1498 = vmatpush1.xpose.msra.mxu0 %v1465
      %1499 = vmatprep.subr.mxu0 0.0
      %1500 = vmatpush1.xpose.msra.mxu0 %v1463
      %1501 = vmatprep.subr.mxu0 0.0
      %1502 = vmatpush2.xpose.msra.mxu0 0.0
      %1503 = vmatprep.subr.mxu0 0.0
      %1504 = vmatpush2.xpose.msra.mxu0 0.0
      %1505 = vmatprep.subr.mxu0 0.0
      %1506 = vmatpush2.xpose.msra.mxu0 0.0
      %1507 = vmatprep.subr.mxu0 0.0
      %1508 = vmatpush2.xpose.msra.mxu0 0.0
      %1509 = vmatprep.subr.mxu0 0.0
      %1510 = vmatpush2.xpose.msra.mxu0 0.0
      %1511 = vmatprep.subr.mxu0 0.0
      %1512 = vmatpush2.xpose.msra.mxu0 0.0
      %1513 = vmatprep.subr.mxu0 0.0
      %1514 = vmatpush2.xpose.msra.mxu0 0.0
      %1515 = vmatprep.subr.mxu0 0.0
      %1516 = vmatpush2.xpose.msra.mxu0 0.0
      %1517 = vmatprep.subr.mxu0 0.0
      %1518 = vmatpush2.xpose.msra.mxu0 0.0
      %1519 = vmatprep.subr.mxu0 0.0
      %1520 = vmatpush2.xpose.msra.mxu0 0.0
      %1521 = vmatprep.subr.mxu0 0.0
      %1522 = vmatpush2.xpose.msra.mxu0 0.0
      %1523 = vmatprep.subr.mxu0 0.0
      %1524 = vmatpush2.xpose.msra.mxu0 0.0
      %1525 = vmatprep.subr.mxu0 0.0
      %1526 = vmatpush2.xpose.msra.mxu0 0.0
      %1527 = vmatprep.subr.mxu0 0.0
      %1528 = vmatpush2.xpose.msra.mxu0 0.0
      %1529 = vmatprep.subr.mxu0 0.0
      %1530 = vmatpush2.xpose.msra.mxu0 0.0
      %1531 = vmatprep.subr.mxu0 0.0
      %1532 = vmatpush2.xpose.msra.mxu0 0.0
      %1533 = vmatprep.mubr.f32.mxu0 0.0
      %1534 = vmatmul.mubr.f32.gmra.mxu0 %v1457
      %v1535 = vpop.f32.mrf.mxu0
      %v1536 = vadd.f32 %v1278, %v1535
      %v1537 = vpop.f32.mrf.mxu0
      %1538 = vmatprep.mubr.f32.mxu0 0.0
      %1539 = vmatmul.mubr.f32.gmra.mxu0 %v1459
      %v1540 = vpop.f32.mrf.mxu0
      %v1541 = vadd.f32 %v1279, %v1540
      %v1542 = vpop.f32.mrf.mxu0
      %1543 = vmatprep.mubr.f32.mxu0 0.0
      %1544 = vmatmul.mubr.f32.gmra.mxu0 %v1461
      %v1545 = vpop.f32.mrf.mxu0
      %v1546 = vadd.f32 %v1280, %v1545
      %v1547 = vpop.f32.mrf.mxu0
      %1548 = vdwg.mxu0
      %vm1549 = vcmask 195584
      %v1550 = vsel %vm1549, %v1536, -inf
      %1551 = vmax.xlane.f32.xlu0 %v1550
      %v1552 = vpop.xlane.xlu0 %1551
      %v1553 = vsel %vm1549, %v1541, -inf
      %1554 = vmax.xlane.f32.xlu0 %v1553
      %v1555 = vpop.xlane.xlu0 %1554
      %v1556 = vsel %vm1549, %v1546, -inf
      %1557 = vmax.xlane.f32.xlu0 %v1556
      %v1558 = vpop.xlane.xlu0 %1557
      %v1559 = vsub.f32 %v1536, %v1552
      %v1560 = vsub.f32 %v1541, %v1555
      %v1561 = vsub.f32 %v1546, %v1558
      %v1562 = vmul.f32 %v1559, 1.442695
      %v1563 = vpow.pop %v1562
      %v1564 = vmul.f32 %v1560, 1.442695
      %v1565 = vpow.pop %v1564
      %v1566 = vmul.f32 %v1561, 1.442695
      %v1567 = vpow.pop %v1566
      %v1568 = vsel %vm1549, %v1563, 0.0
      %1569 = vadd.xlane.f32.xlu0 %v1568
      %v1570 = vpop.xlane.xlu0 %1569
      %v1571 = vsel %vm1549, %v1565, 0.0
      %1572 = vadd.xlane.f32.xlu0 %v1571
      %v1573 = vpop.xlane.xlu0 %1572
      %v1574 = vsel %vm1549, %v1567, 0.0
      %1575 = vadd.xlane.f32.xlu0 %v1574
      %v1576 = vpop.xlane.xlu0 %1575
      %v1577 = vrcp.pop %v1570
      %v1578 = vrcp.pop %v1573
      %v1579 = vrcp.pop %v1576
      %v1580 = vmul.f32 %v1563, %v1577
      %v1581 = vmul.f32 %v1565, %v1578
      %v1582 = vmul.f32 %v1567, %v1579
      %v1584 = vsel %vm1549, %v1580, 0
      %v1587 = vsel %vm1549, %v1581, 0
      %v1590 = vsel %vm1549, %v1582, 0
      %1592 = vmatprep.subr.mxu0 0.0
      %1593 = vmatpush1.msra.mxu0 0.0
      %1594 = vmatprep.subr.mxu0 0.0
      %1595 = vmatpush1.msra.mxu0 0.0
      %1596 = vmatprep.subr.mxu0 0.0
      %1597 = vmatpush1.msra.mxu0 0.0
      %1598 = vmatprep.subr.mxu0 0.0
      %1599 = vmatpush1.msra.mxu0 0.0
      %1600 = vmatprep.subr.mxu0 0.0
      %1601 = vmatpush1.msra.mxu0 0.0
      %1602 = vmatprep.subr.mxu0 0.0
      %1603 = vmatpush1.msra.mxu0 0.0
      %1604 = vmatprep.subr.mxu0 0.0
      %1605 = vmatpush1.msra.mxu0 0.0
      %1606 = vmatprep.subr.mxu0 0.0
      %1607 = vmatpush1.msra.mxu0 0.0
      %1608 = vmatprep.subr.mxu0 0.0
      %1609 = vmatpush1.msra.mxu0 0.0
      %1610 = vmatprep.subr.mxu0 0.0
      %1611 = vmatpush1.msra.mxu0 0.0
      %1612 = vmatprep.subr.mxu0 0.0
      %1613 = vmatpush1.msra.mxu0 0.0
      %1614 = vmatprep.subr.mxu0 0.0
      %1615 = vmatpush1.msra.mxu0 0.0
      %1616 = vmatprep.subr.mxu0 0.0
      %1617 = vmatpush1.msra.mxu0 0.0
      %1618 = vmatprep.subr.mxu0 0.0
      %1619 = vmatpush1.msra.mxu0 %v1444
      %1620 = vmatprep.subr.mxu0 0.0
      %1621 = vmatpush1.msra.mxu0 %v1438
      %1622 = vmatprep.subr.mxu0 0.0
      %1623 = vmatpush1.msra.mxu0 %v1434
      %1624 = vmatprep.subr.mxu0 0.0
      %1625 = vmatpush2.msra.mxu0 0.0
      %1626 = vmatprep.subr.mxu0 0.0
      %1627 = vmatpush2.msra.mxu0 0.0
      %1628 = vmatprep.subr.mxu0 0.0
      %1629 = vmatpush2.msra.mxu0 0.0
      %1630 = vmatprep.subr.mxu0 0.0
      %1631 = vmatpush2.msra.mxu0 0.0
      %1632 = vmatprep.subr.mxu0 0.0
      %1633 = vmatpush2.msra.mxu0 0.0
      %1634 = vmatprep.subr.mxu0 0.0
      %1635 = vmatpush2.msra.mxu0 0.0
      %1636 = vmatprep.subr.mxu0 0.0
      %1637 = vmatpush2.msra.mxu0 0.0
      %1638 = vmatprep.subr.mxu0 0.0
      %1639 = vmatpush2.msra.mxu0 0.0
      %1640 = vmatprep.subr.mxu0 0.0
      %1641 = vmatpush2.msra.mxu0 0.0
      %1642 = vmatprep.subr.mxu0 0.0
      %1643 = vmatpush2.msra.mxu0 0.0
      %1644 = vmatprep.subr.mxu0 0.0
      %1645 = vmatpush2.msra.mxu0 0.0
      %1646 = vmatprep.subr.mxu0 0.0
      %1647 = vmatpush2.msra.mxu0 0.0
      %1648 = vmatprep.subr.mxu0 0.0
      %1649 = vmatpush2.msra.mxu0 0.0
      %1650 = vmatprep.subr.mxu0 0.0
      %1651 = vmatpush2.msra.mxu0 0.0
      %1652 = vmatprep.subr.mxu0 0.0
      %1653 = vmatpush2.msra.mxu0 0.0
      %1654 = vmatprep.subr.mxu0 0.0
      %1655 = vmatpush2.msra.mxu0 0.0
      %1656 = vmatprep.mubr.f32.mxu0 0.0
      %1657 = vmatmul.mubr.f32.gmra.mxu0 %v1584
      %v1658 = vpop.f32.mrf.mxu0
      %v1659 = vadd.f32 0.0, %v1658
      %v1660 = vpop.f32.mrf.mxu0
      %1661 = vmatprep.mubr.f32.mxu0 0.0
      %1662 = vmatmul.mubr.f32.gmra.mxu0 %v1587
      %v1663 = vpop.f32.mrf.mxu0
      %v1664 = vadd.f32 0.0, %v1663
      %v1665 = vpop.f32.mrf.mxu0
      %1666 = vmatprep.mubr.f32.mxu0 0.0
      %1667 = vmatmul.mubr.f32.gmra.mxu0 %v1590
      %v1668 = vpop.f32.mrf.mxu0
      %v1669 = vadd.f32 0.0, %v1668
      %v1670 = vpop.f32.mrf.mxu0
      %1671 = vdwg.mxu0
      %1672 = vst.msk [vmem:[#allocation3] sm:$0xff] %vm981, %v1659
      %1673 = vst.msk [vmem:[#allocation3 + $0x8] sm:$0xff] %vm981, %v1664
      %1674 = vst.msk [vmem:[#allocation3 + $0x10] sm:$0xff] %vm981, %v1669
      %1675 = vrot.lane.b32.xlu0 %v1432, 112
      %v1676 = vpop.permute.xlu0 %1675
      %1677 = vrot.lane.b32.xlu0 %v1436, 112
      %v1678 = vpop.permute.xlu0 %1677
      %1679 = vrot.lane.b32.xlu0 %v1442, 112
      %v1680 = vpop.permute.xlu0 %1679
      %1681 = vrot.lane.b32.xlu0 %v1432, 48
      %v1682 = vpop.permute.xlu0 %1681
      %1683 = vrot.lane.b32.xlu0 %v1436, 48
      %v1684 = vpop.permute.xlu0 %1683
      %1685 = vrot.lane.b32.xlu0 %v1442, 48
      %v1686 = vpop.permute.xlu0 %1685
      %v1687 = vsel %vm981, %v1676, 0
      %v1689 = vsel %vm981, %v1678, 0
      %v1691 = vsel %vm981, %v1680, 0
      %v1693 = vsel %vm981, %v1682, 0
      %v1695 = vsel %vm981, %v1684, 0
      %v1697 = vsel %vm981, %v1686, 0
      %1699 = vmatprep.subr.mxu0 0.0
      %1700 = vmatpush1.xpose.msra.mxu0 0.0
      %1701 = vmatprep.subr.mxu0 0.0
      %1702 = vmatpush1.xpose.msra.mxu0 0.0
      %1703 = vmatprep.subr.mxu0 0.0
      %1704 = vmatpush1.xpose.msra.mxu0 0.0
      %1705 = vmatprep.subr.mxu0 0.0
      %1706 = vmatpush1.xpose.msra.mxu0 0.0
      %1707 = vmatprep.subr.mxu0 0.0
      %1708 = vmatpush1.xpose.msra.mxu0 0.0
      %1709 = vmatprep.subr.mxu0 0.0
      %1710 = vmatpush1.xpose.msra.mxu0 0.0
      %1711 = vmatprep.subr.mxu0 0.0
      %1712 = vmatpush1.xpose.msra.mxu0 0.0
      %1713 = vmatprep.subr.mxu0 0.0
      %1714 = vmatpush1.xpose.msra.mxu0 0.0
      %1715 = vmatprep.subr.mxu0 0.0
      %1716 = vmatpush1.xpose.msra.mxu0 0.0
      %1717 = vmatprep.subr.mxu0 0.0
      %1718 = vmatpush1.xpose.msra.mxu0 0.0
      %1719 = vmatprep.subr.mxu0 0.0
      %1720 = vmatpush1.xpose.msra.mxu0 0.0
      %1721 = vmatprep.subr.mxu0 0.0
      %1722 = vmatpush1.xpose.msra.mxu0 0.0
      %1723 = vmatprep.subr.mxu0 0.0
      %1724 = vmatpush1.xpose.msra.mxu0 0.0
      %1725 = vmatprep.subr.mxu0 0.0
      %1726 = vmatpush1.xpose.msra.mxu0 %v1697
      %1727 = vmatprep.subr.mxu0 0.0
      %1728 = vmatpush1.xpose.msra.mxu0 %v1695
      %1729 = vmatprep.subr.mxu0 0.0
      %1730 = vmatpush1.xpose.msra.mxu0 %v1693
      %1731 = vmatprep.subr.mxu0 0.0
      %1732 = vmatpush2.xpose.msra.mxu0 0.0
      %1733 = vmatprep.subr.mxu0 0.0
      %1734 = vmatpush2.xpose.msra.mxu0 0.0
      %1735 = vmatprep.subr.mxu0 0.0
      %1736 = vmatpush2.xpose.msra.mxu0 0.0
      %1737 = vmatprep.subr.mxu0 0.0
      %1738 = vmatpush2.xpose.msra.mxu0 0.0
      %1739 = vmatprep.subr.mxu0 0.0
      %1740 = vmatpush2.xpose.msra.mxu0 0.0
      %1741 = vmatprep.subr.mxu0 0.0
      %1742 = vmatpush2.xpose.msra.mxu0 0.0
      %1743 = vmatprep.subr.mxu0 0.0
      %1744 = vmatpush2.xpose.msra.mxu0 0.0
      %1745 = vmatprep.subr.mxu0 0.0
      %1746 = vmatpush2.xpose.msra.mxu0 0.0
      %1747 = vmatprep.subr.mxu0 0.0
      %1748 = vmatpush2.xpose.msra.mxu0 0.0
      %1749 = vmatprep.subr.mxu0 0.0
      %1750 = vmatpush2.xpose.msra.mxu0 0.0
      %1751 = vmatprep.subr.mxu0 0.0
      %1752 = vmatpush2.xpose.msra.mxu0 0.0
      %1753 = vmatprep.subr.mxu0 0.0
      %1754 = vmatpush2.xpose.msra.mxu0 0.0
      %1755 = vmatprep.subr.mxu0 0.0
      %1756 = vmatpush2.xpose.msra.mxu0 0.0
      %1757 = vmatprep.subr.mxu0 0.0
      %1758 = vmatpush2.xpose.msra.mxu0 0.0
      %1759 = vmatprep.subr.mxu0 0.0
      %1760 = vmatpush2.xpose.msra.mxu0 0.0
      %1761 = vmatprep.subr.mxu0 0.0
      %1762 = vmatpush2.xpose.msra.mxu0 0.0
      %1763 = vmatprep.mubr.f32.mxu0 0.0
      %1764 = vmatmul.mubr.f32.gmra.mxu0 %v1687
      %v1765 = vpop.f32.mrf.mxu0
      %v1766 = vadd.f32 %v1278, %v1765
      %v1767 = vpop.f32.mrf.mxu0
      %1768 = vmatprep.mubr.f32.mxu0 0.0
      %1769 = vmatmul.mubr.f32.gmra.mxu0 %v1689
      %v1770 = vpop.f32.mrf.mxu0
      %v1771 = vadd.f32 %v1279, %v1770
      %v1772 = vpop.f32.mrf.mxu0
      %1773 = vmatprep.mubr.f32.mxu0 0.0
      %1774 = vmatmul.mubr.f32.gmra.mxu0 %v1691
      %v1775 = vpop.f32.mrf.mxu0
      %v1776 = vadd.f32 %v1280, %v1775
      %v1777 = vpop.f32.mrf.mxu0
      %1778 = vdwg.mxu0
      %v1779 = vsel %vm1549, %v1766, -inf
      %1780 = vmax.xlane.f32.xlu0 %v1779
      %v1781 = vpop.xlane.xlu0 %1780
      %v1782 = vsel %vm1549, %v1771, -inf
      %1783 = vmax.xlane.f32.xlu0 %v1782
      %v1784 = vpop.xlane.xlu0 %1783
      %v1785 = vsel %vm1549, %v1776, -inf
      %1786 = vmax.xlane.f32.xlu0 %v1785
      %v1787 = vpop.xlane.xlu0 %1786
      %v1788 = vsub.f32 %v1766, %v1781
      %v1789 = vsub.f32 %v1771, %v1784
      %v1790 = vsub.f32 %v1776, %v1787
      %v1791 = vmul.f32 %v1788, 1.442695
      %v1792 = vpow.pop %v1791
      %v1793 = vmul.f32 %v1789, 1.442695
      %v1794 = vpow.pop %v1793
      %v1795 = vmul.f32 %v1790, 1.442695
      %v1796 = vpow.pop %v1795
      %v1797 = vsel %vm1549, %v1792, 0.0
      %1798 = vadd.xlane.f32.xlu0 %v1797
      %v1799 = vpop.xlane.xlu0 %1798
      %v1800 = vsel %vm1549, %v1794, 0.0
      %1801 = vadd.xlane.f32.xlu0 %v1800
      %v1802 = vpop.xlane.xlu0 %1801
      %v1803 = vsel %vm1549, %v1796, 0.0
      %1804 = vadd.xlane.f32.xlu0 %v1803
      %v1805 = vpop.xlane.xlu0 %1804
      %v1806 = vrcp.pop %v1799
      %v1807 = vrcp.pop %v1802
      %v1808 = vrcp.pop %v1805
      %v1809 = vmul.f32 %v1792, %v1806
      %v1810 = vmul.f32 %v1794, %v1807
      %v1811 = vmul.f32 %v1796, %v1808
      %1815 = vrot.lane.b32.xlu0 %v1434, 112
      %v1816 = vpop.permute.xlu0 %1815
      %1817 = vrot.lane.b32.xlu0 %v1438, 112
      %v1818 = vpop.permute.xlu0 %1817
      %1819 = vrot.lane.b32.xlu0 %v1444, 112
      %v1820 = vpop.permute.xlu0 %1819
      %v1825 = vsel %vm1549, %v1809, 0
      %v1828 = vsel %vm1549, %v1810, 0
      %v1831 = vsel %vm1549, %v1811, 0
      %1833 = vmatprep.subr.mxu0 0.0
      %1834 = vmatpush1.msra.mxu0 0.0
      %1835 = vmatprep.subr.mxu0 0.0
      %1836 = vmatpush1.msra.mxu0 0.0
      %1837 = vmatprep.subr.mxu0 0.0
      %1838 = vmatpush1.msra.mxu0 0.0
      %1839 = vmatprep.subr.mxu0 0.0
      %1840 = vmatpush1.msra.mxu0 0.0
      %1841 = vmatprep.subr.mxu0 0.0
      %1842 = vmatpush1.msra.mxu0 0.0
      %1843 = vmatprep.subr.mxu0 0.0
      %1844 = vmatpush1.msra.mxu0 0.0
      %1845 = vmatprep.subr.mxu0 0.0
      %1846 = vmatpush1.msra.mxu0 0.0
      %1847 = vmatprep.subr.mxu0 0.0
      %1848 = vmatpush1.msra.mxu0 0.0
      %1849 = vmatprep.subr.mxu0 0.0
      %1850 = vmatpush1.msra.mxu0 0.0
      %1851 = vmatprep.subr.mxu0 0.0
      %1852 = vmatpush1.msra.mxu0 0.0
      %1853 = vmatprep.subr.mxu0 0.0
      %1854 = vmatpush1.msra.mxu0 0.0
      %1855 = vmatprep.subr.mxu0 0.0
      %1856 = vmatpush1.msra.mxu0 0.0
      %1857 = vmatprep.subr.mxu0 0.0
      %1858 = vmatpush1.msra.mxu0 0.0
      %1859 = vmatprep.subr.mxu0 0.0
      %1860 = vmatpush1.msra.mxu0 %v1820
      %1861 = vmatprep.subr.mxu0 0.0
      %1862 = vmatpush1.msra.mxu0 %v1818
      %1863 = vmatprep.subr.mxu0 0.0
      %1864 = vmatpush1.msra.mxu0 %v1816
      %1865 = vmatprep.subr.mxu0 0.0
      %1866 = vmatpush2.msra.mxu0 0.0
      %1867 = vmatprep.subr.mxu0 0.0
      %1868 = vmatpush2.msra.mxu0 0.0
      %1869 = vmatprep.subr.mxu0 0.0
      %1870 = vmatpush2.msra.mxu0 0.0
      %1871 = vmatprep.subr.mxu0 0.0
      %1872 = vmatpush2.msra.mxu0 0.0
      %1873 = vmatprep.subr.mxu0 0.0
      %1874 = vmatpush2.msra.mxu0 0.0
      %1875 = vmatprep.subr.mxu0 0.0
      %1876 = vmatpush2.msra.mxu0 0.0
      %1877 = vmatprep.subr.mxu0 0.0
      %1878 = vmatpush2.msra.mxu0 0.0
      %1879 = vmatprep.subr.mxu0 0.0
      %1880 = vmatpush2.msra.mxu0 0.0
      %1881 = vmatprep.subr.mxu0 0.0
      %1882 = vmatpush2.msra.mxu0 0.0
      %1883 = vmatprep.subr.mxu0 0.0
      %1884 = vmatpush2.msra.mxu0 0.0
      %1885 = vmatprep.subr.mxu0 0.0
      %1886 = vmatpush2.msra.mxu0 0.0
      %1887 = vmatprep.subr.mxu0 0.0
      %1888 = vmatpush2.msra.mxu0 0.0
      %1889 = vmatprep.subr.mxu0 0.0
      %1890 = vmatpush2.msra.mxu0 0.0
      %1891 = vmatprep.subr.mxu0 0.0
      %1892 = vmatpush2.msra.mxu0 0.0
      %1893 = vmatprep.subr.mxu0 0.0
      %1894 = vmatpush2.msra.mxu0 0.0
      %1895 = vmatprep.subr.mxu0 0.0
      %1896 = vmatpush2.msra.mxu0 0.0
      %1897 = vmatprep.mubr.f32.mxu0 0.0
      %1898 = vmatmul.mubr.f32.gmra.mxu0 %v1825
      %v1899 = vpop.f32.mrf.mxu0
      %v1900 = vadd.f32 0.0, %v1899
      %v1901 = vpop.f32.mrf.mxu0
      %1902 = vmatprep.mubr.f32.mxu0 0.0
      %1903 = vmatmul.mubr.f32.gmra.mxu0 %v1828
      %v1904 = vpop.f32.mrf.mxu0
      %v1905 = vadd.f32 0.0, %v1904
      %v1906 = vpop.f32.mrf.mxu0
      %1907 = vmatprep.mubr.f32.mxu0 0.0
      %1908 = vmatmul.mubr.f32.gmra.mxu0 %v1831
      %v1909 = vpop.f32.mrf.mxu0
      %v1910 = vadd.f32 0.0, %v1909
      %v1911 = vpop.f32.mrf.mxu0
      %1912 = vdwg.mxu0
      %1916 = vrot.lane.b32.xlu0 %v1900, 16
      %v1917 = vpop.permute.xlu0 %1916
      %1918 = vrot.lane.b32.xlu0 %v1905, 16
      %v1919 = vpop.permute.xlu0 %1918
      %1920 = vrot.lane.b32.xlu0 %v1910, 16
      %v1921 = vpop.permute.xlu0 %1920
      %vm1925 = vcmask 261248
      %1926 = vst.msk [vmem:[#allocation3] sm:$0xff] %vm1925, %v1917
      %1927 = vst.msk [vmem:[#allocation3 + $0x8] sm:$0xff] %vm1925, %v1919
      %1928 = vst.msk [vmem:[#allocation3 + $0x10] sm:$0xff] %vm1925, %v1921
      %1929 = vrot.lane.b32.xlu0 %v1432, 96
      %v1930 = vpop.permute.xlu0 %1929
      %1931 = vrot.lane.b32.xlu0 %v1436, 96
      %v1932 = vpop.permute.xlu0 %1931
      %1933 = vrot.lane.b32.xlu0 %v1442, 96
      %v1934 = vpop.permute.xlu0 %1933
      %1935 = vrot.lane.b32.xlu0 %v1432, 32
      %v1936 = vpop.permute.xlu0 %1935
      %1937 = vrot.lane.b32.xlu0 %v1436, 32
      %v1938 = vpop.permute.xlu0 %1937
      %1939 = vrot.lane.b32.xlu0 %v1442, 32
      %v1940 = vpop.permute.xlu0 %1939
      %v1941 = vsel %vm981, %v1930, 0
      %v1943 = vsel %vm981, %v1932, 0
      %v1945 = vsel %vm981, %v1934, 0
      %v1947 = vsel %vm981, %v1936, 0
      %v1949 = vsel %vm981, %v1938, 0
      %v1951 = vsel %vm981, %v1940, 0
      %1953 = vmatprep.subr.mxu0 0.0
      %1954 = vmatpush1.xpose.msra.mxu0 0.0
      %1955 = vmatprep.subr.mxu0 0.0
      %1956 = vmatpush1.xpose.msra.mxu0 0.0
      %1957 = vmatprep.subr.mxu0 0.0
      %1958 = vmatpush1.xpose.msra.mxu0 0.0
      %1959 = vmatprep.subr.mxu0 0.0
      %1960 = vmatpush1.xpose.msra.mxu0 0.0
      %1961 = vmatprep.subr.mxu0 0.0
      %1962 = vmatpush1.xpose.msra.mxu0 0.0
      %1963 = vmatprep.subr.mxu0 0.0
      %1964 = vmatpush1.xpose.msra.mxu0 0.0
      %1965 = vmatprep.subr.mxu0 0.0
      %1966 = vmatpush1.xpose.msra.mxu0 0.0
      %1967 = vmatprep.subr.mxu0 0.0
      %1968 = vmatpush1.xpose.msra.mxu0 0.0
      %1969 = vmatprep.subr.mxu0 0.0
      %1970 = vmatpush1.xpose.msra.mxu0 0.0
      %1971 = vmatprep.subr.mxu0 0.0
      %1972 = vmatpush1.xpose.msra.mxu0 0.0
      %1973 = vmatprep.subr.mxu0 0.0
      %1974 = vmatpush1.xpose.msra.mxu0 0.0
      %1975 = vmatprep.subr.mxu0 0.0
      %1976 = vmatpush1.xpose.msra.mxu0 0.0
      %1977 = vmatprep.subr.mxu0 0.0
      %1978 = vmatpush1.xpose.msra.mxu0 0.0
      %1979 = vmatprep.subr.mxu0 0.0
      %1980 = vmatpush1.xpose.msra.mxu0 %v1951
      %1981 = vmatprep.subr.mxu0 0.0
      %1982 = vmatpush1.xpose.msra.mxu0 %v1949
      %1983 = vmatprep.subr.mxu0 0.0
      %1984 = vmatpush1.xpose.msra.mxu0 %v1947
      %1985 = vmatprep.subr.mxu0 0.0
      %1986 = vmatpush2.xpose.msra.mxu0 0.0
      %1987 = vmatprep.subr.mxu0 0.0
      %1988 = vmatpush2.xpose.msra.mxu0 0.0
      %1989 = vmatprep.subr.mxu0 0.0
      %1990 = vmatpush2.xpose.msra.mxu0 0.0
      %1991 = vmatprep.subr.mxu0 0.0
      %1992 = vmatpush2.xpose.msra.mxu0 0.0
      %1993 = vmatprep.subr.mxu0 0.0
      %1994 = vmatpush2.xpose.msra.mxu0 0.0
      %1995 = vmatprep.subr.mxu0 0.0
      %1996 = vmatpush2.xpose.msra.mxu0 0.0
      %1997 = vmatprep.subr.mxu0 0.0
      %1998 = vmatpush2.xpose.msra.mxu0 0.0
      %1999 = vmatprep.subr.mxu0 0.0
      %2000 = vmatpush2.xpose.msra.mxu0 0.0
      %2001 = vmatprep.subr.mxu0 0.0
      %2002 = vmatpush2.xpose.msra.mxu0 0.0
      %2003 = vmatprep.subr.mxu0 0.0
      %2004 = vmatpush2.xpose.msra.mxu0 0.0
      %2005 = vmatprep.subr.mxu0 0.0
      %2006 = vmatpush2.xpose.msra.mxu0 0.0
      %2007 = vmatprep.subr.mxu0 0.0
      %2008 = vmatpush2.xpose.msra.mxu0 0.0
      %2009 = vmatprep.subr.mxu0 0.0
      %2010 = vmatpush2.xpose.msra.mxu0 0.0
      %2011 = vmatprep.subr.mxu0 0.0
      %2012 = vmatpush2.xpose.msra.mxu0 0.0
      %2013 = vmatprep.subr.mxu0 0.0
      %2014 = vmatpush2.xpose.msra.mxu0 0.0
      %2015 = vmatprep.subr.mxu0 0.0
      %2016 = vmatpush2.xpose.msra.mxu0 0.0
      %2017 = vmatprep.mubr.f32.mxu0 0.0
      %2018 = vmatmul.mubr.f32.gmra.mxu0 %v1941
      %v2019 = vpop.f32.mrf.mxu0
      %v2020 = vadd.f32 %v1278, %v2019
      %v2021 = vpop.f32.mrf.mxu0
      %2022 = vmatprep.mubr.f32.mxu0 0.0
      %2023 = vmatmul.mubr.f32.gmra.mxu0 %v1943
      %v2024 = vpop.f32.mrf.mxu0
      %v2025 = vadd.f32 %v1279, %v2024
      %v2026 = vpop.f32.mrf.mxu0
      %2027 = vmatprep.mubr.f32.mxu0 0.0
      %2028 = vmatmul.mubr.f32.gmra.mxu0 %v1945
      %v2029 = vpop.f32.mrf.mxu0
      %v2030 = vadd.f32 %v1280, %v2029
      %v2031 = vpop.f32.mrf.mxu0
      %2032 = vdwg.mxu0
      %v2033 = vsel %vm1549, %v2020, -inf
      %2034 = vmax.xlane.f32.xlu0 %v2033
      %v2035 = vpop.xlane.xlu0 %2034
      %v2036 = vsel %vm1549, %v2025, -inf
      %2037 = vmax.xlane.f32.xlu0 %v2036
      %v2038 = vpop.xlane.xlu0 %2037
      %v2039 = vsel %vm1549, %v2030, -inf
      %2040 = vmax.xlane.f32.xlu0 %v2039
      %v2041 = vpop.xlane.xlu0 %2040
      %v2042 = vsub.f32 %v2020, %v2035
      %v2043 = vsub.f32 %v2025, %v2038
      %v2044 = vsub.f32 %v2030, %v2041
      %v2045 = vmul.f32 %v2042, 1.442695
      %v2046 = vpow.pop %v2045
      %v2047 = vmul.f32 %v2043, 1.442695
      %v2048 = vpow.pop %v2047
      %v2049 = vmul.f32 %v2044, 1.442695
      %v2050 = vpow.pop %v2049
      %v2051 = vsel %vm1549, %v2046, 0.0
      %2052 = vadd.xlane.f32.xlu0 %v2051
      %v2053 = vpop.xlane.xlu0 %2052
      %v2054 = vsel %vm1549, %v2048, 0.0
      %2055 = vadd.xlane.f32.xlu0 %v2054
      %v2056 = vpop.xlane.xlu0 %2055
      %v2057 = vsel %vm1549, %v2050, 0.0
      %2058 = vadd.xlane.f32.xlu0 %v2057
      %v2059 = vpop.xlane.xlu0 %2058
      %v2060 = vrcp.pop %v2053
      %v2061 = vrcp.pop %v2056
      %v2062 = vrcp.pop %v2059
      %v2063 = vmul.f32 %v2046, %v2060
      %v2064 = vmul.f32 %v2048, %v2061
      %v2065 = vmul.f32 %v2050, %v2062
      %2066 = vrot.lane.b32.xlu0 %v1434, 96
      %v2067 = vpop.permute.xlu0 %2066
      %2068 = vrot.lane.b32.xlu0 %v1438, 96
      %v2069 = vpop.permute.xlu0 %2068
      %2070 = vrot.lane.b32.xlu0 %v1444, 96
      %v2071 = vpop.permute.xlu0 %2070
      %v2076 = vsel %vm1549, %v2063, 0
      %v2079 = vsel %vm1549, %v2064, 0
      %v2082 = vsel %vm1549, %v2065, 0
      %2084 = vmatprep.subr.mxu0 0.0
      %2085 = vmatpush1.msra.mxu0 0.0
      %2086 = vmatprep.subr.mxu0 0.0
      %2087 = vmatpush1.msra.mxu0 0.0
      %2088 = vmatprep.subr.mxu0 0.0
      %2089 = vmatpush1.msra.mxu0 0.0
      %2090 = vmatprep.subr.mxu0 0.0
      %2091 = vmatpush1.msra.mxu0 0.0
      %2092 = vmatprep.subr.mxu0 0.0
      %2093 = vmatpush1.msra.mxu0 0.0
      %2094 = vmatprep.subr.mxu0 0.0
      %2095 = vmatpush1.msra.mxu0 0.0
      %2096 = vmatprep.subr.mxu0 0.0
      %2097 = vmatpush1.msra.mxu0 0.0
      %2098 = vmatprep.subr.mxu0 0.0
      %2099 = vmatpush1.msra.mxu0 0.0
      %2100 = vmatprep.subr.mxu0 0.0
      %2101 = vmatpush1.msra.mxu0 0.0
      %2102 = vmatprep.subr.mxu0 0.0
      %2103 = vmatpush1.msra.mxu0 0.0
      %2104 = vmatprep.subr.mxu0 0.0
      %2105 = vmatpush1.msra.mxu0 0.0
      %2106 = vmatprep.subr.mxu0 0.0
      %2107 = vmatpush1.msra.mxu0 0.0
      %2108 = vmatprep.subr.mxu0 0.0
      %2109 = vmatpush1.msra.mxu0 0.0
      %2110 = vmatprep.subr.mxu0 0.0
      %2111 = vmatpush1.msra.mxu0 %v2071
      %2112 = vmatprep.subr.mxu0 0.0
      %2113 = vmatpush1.msra.mxu0 %v2069
      %2114 = vmatprep.subr.mxu0 0.0
      %2115 = vmatpush1.msra.mxu0 %v2067
      %2116 = vmatprep.subr.mxu0 0.0
      %2117 = vmatpush2.msra.mxu0 0.0
      %2118 = vmatprep.subr.mxu0 0.0
      %2119 = vmatpush2.msra.mxu0 0.0
      %2120 = vmatprep.subr.mxu0 0.0
      %2121 = vmatpush2.msra.mxu0 0.0
      %2122 = vmatprep.subr.mxu0 0.0
      %2123 = vmatpush2.msra.mxu0 0.0
      %2124 = vmatprep.subr.mxu0 0.0
      %2125 = vmatpush2.msra.mxu0 0.0
      %2126 = vmatprep.subr.mxu0 0.0
      %2127 = vmatpush2.msra.mxu0 0.0
      %2128 = vmatprep.subr.mxu0 0.0
      %2129 = vmatpush2.msra.mxu0 0.0
      %2130 = vmatprep.subr.mxu0 0.0
      %2131 = vmatpush2.msra.mxu0 0.0
      %2132 = vmatprep.subr.mxu0 0.0
      %2133 = vmatpush2.msra.mxu0 0.0
      %2134 = vmatprep.subr.mxu0 0.0
      %2135 = vmatpush2.msra.mxu0 0.0
      %2136 = vmatprep.subr.mxu0 0.0
      %2137 = vmatpush2.msra.mxu0 0.0
      %2138 = vmatprep.subr.mxu0 0.0
      %2139 = vmatpush2.msra.mxu0 0.0
      %2140 = vmatprep.subr.mxu0 0.0
      %2141 = vmatpush2.msra.mxu0 0.0
      %2142 = vmatprep.subr.mxu0 0.0
      %2143 = vmatpush2.msra.mxu0 0.0
      %2144 = vmatprep.subr.mxu0 0.0
      %2145 = vmatpush2.msra.mxu0 0.0
      %2146 = vmatprep.subr.mxu0 0.0
      %2147 = vmatpush2.msra.mxu0 0.0
      %2148 = vmatprep.mubr.f32.mxu0 0.0
      %2149 = vmatmul.mubr.f32.gmra.mxu0 %v2076
      %v2150 = vpop.f32.mrf.mxu0
      %v2151 = vadd.f32 0.0, %v2150
      %v2152 = vpop.f32.mrf.mxu0
      %2153 = vmatprep.mubr.f32.mxu0 0.0
      %2154 = vmatmul.mubr.f32.gmra.mxu0 %v2079
      %v2155 = vpop.f32.mrf.mxu0
      %v2156 = vadd.f32 0.0, %v2155
      %v2157 = vpop.f32.mrf.mxu0
      %2158 = vmatprep.mubr.f32.mxu0 0.0
      %2159 = vmatmul.mubr.f32.gmra.mxu0 %v2082
      %v2160 = vpop.f32.mrf.mxu0
      %v2161 = vadd.f32 0.0, %v2160
      %v2162 = vpop.f32.mrf.mxu0
      %2163 = vdwg.mxu0
      %2167 = vrot.lane.b32.xlu0 %v2151, 32
      %v2168 = vpop.permute.xlu0 %2167
      %2169 = vrot.lane.b32.xlu0 %v2156, 32
      %v2170 = vpop.permute.xlu0 %2169
      %2171 = vrot.lane.b32.xlu0 %v2161, 32
      %v2172 = vpop.permute.xlu0 %2171
      %vm2176 = vcmask 392448
      %2177 = vst.msk [vmem:[#allocation3] sm:$0xff] %vm2176, %v2168
      %2178 = vst.msk [vmem:[#allocation3 + $0x8] sm:$0xff] %vm2176, %v2170
      %2179 = vst.msk [vmem:[#allocation3 + $0x10] sm:$0xff] %vm2176, %v2172
      %2180 = vrot.lane.b32.xlu0 %v1432, 80
      %v2181 = vpop.permute.xlu0 %2180
      %2182 = vrot.lane.b32.xlu0 %v1436, 80
      %v2183 = vpop.permute.xlu0 %2182
      %2184 = vrot.lane.b32.xlu0 %v1442, 80
      %v2185 = vpop.permute.xlu0 %2184
      %2186 = vrot.lane.b32.xlu0 %v1432, 16
      %v2187 = vpop.permute.xlu0 %2186
      %2188 = vrot.lane.b32.xlu0 %v1436, 16
      %v2189 = vpop.permute.xlu0 %2188
      %2190 = vrot.lane.b32.xlu0 %v1442, 16
      %v2191 = vpop.permute.xlu0 %2190
      %v2192 = vsel %vm981, %v2181, 0
      %v2194 = vsel %vm981, %v2183, 0
      %v2196 = vsel %vm981, %v2185, 0
      %v2198 = vsel %vm981, %v2187, 0
      %v2200 = vsel %vm981, %v2189, 0
      %v2202 = vsel %vm981, %v2191, 0
      %2204 = vmatprep.subr.mxu0 0.0
      %2205 = vmatpush1.xpose.msra.mxu0 0.0
      %2206 = vmatprep.subr.mxu0 0.0
      %2207 = vmatpush1.xpose.msra.mxu0 0.0
      %2208 = vmatprep.subr.mxu0 0.0
      %2209 = vmatpush1.xpose.msra.mxu0 0.0
      %2210 = vmatprep.subr.mxu0 0.0
      %2211 = vmatpush1.xpose.msra.mxu0 0.0
      %2212 = vmatprep.subr.mxu0 0.0
      %2213 = vmatpush1.xpose.msra.mxu0 0.0
      %2214 = vmatprep.subr.mxu0 0.0
      %2215 = vmatpush1.xpose.msra.mxu0 0.0
      %2216 = vmatprep.subr.mxu0 0.0
      %2217 = vmatpush1.xpose.msra.mxu0 0.0
      %2218 = vmatprep.subr.mxu0 0.0
      %2219 = vmatpush1.xpose.msra.mxu0 0.0
      %2220 = vmatprep.subr.mxu0 0.0
      %2221 = vmatpush1.xpose.msra.mxu0 0.0
      %2222 = vmatprep.subr.mxu0 0.0
      %2223 = vmatpush1.xpose.msra.mxu0 0.0
      %2224 = vmatprep.subr.mxu0 0.0
      %2225 = vmatpush1.xpose.msra.mxu0 0.0
      %2226 = vmatprep.subr.mxu0 0.0
      %2227 = vmatpush1.xpose.msra.mxu0 0.0
      %2228 = vmatprep.subr.mxu0 0.0
      %2229 = vmatpush1.xpose.msra.mxu0 0.0
      %2230 = vmatprep.subr.mxu0 0.0
      %2231 = vmatpush1.xpose.msra.mxu0 %v2202
      %2232 = vmatprep.subr.mxu0 0.0
      %2233 = vmatpush1.xpose.msra.mxu0 %v2200
      %2234 = vmatprep.subr.mxu0 0.0
      %2235 = vmatpush1.xpose.msra.mxu0 %v2198
      %2236 = vmatprep.subr.mxu0 0.0
      %2237 = vmatpush2.xpose.msra.mxu0 0.0
      %2238 = vmatprep.subr.mxu0 0.0
      %2239 = vmatpush2.xpose.msra.mxu0 0.0
      %2240 = vmatprep.subr.mxu0 0.0
      %2241 = vmatpush2.xpose.msra.mxu0 0.0
      %2242 = vmatprep.subr.mxu0 0.0
      %2243 = vmatpush2.xpose.msra.mxu0 0.0
      %2244 = vmatprep.subr.mxu0 0.0
      %2245 = vmatpush2.xpose.msra.mxu0 0.0
      %2246 = vmatprep.subr.mxu0 0.0
      %2247 = vmatpush2.xpose.msra.mxu0 0.0
      %2248 = vmatprep.subr.mxu0 0.0
      %2249 = vmatpush2.xpose.msra.mxu0 0.0
      %2250 = vmatprep.subr.mxu0 0.0
      %2251 = vmatpush2.xpose.msra.mxu0 0.0
      %2252 = vmatprep.subr.mxu0 0.0
      %2253 = vmatpush2.xpose.msra.mxu0 0.0
      %2254 = vmatprep.subr.mxu0 0.0
      %2255 = vmatpush2.xpose.msra.mxu0 0.0
      %2256 = vmatprep.subr.mxu0 0.0
      %2257 = vmatpush2.xpose.msra.mxu0 0.0
      %2258 = vmatprep.subr.mxu0 0.0
      %2259 = vmatpush2.xpose.msra.mxu0 0.0
      %2260 = vmatprep.subr.mxu0 0.0
      %2261 = vmatpush2.xpose.msra.mxu0 0.0
      %2262 = vmatprep.subr.mxu0 0.0
      %2263 = vmatpush2.xpose.msra.mxu0 0.0
      %2264 = vmatprep.subr.mxu0 0.0
      %2265 = vmatpush2.xpose.msra.mxu0 0.0
      %2266 = vmatprep.subr.mxu0 0.0
      %2267 = vmatpush2.xpose.msra.mxu0 0.0
      %2268 = vmatprep.mubr.f32.mxu0 0.0
      %2269 = vmatmul.mubr.f32.gmra.mxu0 %v2192
      %v2270 = vpop.f32.mrf.mxu0
      %v2271 = vadd.f32 %v1278, %v2270
      %v2272 = vpop.f32.mrf.mxu0
      %2273 = vmatprep.mubr.f32.mxu0 0.0
      %2274 = vmatmul.mubr.f32.gmra.mxu0 %v2194
      %v2275 = vpop.f32.mrf.mxu0
      %v2276 = vadd.f32 %v1279, %v2275
      %v2277 = vpop.f32.mrf.mxu0
      %2278 = vmatprep.mubr.f32.mxu0 0.0
      %2279 = vmatmul.mubr.f32.gmra.mxu0 %v2196
      %v2280 = vpop.f32.mrf.mxu0
      %v2281 = vadd.f32 %v1280, %v2280
      %v2282 = vpop.f32.mrf.mxu0
      %2283 = vdwg.mxu0
      %v2284 = vsel %vm1549, %v2271, -inf
      %2285 = vmax.xlane.f32.xlu0 %v2284
      %v2286 = vpop.xlane.xlu0 %2285
      %v2287 = vsel %vm1549, %v2276, -inf
      %2288 = vmax.xlane.f32.xlu0 %v2287
      %v2289 = vpop.xlane.xlu0 %2288
      %v2290 = vsel %vm1549, %v2281, -inf
      %2291 = vmax.xlane.f32.xlu0 %v2290
      %v2292 = vpop.xlane.xlu0 %2291
      %v2293 = vsub.f32 %v2271, %v2286
      %v2294 = vsub.f32 %v2276, %v2289
      %v2295 = vsub.f32 %v2281, %v2292
      %v2296 = vmul.f32 %v2293, 1.442695
      %v2297 = vpow.pop %v2296
      %v2298 = vmul.f32 %v2294, 1.442695
      %v2299 = vpow.pop %v2298
      %v2300 = vmul.f32 %v2295, 1.442695
      %v2301 = vpow.pop %v2300
      %v2302 = vsel %vm1549, %v2297, 0.0
      %2303 = vadd.xlane.f32.xlu0 %v2302
      %v2304 = vpop.xlane.xlu0 %2303
      %v2305 = vsel %vm1549, %v2299, 0.0
      %2306 = vadd.xlane.f32.xlu0 %v2305
      %v2307 = vpop.xlane.xlu0 %2306
      %v2308 = vsel %vm1549, %v2301, 0.0
      %2309 = vadd.xlane.f32.xlu0 %v2308
      %v2310 = vpop.xlane.xlu0 %2309
      %v2311 = vrcp.pop %v2304
      %v2312 = vrcp.pop %v2307
      %v2313 = vrcp.pop %v2310
      %v2314 = vmul.f32 %v2297, %v2311
      %v2315 = vmul.f32 %v2299, %v2312
      %v2316 = vmul.f32 %v2301, %v2313
      %2317 = vrot.lane.b32.xlu0 %v1434, 80
      %v2318 = vpop.permute.xlu0 %2317
      %2319 = vrot.lane.b32.xlu0 %v1438, 80
      %v2320 = vpop.permute.xlu0 %2319
      %2321 = vrot.lane.b32.xlu0 %v1444, 80
      %v2322 = vpop.permute.xlu0 %2321
      %v2327 = vsel %vm1549, %v2314, 0
      %v2330 = vsel %vm1549, %v2315, 0
      %v2333 = vsel %vm1549, %v2316, 0
      %2335 = vmatprep.subr.mxu0 0.0
      %2336 = vmatpush1.msra.mxu0 0.0
      %2337 = vmatprep.subr.mxu0 0.0
      %2338 = vmatpush1.msra.mxu0 0.0
      %2339 = vmatprep.subr.mxu0 0.0
      %2340 = vmatpush1.msra.mxu0 0.0
      %2341 = vmatprep.subr.mxu0 0.0
      %2342 = vmatpush1.msra.mxu0 0.0
      %2343 = vmatprep.subr.mxu0 0.0
      %2344 = vmatpush1.msra.mxu0 0.0
      %2345 = vmatprep.subr.mxu0 0.0
      %2346 = vmatpush1.msra.mxu0 0.0
      %2347 = vmatprep.subr.mxu0 0.0
      %2348 = vmatpush1.msra.mxu0 0.0
      %2349 = vmatprep.subr.mxu0 0.0
      %2350 = vmatpush1.msra.mxu0 0.0
      %2351 = vmatprep.subr.mxu0 0.0
      %2352 = vmatpush1.msra.mxu0 0.0
      %2353 = vmatprep.subr.mxu0 0.0
      %2354 = vmatpush1.msra.mxu0 0.0
      %2355 = vmatprep.subr.mxu0 0.0
      %2356 = vmatpush1.msra.mxu0 0.0
      %2357 = vmatprep.subr.mxu0 0.0
      %2358 = vmatpush1.msra.mxu0 0.0
      %2359 = vmatprep.subr.mxu0 0.0
      %2360 = vmatpush1.msra.mxu0 0.0
      %2361 = vmatprep.subr.mxu0 0.0
      %2362 = vmatpush1.msra.mxu0 %v2322
      %2363 = vmatprep.subr.mxu0 0.0
      %2364 = vmatpush1.msra.mxu0 %v2320
      %2365 = vmatprep.subr.mxu0 0.0
      %2366 = vmatpush1.msra.mxu0 %v2318
      %2367 = vmatprep.subr.mxu0 0.0
      %2368 = vmatpush2.msra.mxu0 0.0
      %2369 = vmatprep.subr.mxu0 0.0
      %2370 = vmatpush2.msra.mxu0 0.0
      %2371 = vmatprep.subr.mxu0 0.0
      %2372 = vmatpush2.msra.mxu0 0.0
      %2373 = vmatprep.subr.mxu0 0.0
      %2374 = vmatpush2.msra.mxu0 0.0
      %2375 = vmatprep.subr.mxu0 0.0
      %2376 = vmatpush2.msra.mxu0 0.0
      %2377 = vmatprep.subr.mxu0 0.0
      %2378 = vmatpush2.msra.mxu0 0.0
      %2379 = vmatprep.subr.mxu0 0.0
      %2380 = vmatpush2.msra.mxu0 0.0
      %2381 = vmatprep.subr.mxu0 0.0
      %2382 = vmatpush2.msra.mxu0 0.0
      %2383 = vmatprep.subr.mxu0 0.0
      %2384 = vmatpush2.msra.mxu0 0.0
      %2385 = vmatprep.subr.mxu0 0.0
      %2386 = vmatpush2.msra.mxu0 0.0
      %2387 = vmatprep.subr.mxu0 0.0
      %2388 = vmatpush2.msra.mxu0 0.0
      %2389 = vmatprep.subr.mxu0 0.0
      %2390 = vmatpush2.msra.mxu0 0.0
      %2391 = vmatprep.subr.mxu0 0.0
      %2392 = vmatpush2.msra.mxu0 0.0
      %2393 = vmatprep.subr.mxu0 0.0
      %2394 = vmatpush2.msra.mxu0 0.0
      %2395 = vmatprep.subr.mxu0 0.0
      %2396 = vmatpush2.msra.mxu0 0.0
      %2397 = vmatprep.subr.mxu0 0.0
      %2398 = vmatpush2.msra.mxu0 0.0
      %2399 = vmatprep.mubr.f32.mxu0 0.0
      %2400 = vmatmul.mubr.f32.gmra.mxu0 %v2327
      %v2401 = vpop.f32.mrf.mxu0
      %v2402 = vadd.f32 0.0, %v2401
      %v2403 = vpop.f32.mrf.mxu0
      %2404 = vmatprep.mubr.f32.mxu0 0.0
      %2405 = vmatmul.mubr.f32.gmra.mxu0 %v2330
      %v2406 = vpop.f32.mrf.mxu0
      %v2407 = vadd.f32 0.0, %v2406
      %v2408 = vpop.f32.mrf.mxu0
      %2409 = vmatprep.mubr.f32.mxu0 0.0
      %2410 = vmatmul.mubr.f32.gmra.mxu0 %v2333
      %v2411 = vpop.f32.mrf.mxu0
      %v2412 = vadd.f32 0.0, %v2411
      %v2413 = vpop.f32.mrf.mxu0
      %2414 = vdwg.mxu0
      %2418 = vrot.lane.b32.xlu0 %v2402, 48
      %v2419 = vpop.permute.xlu0 %2418
      %2420 = vrot.lane.b32.xlu0 %v2407, 48
      %v2421 = vpop.permute.xlu0 %2420
      %2422 = vrot.lane.b32.xlu0 %v2412, 48
      %v2423 = vpop.permute.xlu0 %2422
      %vm2427 = vcmask 523648
      %2428 = vst.msk [vmem:[#allocation3] sm:$0xff] %vm2427, %v2419
      %2429 = vst.msk [vmem:[#allocation3 + $0x8] sm:$0xff] %vm2427, %v2421
      %2430 = vst.msk [vmem:[#allocation3 + $0x10] sm:$0xff] %vm2427, %v2423
      %v2431 = vld [vmem:[#allocation3] sm:$0xff]
      %v2432 = vld [vmem:[#allocation3 + $0x8] sm:$0xff]
      %v2433 = vld [vmem:[#allocation3 + $0x10] sm:$0xff]
      %v2434 = vpack.c.bf16 %v2432, %v2431
      %v2435 = vpack.c.bf16 %v2433, %v2433
      %v2436 = vld [vmem:[%s11] sm:$0xf]
      %v2437 = vld [vmem:[%s11 + $0x4] sm:$0xf]
      %v2438 = vld [vmem:[%s11 + $0x8] sm:$0xf]
      %v2439 = vld [vmem:[%s11 + $0xc] sm:$0xf]
      %v2440 = vld [vmem:[%s11 + $0x10] sm:$0xf]
      %v2441 = vld [vmem:[%s11 + $0x14] sm:$0xf]
      %v2442 = vld [vmem:[%s11 + $0x18] sm:$0xf]
      %v2443 = vld [vmem:[%s11 + $0x1c] sm:$0xf]
      %v2444 = vld [vmem:[%s6 + $0x13] ss:$0 sm:$0xff]
      %v2453 = vunpack.c.l.b16 %v2436
      %v2454 = vunpack.c.l.b16 %v2437
      %v2455 = vunpack.c.l.b16 %v2438
      %v2456 = vunpack.c.l.b16 %v2439
      %v2457 = vunpack.c.l.b16 %v2440
      %v2458 = vunpack.c.l.b16 %v2441
      %v2459 = vunpack.c.l.b16 %v2442
      %v2460 = vunpack.c.l.b16 %v2443
      %v2461 = vpack.c.b16 %v2454, %v2453
      %v2462 = vpack.c.b16 %v2456, %v2455
      %v2463 = vpack.c.b16 %v2458, %v2457
      %v2464 = vpack.c.b16 %v2460, %v2459
      %v2470 = vsel %vm1199, %v2434, 0
      %v2473 = vsel %vm1199, %v2435, 0
      %2475 = vmatprep.subr.bf16.mxu0 0
      %2476 = vmatpush1.bf16.msra.mxu0 0
      %2477 = vmatprep.subr.bf16.mxu0 0
      %2478 = vmatpush1.bf16.msra.mxu0 0
      %2479 = vmatprep.subr.bf16.mxu0 0
      %2480 = vmatpush1.bf16.msra.mxu0 0
      %2481 = vmatprep.subr.bf16.mxu0 0
      %2482 = vmatpush1.bf16.msra.mxu0 0
      %2483 = vmatprep.subr.bf16.mxu0 0
      %2484 = vmatpush1.bf16.msra.mxu0 %v2464
      %2485 = vmatprep.subr.bf16.mxu0 0
      %2486 = vmatpush1.bf16.msra.mxu0 %v2463
      %2487 = vmatprep.subr.bf16.mxu0 0
      %2488 = vmatpush1.bf16.msra.mxu0 %v2462
      %2489 = vmatprep.subr.bf16.mxu0 0
      %2490 = vmatpush1.bf16.msra.mxu0 %v2461
      %2491 = vmatprep.subr.bf16.mxu0 0
      %2492 = vmatpush2.bf16.msra.mxu0 0
      %2493 = vmatprep.subr.bf16.mxu0 0
      %2494 = vmatpush2.bf16.msra.mxu0 0
      %2495 = vmatprep.subr.bf16.mxu0 0
      %2496 = vmatpush2.bf16.msra.mxu0 0
      %2497 = vmatprep.subr.bf16.mxu0 0
      %2498 = vmatpush2.bf16.msra.mxu0 0
      %2499 = vmatprep.subr.bf16.mxu0 0
      %2500 = vmatpush2.bf16.msra.mxu0 0
      %2501 = vmatprep.subr.bf16.mxu0 0
      %2502 = vmatpush2.bf16.msra.mxu0 0
      %2503 = vmatprep.subr.bf16.mxu0 0
      %2504 = vmatpush2.bf16.msra.mxu0 0
      %2505 = vmatprep.subr.bf16.mxu0 0
      %2506 = vmatpush2.bf16.msra.mxu0 0
      %2507 = vmatprep.mubr.bf16.mxu0 0
      %2508 = vmatmul.mubr.bf16.gmra.mxu0 %v2470
      %v2509 = vpop.f32.mrf.mxu0
      %v2510 = vadd.f32 %v2444, %v2509
      %v2511 = vpop.f32.mrf.mxu0
      %v2512 = vpop.f32.mrf.mxu0
      %v2513 = vadd.f32 %v2444, %v2512
      %v2514 = vpop.f32.mrf.mxu0
      %2515 = vmatprep.mubr.bf16.mxu0 0
      %2516 = vmatmul.mubr.bf16.gmra.mxu0 %v2473
      %v2517 = vpop.f32.mrf.mxu0
      %v2518 = vadd.f32 %v2444, %v2517
      %v2519 = vpop.f32.mrf.mxu0
      %v2520 = vpop.f32.mrf.mxu0
      %v2521 = vpop.f32.mrf.mxu0
      %2522 = vdwg.mxu0
      %v2523 = vadd.f32 %v1259, %v2510
      %v2524 = vadd.f32 %v1260, %v2513
      %v2525 = vadd.f32 %v1261, %v2518
      %v2526 = vld [vmem:[%s6 + $0x11] ss:$0 sm:$0xff]
      %v2527 = vld [vmem:[%s6 + $0x12] ss:$0 sm:$0xff]
      %v2528 = vsel %vm1199, %v2523, 0.0
      %2529 = vadd.xlane.f32.xlu0 %v2528
      %v2530 = vpop.xlane.xlu0 %2529
      %v2531 = vsel %vm1199, %v2524, 0.0
      %2532 = vadd.xlane.f32.xlu0 %v2531
      %v2533 = vpop.xlane.xlu0 %2532
      %v2534 = vsel %vm1199, %v2525, 0.0
      %2535 = vadd.xlane.f32.xlu0 %v2534
      %v2536 = vpop.xlane.xlu0 %2535
      %v2537 = vmul.f32 %v2530, %v1219
      %v2538 = vmul.f32 %v2533, %v1219
      %v2539 = vmul.f32 %v2536, %v1219
      %v2540 = vsub.f32 %v2523, %v2537
      %v2541 = vsub.f32 %v2524, %v2538
      %v2542 = vsub.f32 %v2525, %v2539
      %v2543 = vmul.f32 %v2540, %v2540
      %v2544 = vmul.f32 %v2541, %v2541
      %v2545 = vmul.f32 %v2542, %v2542
      %v2546 = vsel %vm1199, %v2543, 0.0
      %2547 = vadd.xlane.f32.xlu0 %v2546
      %v2548 = vpop.xlane.xlu0 %2547
      %v2549 = vsel %vm1199, %v2544, 0.0
      %2550 = vadd.xlane.f32.xlu0 %v2549
      %v2551 = vpop.xlane.xlu0 %2550
      %v2552 = vsel %vm1199, %v2545, 0.0
      %2553 = vadd.xlane.f32.xlu0 %v2552
      %v2554 = vpop.xlane.xlu0 %2553
      %v2555 = vmul.f32 %v2548, %v1219
      %v2556 = vmul.f32 %v2551, %v1219
      %v2557 = vmul.f32 %v2554, %v1219
      %v2558 = vadd.f32 %v2555, 1e-05
      %v2559 = vadd.f32 %v2556, 1e-05
      %v2560 = vadd.f32 %v2557, 1e-05
      %v2561 = vrsqrt.pop %v2558
      %v2562 = vrsqrt.pop %v2559
      %v2563 = vrsqrt.pop %v2560
      %v2564 = vmul.f32 %v2540, %v2561
      %v2565 = vmul.f32 %v2541, %v2562
      %v2566 = vmul.f32 %v2542, %v2563
      %v2567 = vmul.f32 %v2564, %v2526
      %v2568 = vmul.f32 %v2565, %v2526
      %v2569 = vmul.f32 %v2566, %v2526
      %v2570 = vadd.f32 %v2567, %v2527
      %v2571 = vadd.f32 %v2568, %v2527
      %v2572 = vadd.f32 %v2569, %v2527
      %v2573 = vpack.c.bf16 %v2571, %v2570
      %v2574 = vpack.c.bf16 %v2572, %v2572
      %v2575 = vld [vmem:[%s12] sm:$0xff]
      %v2576 = vld [vmem:[%s12 + $0x8] sm:$0xff]
      %v2577 = vld [vmem:[%s12 + $0x10] sm:$0xff]
      %v2578 = vld [vmem:[%s12 + $0x18] sm:$0xff]
      %v2579 = vld [vmem:[%s12 + $0x20] sm:$0xff]
      %v2580 = vld [vmem:[%s12 + $0x28] sm:$0xff]
      %v2581 = vld [vmem:[%s12 + $0x30] sm:$0xff]
      %v2582 = vld [vmem:[%s12 + $0x38] sm:$0xff]
      %s2583 = scalar_lea.vmem %s6, 22
      %v2584 = vld [vmem:[%s2583] ss:$8 sm:$0x3]
      %v2586 = vlaneseq
      %v2587 = vshrl.u32 %v2586, 7
      %v2588 = vsub.s32 0, %v2587
      %v2589 = vrot.slane %v2584, %v2588
      %v2590 = vlaneseq
      %v2591 = vshrl.u32 %v2590, 7
      %v2592 = vsub.s32 1, %v2591
      %v2593 = vrot.slane %v2584, %v2592
      %v2604 = vunpack.c.l.b16 %v2575
      %v2605 = vunpack.c.h.b16 %v2575
      %v2606 = vunpack.c.l.b16 %v2576
      %v2607 = vunpack.c.h.b16 %v2576
      %v2608 = vunpack.c.l.b16 %v2577
      %v2609 = vunpack.c.h.b16 %v2577
      %v2610 = vunpack.c.l.b16 %v2578
      %v2611 = vunpack.c.h.b16 %v2578
      %v2612 = vunpack.c.l.b16 %v2579
      %v2613 = vunpack.c.h.b16 %v2579
      %v2614 = vunpack.c.l.b16 %v2580
      %v2615 = vunpack.c.h.b16 %v2580
      %v2616 = vunpack.c.l.b16 %v2581
      %v2617 = vunpack.c.h.b16 %v2581
      %v2618 = vunpack.c.l.b16 %v2582
      %v2619 = vunpack.c.h.b16 %v2582
      %v2620 = vpack.c.b16 %v2606, %v2604
      %v2621 = vpack.c.b16 %v2607, %v2605
      %v2622 = vpack.c.b16 %v2610, %v2608
      %v2623 = vpack.c.b16 %v2611, %v2609
      %v2624 = vpack.c.b16 %v2614, %v2612
      %v2625 = vpack.c.b16 %v2615, %v2613
      %v2626 = vpack.c.b16 %v2618, %v2616
      %v2627 = vpack.c.b16 %v2619, %v2617
      %v2637 = vsel %vm1199, %v2573, 0
      %v2640 = vsel %vm1199, %v2574, 0
      %2642 = vmatprep.subr.bf16.mxu0 0
      %2643 = vmatpush1.bf16.msra.mxu0 0
      %2644 = vmatprep.subr.bf16.mxu0 0
      %2645 = vmatpush1.bf16.msra.mxu0 0
      %2646 = vmatprep.subr.bf16.mxu0 0
      %2647 = vmatpush1.bf16.msra.mxu0 0
      %2648 = vmatprep.subr.bf16.mxu0 0
      %2649 = vmatpush1.bf16.msra.mxu0 0
      %2650 = vmatprep.subr.bf16.mxu0 %v2627
      %2651 = vmatpush1.bf16.msra.mxu0 %v2626
      %2652 = vmatprep.subr.bf16.mxu0 %v2625
      %2653 = vmatpush1.bf16.msra.mxu0 %v2624
      %2654 = vmatprep.subr.bf16.mxu0 %v2623
      %2655 = vmatpush1.bf16.msra.mxu0 %v2622
      %2656 = vmatprep.subr.bf16.mxu0 %v2621
      %2657 = vmatpush1.bf16.msra.mxu0 %v2620
      %2658 = vmatprep.subr.bf16.mxu0 0
      %2659 = vmatpush2.bf16.msra.mxu0 0
      %2660 = vmatprep.subr.bf16.mxu0 0
      %2661 = vmatpush2.bf16.msra.mxu0 0
      %2662 = vmatprep.subr.bf16.mxu0 0
      %2663 = vmatpush2.bf16.msra.mxu0 0
      %2664 = vmatprep.subr.bf16.mxu0 0
      %2665 = vmatpush2.bf16.msra.mxu0 0
      %2666 = vmatprep.subr.bf16.mxu0 0
      %2667 = vmatpush2.bf16.msra.mxu0 0
      %2668 = vmatprep.subr.bf16.mxu0 0
      %2669 = vmatpush2.bf16.msra.mxu0 0
      %2670 = vmatprep.subr.bf16.mxu0 0
      %2671 = vmatpush2.bf16.msra.mxu0 0
      %2672 = vmatprep.subr.bf16.mxu0 0
      %2673 = vmatpush2.bf16.msra.mxu0 0
      %2674 = vmatprep.mubr.bf16.mxu0 0
      %2675 = vmatmul.mubr.bf16.gmra.mxu0 %v2637
      %v2676 = vpop.f32.mrf.mxu0
      %v2677 = vadd.f32 %v2589, %v2676
      %v2678 = vpop.f32.mrf.mxu0
      %v2679 = vadd.f32 %v2593, %v2678
      %v2680 = vpop.f32.mrf.mxu0
      %v2681 = vadd.f32 %v2589, %v2680
      %v2682 = vpop.f32.mrf.mxu0
      %v2683 = vadd.f32 %v2593, %v2682
      %2684 = vmatprep.mubr.bf16.mxu0 0
      %2685 = vmatmul.mubr.bf16.gmra.mxu0 %v2640
      %v2686 = vpop.f32.mrf.mxu0
      %v2687 = vadd.f32 %v2589, %v2686
      %v2688 = vpop.f32.mrf.mxu0
      %v2689 = vadd.f32 %v2593, %v2688
      %v2690 = vpop.f32.mrf.mxu0
      %v2691 = vpop.f32.mrf.mxu0
      %2692 = vdwg.mxu0
      %v2693 = vmul.f32 %v2677, 0.5
      %v2694 = vmul.f32 %v2679, 0.5
      %v2695 = vmul.f32 %v2681, 0.5
      %v2696 = vmul.f32 %v2683, 0.5
      %v2697 = vmul.f32 %v2687, 0.5
      %v2698 = vmul.f32 %v2689, 0.5
      %v2699 = vmul.f32 %v2677, 0.044715
      %v2700 = vmul.f32 %v2679, 0.044715
      %v2701 = vmul.f32 %v2681, 0.044715
      %v2702 = vmul.f32 %v2683, 0.044715
      %v2703 = vmul.f32 %v2687, 0.044715
      %v2704 = vmul.f32 %v2689, 0.044715
      %v2705 = vmul.f32 %v2699, %v2677
      %v2706 = vmul.f32 %v2700, %v2679
      %v2707 = vmul.f32 %v2701, %v2681
      %v2708 = vmul.f32 %v2702, %v2683
      %v2709 = vmul.f32 %v2703, %v2687
      %v2710 = vmul.f32 %v2704, %v2689
      %v2711 = vmul.f32 %v2705, %v2677
      %v2712 = vmul.f32 %v2706, %v2679
      %v2713 = vmul.f32 %v2707, %v2681
      %v2714 = vmul.f32 %v2708, %v2683
      %v2715 = vmul.f32 %v2709, %v2687
      %v2716 = vmul.f32 %v2710, %v2689
      %v2717 = vadd.f32 %v2677, %v2711
      %v2718 = vadd.f32 %v2679, %v2712
      %v2719 = vadd.f32 %v2681, %v2713
      %v2720 = vadd.f32 %v2683, %v2714
      %v2721 = vadd.f32 %v2687, %v2715
      %v2722 = vadd.f32 %v2689, %v2716
      %v2723 = vmul.f32 %v2717, 0.7978846
      %v2724 = vmul.f32 %v2718, 0.7978846
      %v2725 = vmul.f32 %v2719, 0.7978846
      %v2726 = vmul.f32 %v2720, 0.7978846
      %v2727 = vmul.f32 %v2721, 0.7978846
      %v2728 = vmul.f32 %v2722, 0.7978846
      %v2729 = vtanh.pop %v2723
      %v2730 = vtanh.pop %v2724
      %v2731 = vtanh.pop %v2725
      %v2732 = vtanh.pop %v2726
      %v2733 = vtanh.pop %v2727
      %v2734 = vtanh.pop %v2728
      %v2735 = vadd.f32 %v2729, 1.0
      %v2736 = vadd.f32 %v2730, 1.0
      %v2737 = vadd.f32 %v2731, 1.0
      %v2738 = vadd.f32 %v2732, 1.0
      %v2739 = vadd.f32 %v2733, 1.0
      %v2740 = vadd.f32 %v2734, 1.0
      %v2741 = vmul.f32 %v2693, %v2735
      %v2742 = vmul.f32 %v2694, %v2736
      %v2743 = vmul.f32 %v2695, %v2737
      %v2744 = vmul.f32 %v2696, %v2738
      %v2745 = vmul.f32 %v2697, %v2739
      %v2746 = vmul.f32 %v2698, %v2740
      %v2747 = vpack.c.bf16 %v2743, %v2741
      %v2748 = vpack.c.bf16 %v2744, %v2742
      %v2749 = vpack.c.bf16 %v2745, %v2745
      %v2750 = vpack.c.bf16 %v2746, %v2746
      %v2751 = vld [vmem:[%s13] sm:$0xf]
      %v2752 = vld [vmem:[%s13 + $0x4] sm:$0xf]
      %v2753 = vld [vmem:[%s13 + $0x8] sm:$0xf]
      %v2754 = vld [vmem:[%s13 + $0xc] sm:$0xf]
      %v2755 = vld [vmem:[%s13 + $0x10] sm:$0xf]
      %v2756 = vld [vmem:[%s13 + $0x14] sm:$0xf]
      %v2757 = vld [vmem:[%s13 + $0x18] sm:$0xf]
      %v2758 = vld [vmem:[%s13 + $0x1c] sm:$0xf]
      %v2759 = vld [vmem:[%s13 + $0x20] sm:$0xf]
      %v2760 = vld [vmem:[%s13 + $0x24] sm:$0xf]
      %v2761 = vld [vmem:[%s13 + $0x28] sm:$0xf]
      %v2762 = vld [vmem:[%s13 + $0x2c] sm:$0xf]
      %v2763 = vld [vmem:[%s13 + $0x30] sm:$0xf]
      %v2764 = vld [vmem:[%s13 + $0x34] sm:$0xf]
      %v2765 = vld [vmem:[%s13 + $0x38] sm:$0xf]
      %v2766 = vld [vmem:[%s13 + $0x3c] sm:$0xf]
      %v2767 = vld [vmem:[%s13 + $0x40] sm:$0xf]
      %v2768 = vld [vmem:[%s13 + $0x44] sm:$0xf]
      %v2769 = vld [vmem:[%s13 + $0x48] sm:$0xf]
      %v2770 = vld [vmem:[%s13 + $0x4c] sm:$0xf]
      %v2771 = vld [vmem:[%s13 + $0x50] sm:$0xf]
      %v2772 = vld [vmem:[%s13 + $0x54] sm:$0xf]
      %v2773 = vld [vmem:[%s13 + $0x58] sm:$0xf]
      %v2774 = vld [vmem:[%s13 + $0x5c] sm:$0xf]
      %v2775 = vld [vmem:[%s13 + $0x60] sm:$0xf]
      %v2776 = vld [vmem:[%s13 + $0x64] sm:$0xf]
      %v2777 = vld [vmem:[%s13 + $0x68] sm:$0xf]
      %v2778 = vld [vmem:[%s13 + $0x6c] sm:$0xf]
      %v2779 = vld [vmem:[%s13 + $0x70] sm:$0xf]
      %v2780 = vld [vmem:[%s13 + $0x74] sm:$0xf]
      %v2781 = vld [vmem:[%s13 + $0x78] sm:$0xf]
      %v2782 = vld [vmem:[%s13 + $0x7c] sm:$0xf]
      %v2783 = vld [vmem:[%s6 + $0x14] ss:$0 sm:$0xff]
      %v2816 = vunpack.c.l.b16 %v2751
      %v2817 = vunpack.c.l.b16 %v2752
      %v2818 = vunpack.c.l.b16 %v2753
      %v2819 = vunpack.c.l.b16 %v2754
      %v2820 = vunpack.c.l.b16 %v2755
      %v2821 = vunpack.c.l.b16 %v2756
      %v2822 = vunpack.c.l.b16 %v2757
      %v2823 = vunpack.c.l.b16 %v2758
      %v2824 = vunpack.c.l.b16 %v2759
      %v2825 = vunpack.c.l.b16 %v2760
      %v2826 = vunpack.c.l.b16 %v2761
      %v2827 = vunpack.c.l.b16 %v2762
      %v2828 = vunpack.c.l.b16 %v2763
      %v2829 = vunpack.c.l.b16 %v2764
      %v2830 = vunpack.c.l.b16 %v2765
      %v2831 = vunpack.c.l.b16 %v2766
      %v2832 = vunpack.c.l.b16 %v2767
      %v2833 = vunpack.c.l.b16 %v2768
      %v2834 = vunpack.c.l.b16 %v2769
      %v2835 = vunpack.c.l.b16 %v2770
      %v2836 = vunpack.c.l.b16 %v2771
      %v2837 = vunpack.c.l.b16 %v2772
      %v2838 = vunpack.c.l.b16 %v2773
      %v2839 = vunpack.c.l.b16 %v2774
      %v2840 = vunpack.c.l.b16 %v2775
      %v2841 = vunpack.c.l.b16 %v2776
      %v2842 = vunpack.c.l.b16 %v2777
      %v2843 = vunpack.c.l.b16 %v2778
      %v2844 = vunpack.c.l.b16 %v2779
      %v2845 = vunpack.c.l.b16 %v2780
      %v2846 = vunpack.c.l.b16 %v2781
      %v2847 = vunpack.c.l.b16 %v2782
      %v2848 = vpack.c.b16 %v2817, %v2816
      %v2849 = vpack.c.b16 %v2819, %v2818
      %v2850 = vpack.c.b16 %v2821, %v2820
      %v2851 = vpack.c.b16 %v2823, %v2822
      %v2852 = vpack.c.b16 %v2825, %v2824
      %v2853 = vpack.c.b16 %v2827, %v2826
      %v2854 = vpack.c.b16 %v2829, %v2828
      %v2855 = vpack.c.b16 %v2831, %v2830
      %v2856 = vpack.c.b16 %v2833, %v2832
      %v2857 = vpack.c.b16 %v2835, %v2834
      %v2858 = vpack.c.b16 %v2837, %v2836
      %v2859 = vpack.c.b16 %v2839, %v2838
      %v2860 = vpack.c.b16 %v2841, %v2840
      %v2861 = vpack.c.b16 %v2843, %v2842
      %v2862 = vpack.c.b16 %v2845, %v2844
      %v2863 = vpack.c.b16 %v2847, %v2846
      %2880 = vmatprep.subr.bf16.mxu0 0
      %2881 = vmatpush1.bf16.msra.mxu0 %v2855
      %2882 = vmatprep.subr.bf16.mxu0 0
      %2883 = vmatpush1.bf16.msra.mxu0 %v2854
      %2884 = vmatprep.subr.bf16.mxu0 0
      %2885 = vmatpush1.bf16.msra.mxu0 %v2853
      %2886 = vmatprep.subr.bf16.mxu0 0
      %2887 = vmatpush1.bf16.msra.mxu0 %v2852
      %2888 = vmatprep.subr.bf16.mxu0 0
      %2889 = vmatpush1.bf16.msra.mxu0 %v2851
      %2890 = vmatprep.subr.bf16.mxu0 0
      %2891 = vmatpush1.bf16.msra.mxu0 %v2850
      %2892 = vmatprep.subr.bf16.mxu0 0
      %2893 = vmatpush1.bf16.msra.mxu0 %v2849
      %2894 = vmatprep.subr.bf16.mxu0 0
      %2895 = vmatpush1.bf16.msra.mxu0 %v2848
      %2896 = vmatprep.subr.bf16.mxu0 0
      %2897 = vmatpush2.bf16.msra.mxu0 %v2863
      %2898 = vmatprep.subr.bf16.mxu0 0
      %2899 = vmatpush2.bf16.msra.mxu0 %v2862
      %2900 = vmatprep.subr.bf16.mxu0 0
      %2901 = vmatpush2.bf16.msra.mxu0 %v2861
      %2902 = vmatprep.subr.bf16.mxu0 0
      %2903 = vmatpush2.bf16.msra.mxu0 %v2860
      %2904 = vmatprep.subr.bf16.mxu0 0
      %2905 = vmatpush2.bf16.msra.mxu0 %v2859
      %2906 = vmatprep.subr.bf16.mxu0 0
      %2907 = vmatpush2.bf16.msra.mxu0 %v2858
      %2908 = vmatprep.subr.bf16.mxu0 0
      %2909 = vmatpush2.bf16.msra.mxu0 %v2857
      %2910 = vmatprep.subr.bf16.mxu0 0
      %2911 = vmatpush2.bf16.msra.mxu0 %v2856
      %2912 = vmatprep.mubr.bf16.mxu0 %v2748
      %2913 = vmatmul.mubr.bf16.gmra.mxu0 %v2747
      %v2914 = vpop.f32.mrf.mxu0
      %v2915 = vadd.f32 %v2783, %v2914
      %v2916 = vpop.f32.mrf.mxu0
      %v2917 = vpop.f32.mrf.mxu0
      %v2918 = vadd.f32 %v2783, %v2917
      %v2919 = vpop.f32.mrf.mxu0
      %2920 = vmatprep.mubr.bf16.mxu0 %v2750
      %2921 = vmatmul.mubr.bf16.gmra.mxu0 %v2749
      %v2922 = vpop.f32.mrf.mxu0
      %v2923 = vadd.f32 %v2783, %v2922
      %v2924 = vpop.f32.mrf.mxu0
      %v2925 = vpop.f32.mrf.mxu0
      %v2926 = vpop.f32.mrf.mxu0
      %2927 = vdwg.mxu0
      %v2928 = vadd.f32 %v2523, %v2915
      %v2929 = vadd.f32 %v2524, %v2918
      %v2930 = vadd.f32 %v2525, %v2923
      %v2931 = vld [vmem:[%s6 + $0x17] ss:$0 sm:$0xff]
      %v2932 = vld [vmem:[%s6 + $0x20] ss:$0 sm:$0xff]
      %v2933 = vsel %vm1199, %v2928, 0.0
      %2934 = vadd.xlane.f32.xlu0 %v2933
      %v2935 = vpop.xlane.xlu0 %2934
      %v2936 = vsel %vm1199, %v2929, 0.0
      %2937 = vadd.xlane.f32.xlu0 %v2936
      %v2938 = vpop.xlane.xlu0 %2937
      %v2939 = vsel %vm1199, %v2930, 0.0
      %2940 = vadd.xlane.f32.xlu0 %v2939
      %v2941 = vpop.xlane.xlu0 %2940
      %v2942 = vmul.f32 %v2935, %v1219
      %v2943 = vmul.f32 %v2938, %v1219
      %v2944 = vmul.f32 %v2941, %v1219
      %v2945 = vsub.f32 %v2928, %v2942
      %v2946 = vsub.f32 %v2929, %v2943
      %v2947 = vsub.f32 %v2930, %v2944
      %v2948 = vmul.f32 %v2945, %v2945
      %v2949 = vmul.f32 %v2946, %v2946
      %v2950 = vmul.f32 %v2947, %v2947
      %v2951 = vsel %vm1199, %v2948, 0.0
      %2952 = vadd.xlane.f32.xlu0 %v2951
      %v2953 = vpop.xlane.xlu0 %2952
      %v2954 = vsel %vm1199, %v2949, 0.0
      %2955 = vadd.xlane.f32.xlu0 %v2954
      %v2956 = vpop.xlane.xlu0 %2955
      %v2957 = vsel %vm1199, %v2950, 0.0
      %2958 = vadd.xlane.f32.xlu0 %v2957
      %v2959 = vpop.xlane.xlu0 %2958
      %v2960 = vmul.f32 %v2953, %v1219
      %v2961 = vmul.f32 %v2956, %v1219
      %v2962 = vmul.f32 %v2959, %v1219
      %v2963 = vadd.f32 %v2960, 1e-05
      %v2964 = vadd.f32 %v2961, 1e-05
      %v2965 = vadd.f32 %v2962, 1e-05
      %v2966 = vrsqrt.pop %v2963
      %v2967 = vrsqrt.pop %v2964
      %v2968 = vrsqrt.pop %v2965
      %v2969 = vmul.f32 %v2945, %v2966
      %v2970 = vmul.f32 %v2946, %v2967
      %v2971 = vmul.f32 %v2947, %v2968
      %v2972 = vmul.f32 %v2969, %v2931
      %v2973 = vmul.f32 %v2970, %v2931
      %v2974 = vmul.f32 %v2971, %v2931
      %v2975 = vadd.f32 %v2972, %v2932
      %v2976 = vadd.f32 %v2973, %v2932
      %v2977 = vadd.f32 %v2974, %v2932
      %v2978 = vpack.c.bf16 %v2976, %v2975
      %v2979 = vpack.c.bf16 %v2977, %v2977
      %s2980 = scalar_lea.vmem %s10, 64
      %v2981 = vld [vmem:[%s2980] sm:$0xff]
      %v2982 = vld [vmem:[%s2980 + $0x8] sm:$0xff]
      %v2983 = vld [vmem:[%s2980 + $0x10] sm:$0xff]
      %v2984 = vld [vmem:[%s2980 + $0x18] sm:$0xff]
      %v2985 = vld [vmem:[%s2980 + $0x20] sm:$0xff]
      %v2986 = vld [vmem:[%s2980 + $0x28] sm:$0xff]
      %v2987 = vld [vmem:[%s2980 + $0x30] sm:$0xff]
      %v2988 = vld [vmem:[%s2980 + $0x38] sm:$0xff]
      %s2989 = scalar_lea.vmem %s6, 37
      %v2990 = vld [vmem:[%s2989] ss:$8 sm:$0x3]
      %v2992 = vlaneseq
      %v2993 = vshrl.u32 %v2992, 7
      %v2994 = vsub.s32 0, %v2993
      %v2995 = vrot.slane %v2990, %v2994
      %v2996 = vlaneseq
      %v2997 = vshrl.u32 %v2996, 7
      %v2998 = vsub.s32 1, %v2997
      %v2999 = vrot.slane %v2990, %v2998
      %v3010 = vunpack.c.l.b16 %v2981
      %v3011 = vunpack.c.h.b16 %v2981
      %v3012 = vunpack.c.l.b16 %v2982
      %v3013 = vunpack.c.h.b16 %v2982
      %v3014 = vunpack.c.l.b16 %v2983
      %v3015 = vunpack.c.h.b16 %v2983
      %v3016 = vunpack.c.l.b16 %v2984
      %v3017 = vunpack.c.h.b16 %v2984
      %v3018 = vunpack.c.l.b16 %v2985
      %v3019 = vunpack.c.h.b16 %v2985
      %v3020 = vunpack.c.l.b16 %v2986
      %v3021 = vunpack.c.h.b16 %v2986
      %v3022 = vunpack.c.l.b16 %v2987
      %v3023 = vunpack.c.h.b16 %v2987
      %v3024 = vunpack.c.l.b16 %v2988
      %v3025 = vunpack.c.h.b16 %v2988
      %v3026 = vpack.c.b16 %v3012, %v3010
      %v3027 = vpack.c.b16 %v3013, %v3011
      %v3028 = vpack.c.b16 %v3016, %v3014
      %v3029 = vpack.c.b16 %v3017, %v3015
      %v3030 = vpack.c.b16 %v3020, %v3018
      %v3031 = vpack.c.b16 %v3021, %v3019
      %v3032 = vpack.c.b16 %v3024, %v3022
      %v3033 = vpack.c.b16 %v3025, %v3023
      %v3043 = vsel %vm1199, %v2978, 0
      %v3046 = vsel %vm1199, %v2979, 0
      %3048 = vmatprep.subr.bf16.mxu0 0
      %3049 = vmatpush1.bf16.msra.mxu0 0
      %3050 = vmatprep.subr.bf16.mxu0 0
      %3051 = vmatpush1.bf16.msra.mxu0 0
      %3052 = vmatprep.subr.bf16.mxu0 0
      %3053 = vmatpush1.bf16.msra.mxu0 0
      %3054 = vmatprep.subr.bf16.mxu0 0
      %3055 = vmatpush1.bf16.msra.mxu0 0
      %3056 = vmatprep.subr.bf16.mxu0 %v3033
      %3057 = vmatpush1.bf16.msra.mxu0 %v3032
      %3058 = vmatprep.subr.bf16.mxu0 %v3031
      %3059 = vmatpush1.bf16.msra.mxu0 %v3030
      %3060 = vmatprep.subr.bf16.mxu0 %v3029
      %3061 = vmatpush1.bf16.msra.mxu0 %v3028
      %3062 = vmatprep.subr.bf16.mxu0 %v3027
      %3063 = vmatpush1.bf16.msra.mxu0 %v3026
      %3064 = vmatprep.subr.bf16.mxu0 0
      %3065 = vmatpush2.bf16.msra.mxu0 0
      %3066 = vmatprep.subr.bf16.mxu0 0
      %3067 = vmatpush2.bf16.msra.mxu0 0
      %3068 = vmatprep.subr.bf16.mxu0 0
      %3069 = vmatpush2.bf16.msra.mxu0 0
      %3070 = vmatprep.subr.bf16.mxu0 0
      %3071 = vmatpush2.bf16.msra.mxu0 0
      %3072 = vmatprep.subr.bf16.mxu0 0
      %3073 = vmatpush2.bf16.msra.mxu0 0
      %3074 = vmatprep.subr.bf16.mxu0 0
      %3075 = vmatpush2.bf16.msra.mxu0 0
      %3076 = vmatprep.subr.bf16.mxu0 0
      %3077 = vmatpush2.bf16.msra.mxu0 0
      %3078 = vmatprep.subr.bf16.mxu0 0
      %3079 = vmatpush2.bf16.msra.mxu0 0
      %3080 = vmatprep.mubr.bf16.mxu0 0
      %3081 = vmatmul.mubr.bf16.gmra.mxu0 %v3043
      %v3082 = vpop.f32.mrf.mxu0
      %v3083 = vadd.f32 %v2995, %v3082
      %v3084 = vpop.f32.mrf.mxu0
      %v3085 = vadd.f32 %v2999, %v3084
      %v3086 = vpop.f32.mrf.mxu0
      %v3087 = vadd.f32 %v2995, %v3086
      %v3088 = vpop.f32.mrf.mxu0
      %v3089 = vadd.f32 %v2999, %v3088
      %3090 = vmatprep.mubr.bf16.mxu0 0
      %3091 = vmatmul.mubr.bf16.gmra.mxu0 %v3046
      %v3092 = vpop.f32.mrf.mxu0
      %v3093 = vadd.f32 %v2995, %v3092
      %v3094 = vpop.f32.mrf.mxu0
      %v3095 = vadd.f32 %v2999, %v3094
      %v3096 = vpop.f32.mrf.mxu0
      %v3097 = vpop.f32.mrf.mxu0
      %3098 = vdwg.mxu0
      %3102 = vrot.lane.b32.xlu0 %v3083, 64
      %v3103 = vpop.permute.xlu0 %3102
      %3104 = vrot.lane.b32.xlu0 %v3087, 64
      %v3105 = vpop.permute.xlu0 %3104
      %3106 = vrot.lane.b32.xlu0 %v3093, 64
      %v3107 = vpop.permute.xlu0 %3106
      %v3108 = vsel %vm981, %v3083, 0
      %v3110 = vsel %vm981, %v3087, 0
      %v3112 = vsel %vm981, %v3093, 0
      %v3114 = vsel %vm981, %v3103, 0
      %v3116 = vsel %vm981, %v3105, 0
      %v3118 = vsel %vm981, %v3107, 0
      %3120 = vmatprep.subr.mxu0 0.0
      %3121 = vmatpush1.xpose.msra.mxu0 0.0
      %3122 = vmatprep.subr.mxu0 0.0
      %3123 = vmatpush1.xpose.msra.mxu0 0.0
      %3124 = vmatprep.subr.mxu0 0.0
      %3125 = vmatpush1.xpose.msra.mxu0 0.0
      %3126 = vmatprep.subr.mxu0 0.0
      %3127 = vmatpush1.xpose.msra.mxu0 0.0
      %3128 = vmatprep.subr.mxu0 0.0
      %3129 = vmatpush1.xpose.msra.mxu0 0.0
      %3130 = vmatprep.subr.mxu0 0.0
      %3131 = vmatpush1.xpose.msra.mxu0 0.0
      %3132 = vmatprep.subr.mxu0 0.0
      %3133 = vmatpush1.xpose.msra.mxu0 0.0
      %3134 = vmatprep.subr.mxu0 0.0
      %3135 = vmatpush1.xpose.msra.mxu0 0.0
      %3136 = vmatprep.subr.mxu0 0.0
      %3137 = vmatpush1.xpose.msra.mxu0 0.0
      %3138 = vmatprep.subr.mxu0 0.0
      %3139 = vmatpush1.xpose.msra.mxu0 0.0
      %3140 = vmatprep.subr.mxu0 0.0
      %3141 = vmatpush1.xpose.msra.mxu0 0.0
      %3142 = vmatprep.subr.mxu0 0.0
      %3143 = vmatpush1.xpose.msra.mxu0 0.0
      %3144 = vmatprep.subr.mxu0 0.0
      %3145 = vmatpush1.xpose.msra.mxu0 0.0
      %3146 = vmatprep.subr.mxu0 0.0
      %3147 = vmatpush1.xpose.msra.mxu0 %v3118
      %3148 = vmatprep.subr.mxu0 0.0
      %3149 = vmatpush1.xpose.msra.mxu0 %v3116
      %3150 = vmatprep.subr.mxu0 0.0
      %3151 = vmatpush1.xpose.msra.mxu0 %v3114
      %3152 = vmatprep.subr.mxu0 0.0
      %3153 = vmatpush2.xpose.msra.mxu0 0.0
      %3154 = vmatprep.subr.mxu0 0.0
      %3155 = vmatpush2.xpose.msra.mxu0 0.0
      %3156 = vmatprep.subr.mxu0 0.0
      %3157 = vmatpush2.xpose.msra.mxu0 0.0
      %3158 = vmatprep.subr.mxu0 0.0
      %3159 = vmatpush2.xpose.msra.mxu0 0.0
      %3160 = vmatprep.subr.mxu0 0.0
      %3161 = vmatpush2.xpose.msra.mxu0 0.0
      %3162 = vmatprep.subr.mxu0 0.0
      %3163 = vmatpush2.xpose.msra.mxu0 0.0
      %3164 = vmatprep.subr.mxu0 0.0
      %3165 = vmatpush2.xpose.msra.mxu0 0.0
      %3166 = vmatprep.subr.mxu0 0.0
      %3167 = vmatpush2.xpose.msra.mxu0 0.0
      %3168 = vmatprep.subr.mxu0 0.0
      %3169 = vmatpush2.xpose.msra.mxu0 0.0
      %3170 = vmatprep.subr.mxu0 0.0
      %3171 = vmatpush2.xpose.msra.mxu0 0.0
      %3172 = vmatprep.subr.mxu0 0.0
      %3173 = vmatpush2.xpose.msra.mxu0 0.0
      %3174 = vmatprep.subr.mxu0 0.0
      %3175 = vmatpush2.xpose.msra.mxu0 0.0
      %3176 = vmatprep.subr.mxu0 0.0
      %3177 = vmatpush2.xpose.msra.mxu0 0.0
      %3178 = vmatprep.subr.mxu0 0.0
      %3179 = vmatpush2.xpose.msra.mxu0 0.0
      %3180 = vmatprep.subr.mxu0 0.0
      %3181 = vmatpush2.xpose.msra.mxu0 0.0
      %3182 = vmatprep.subr.mxu0 0.0
      %3183 = vmatpush2.xpose.msra.mxu0 0.0
      %3184 = vmatprep.mubr.f32.mxu0 0.0
      %3185 = vmatmul.mubr.f32.gmra.mxu0 %v3108
      %v3186 = vpop.f32.mrf.mxu0
      %v3187 = vadd.f32 %v1278, %v3186
      %v3188 = vpop.f32.mrf.mxu0
      %3189 = vmatprep.mubr.f32.mxu0 0.0
      %3190 = vmatmul.mubr.f32.gmra.mxu0 %v3110
      %v3191 = vpop.f32.mrf.mxu0
      %v3192 = vadd.f32 %v1279, %v3191
      %v3193 = vpop.f32.mrf.mxu0
      %3194 = vmatprep.mubr.f32.mxu0 0.0
      %3195 = vmatmul.mubr.f32.gmra.mxu0 %v3112
      %v3196 = vpop.f32.mrf.mxu0
      %v3197 = vadd.f32 %v1280, %v3196
      %v3198 = vpop.f32.mrf.mxu0
      %3199 = vdwg.mxu0
      %v3200 = vsel %vm1549, %v3187, -inf
      %3201 = vmax.xlane.f32.xlu0 %v3200
      %v3202 = vpop.xlane.xlu0 %3201
      %v3203 = vsel %vm1549, %v3192, -inf
      %3204 = vmax.xlane.f32.xlu0 %v3203
      %v3205 = vpop.xlane.xlu0 %3204
      %v3206 = vsel %vm1549, %v3197, -inf
      %3207 = vmax.xlane.f32.xlu0 %v3206
      %v3208 = vpop.xlane.xlu0 %3207
      %v3209 = vsub.f32 %v3187, %v3202
      %v3210 = vsub.f32 %v3192, %v3205
      %v3211 = vsub.f32 %v3197, %v3208
      %v3212 = vmul.f32 %v3209, 1.442695
      %v3213 = vpow.pop %v3212
      %v3214 = vmul.f32 %v3210, 1.442695
      %v3215 = vpow.pop %v3214
      %v3216 = vmul.f32 %v3211, 1.442695
      %v3217 = vpow.pop %v3216
      %v3218 = vsel %vm1549, %v3213, 0.0
      %3219 = vadd.xlane.f32.xlu0 %v3218
      %v3220 = vpop.xlane.xlu0 %3219
      %v3221 = vsel %vm1549, %v3215, 0.0
      %3222 = vadd.xlane.f32.xlu0 %v3221
      %v3223 = vpop.xlane.xlu0 %3222
      %v3224 = vsel %vm1549, %v3217, 0.0
      %3225 = vadd.xlane.f32.xlu0 %v3224
      %v3226 = vpop.xlane.xlu0 %3225
      %v3227 = vrcp.pop %v3220
      %v3228 = vrcp.pop %v3223
      %v3229 = vrcp.pop %v3226
      %v3230 = vmul.f32 %v3213, %v3227
      %v3231 = vmul.f32 %v3215, %v3228
      %v3232 = vmul.f32 %v3217, %v3229
      %v3234 = vsel %vm1549, %v3230, 0
      %v3237 = vsel %vm1549, %v3231, 0
      %v3240 = vsel %vm1549, %v3232, 0
      %3242 = vmatprep.subr.mxu0 0.0
      %3243 = vmatpush1.msra.mxu0 0.0
      %3244 = vmatprep.subr.mxu0 0.0
      %3245 = vmatpush1.msra.mxu0 0.0
      %3246 = vmatprep.subr.mxu0 0.0
      %3247 = vmatpush1.msra.mxu0 0.0
      %3248 = vmatprep.subr.mxu0 0.0
      %3249 = vmatpush1.msra.mxu0 0.0
      %3250 = vmatprep.subr.mxu0 0.0
      %3251 = vmatpush1.msra.mxu0 0.0
      %3252 = vmatprep.subr.mxu0 0.0
      %3253 = vmatpush1.msra.mxu0 0.0
      %3254 = vmatprep.subr.mxu0 0.0
      %3255 = vmatpush1.msra.mxu0 0.0
      %3256 = vmatprep.subr.mxu0 0.0
      %3257 = vmatpush1.msra.mxu0 0.0
      %3258 = vmatprep.subr.mxu0 0.0
      %3259 = vmatpush1.msra.mxu0 0.0
      %3260 = vmatprep.subr.mxu0 0.0
      %3261 = vmatpush1.msra.mxu0 0.0
      %3262 = vmatprep.subr.mxu0 0.0
      %3263 = vmatpush1.msra.mxu0 0.0
      %3264 = vmatprep.subr.mxu0 0.0
      %3265 = vmatpush1.msra.mxu0 0.0
      %3266 = vmatprep.subr.mxu0 0.0
      %3267 = vmatpush1.msra.mxu0 0.0
      %3268 = vmatprep.subr.mxu0 0.0
      %3269 = vmatpush1.msra.mxu0 %v3095
      %3270 = vmatprep.subr.mxu0 0.0
      %3271 = vmatpush1.msra.mxu0 %v3089
      %3272 = vmatprep.subr.mxu0 0.0
      %3273 = vmatpush1.msra.mxu0 %v3085
      %3274 = vmatprep.subr.mxu0 0.0
      %3275 = vmatpush2.msra.mxu0 0.0
      %3276 = vmatprep.subr.mxu0 0.0
      %3277 = vmatpush2.msra.mxu0 0.0
      %3278 = vmatprep.subr.mxu0 0.0
      %3279 = vmatpush2.msra.mxu0 0.0
      %3280 = vmatprep.subr.mxu0 0.0
      %3281 = vmatpush2.msra.mxu0 0.0
      %3282 = vmatprep.subr.mxu0 0.0
      %3283 = vmatpush2.msra.mxu0 0.0
      %3284 = vmatprep.subr.mxu0 0.0
      %3285 = vmatpush2.msra.mxu0 0.0
      %3286 = vmatprep.subr.mxu0 0.0
      %3287 = vmatpush2.msra.mxu0 0.0
      %3288 = vmatprep.subr.mxu0 0.0
      %3289 = vmatpush2.msra.mxu0 0.0
      %3290 = vmatprep.subr.mxu0 0.0
      %3291 = vmatpush2.msra.mxu0 0.0
      %3292 = vmatprep.subr.mxu0 0.0
      %3293 = vmatpush2.msra.mxu0 0.0
      %3294 = vmatprep.subr.mxu0 0.0
      %3295 = vmatpush2.msra.mxu0 0.0
      %3296 = vmatprep.subr.mxu0 0.0
      %3297 = vmatpush2.msra.mxu0 0.0
      %3298 = vmatprep.subr.mxu0 0.0
      %3299 = vmatpush2.msra.mxu0 0.0
      %3300 = vmatprep.subr.mxu0 0.0
      %3301 = vmatpush2.msra.mxu0 0.0
      %3302 = vmatprep.subr.mxu0 0.0
      %3303 = vmatpush2.msra.mxu0 0.0
      %3304 = vmatprep.subr.mxu0 0.0
      %3305 = vmatpush2.msra.mxu0 0.0
      %3306 = vmatprep.mubr.f32.mxu0 0.0
      %3307 = vmatmul.mubr.f32.gmra.mxu0 %v3234
      %v3308 = vpop.f32.mrf.mxu0
      %v3309 = vadd.f32 0.0, %v3308
      %v3310 = vpop.f32.mrf.mxu0
      %3311 = vmatprep.mubr.f32.mxu0 0.0
      %3312 = vmatmul.mubr.f32.gmra.mxu0 %v3237
      %v3313 = vpop.f32.mrf.mxu0
      %v3314 = vadd.f32 0.0, %v3313
      %v3315 = vpop.f32.mrf.mxu0
      %3316 = vmatprep.mubr.f32.mxu0 0.0
      %3317 = vmatmul.mubr.f32.gmra.mxu0 %v3240
      %v3318 = vpop.f32.mrf.mxu0
      %v3319 = vadd.f32 0.0, %v3318
      %v3320 = vpop.f32.mrf.mxu0
      %3321 = vdwg.mxu0
      %3322 = vst.msk [vmem:[#allocation3] sm:$0xff] %vm981, %v3309
      %3323 = vst.msk [vmem:[#allocation3 + $0x8] sm:$0xff] %vm981, %v3314
      %3324 = vst.msk [vmem:[#allocation3 + $0x10] sm:$0xff] %vm981, %v3319
      %3325 = vrot.lane.b32.xlu0 %v3083, 112
      %v3326 = vpop.permute.xlu0 %3325
      %3327 = vrot.lane.b32.xlu0 %v3087, 112
      %v3328 = vpop.permute.xlu0 %3327
      %3329 = vrot.lane.b32.xlu0 %v3093, 112
      %v3330 = vpop.permute.xlu0 %3329
      %3331 = vrot.lane.b32.xlu0 %v3083, 48
      %v3332 = vpop.permute.xlu0 %3331
      %3333 = vrot.lane.b32.xlu0 %v3087, 48
      %v3334 = vpop.permute.xlu0 %3333
      %3335 = vrot.lane.b32.xlu0 %v3093, 48
      %v3336 = vpop.permute.xlu0 %3335
      %v3337 = vsel %vm981, %v3326, 0
      %v3339 = vsel %vm981, %v3328, 0
      %v3341 = vsel %vm981, %v3330, 0
      %v3343 = vsel %vm981, %v3332, 0
      %v3345 = vsel %vm981, %v3334, 0
      %v3347 = vsel %vm981, %v3336, 0
      %3349 = vmatprep.subr.mxu0 0.0
      %3350 = vmatpush1.xpose.msra.mxu0 0.0
      %3351 = vmatprep.subr.mxu0 0.0
      %3352 = vmatpush1.xpose.msra.mxu0 0.0
      %3353 = vmatprep.subr.mxu0 0.0
      %3354 = vmatpush1.xpose.msra.mxu0 0.0
      %3355 = vmatprep.subr.mxu0 0.0
      %3356 = vmatpush1.xpose.msra.mxu0 0.0
      %3357 = vmatprep.subr.mxu0 0.0
      %3358 = vmatpush1.xpose.msra.mxu0 0.0
      %3359 = vmatprep.subr.mxu0 0.0
      %3360 = vmatpush1.xpose.msra.mxu0 0.0
      %3361 = vmatprep.subr.mxu0 0.0
      %3362 = vmatpush1.xpose.msra.mxu0 0.0
      %3363 = vmatprep.subr.mxu0 0.0
      %3364 = vmatpush1.xpose.msra.mxu0 0.0
      %3365 = vmatprep.subr.mxu0 0.0
      %3366 = vmatpush1.xpose.msra.mxu0 0.0
      %3367 = vmatprep.subr.mxu0 0.0
      %3368 = vmatpush1.xpose.msra.mxu0 0.0
      %3369 = vmatprep.subr.mxu0 0.0
      %3370 = vmatpush1.xpose.msra.mxu0 0.0
      %3371 = vmatprep.subr.mxu0 0.0
      %3372 = vmatpush1.xpose.msra.mxu0 0.0
      %3373 = vmatprep.subr.mxu0 0.0
      %3374 = vmatpush1.xpose.msra.mxu0 0.0
      %3375 = vmatprep.subr.mxu0 0.0
      %3376 = vmatpush1.xpose.msra.mxu0 %v3347
      %3377 = vmatprep.subr.mxu0 0.0
      %3378 = vmatpush1.xpose.msra.mxu0 %v3345
      %3379 = vmatprep.subr.mxu0 0.0
      %3380 = vmatpush1.xpose.msra.mxu0 %v3343
      %3381 = vmatprep.subr.mxu0 0.0
      %3382 = vmatpush2.xpose.msra.mxu0 0.0
      %3383 = vmatprep.subr.mxu0 0.0
      %3384 = vmatpush2.xpose.msra.mxu0 0.0
      %3385 = vmatprep.subr.mxu0 0.0
      %3386 = vmatpush2.xpose.msra.mxu0 0.0
      %3387 = vmatprep.subr.mxu0 0.0
      %3388 = vmatpush2.xpose.msra.mxu0 0.0
      %3389 = vmatprep.subr.mxu0 0.0
      %3390 = vmatpush2.xpose.msra.mxu0 0.0
      %3391 = vmatprep.subr.mxu0 0.0
      %3392 = vmatpush2.xpose.msra.mxu0 0.0
      %3393 = vmatprep.subr.mxu0 0.0
      %3394 = vmatpush2.xpose.msra.mxu0 0.0
      %3395 = vmatprep.subr.mxu0 0.0
      %3396 = vmatpush2.xpose.msra.mxu0 0.0
      %3397 = vmatprep.subr.mxu0 0.0
      %3398 = vmatpush2.xpose.msra.mxu0 0.0
      %3399 = vmatprep.subr.mxu0 0.0
      %3400 = vmatpush2.xpose.msra.mxu0 0.0
      %3401 = vmatprep.subr.mxu0 0.0
      %3402 = vmatpush2.xpose.msra.mxu0 0.0
      %3403 = vmatprep.subr.mxu0 0.0
      %3404 = vmatpush2.xpose.msra.mxu0 0.0
      %3405 = vmatprep.subr.mxu0 0.0
      %3406 = vmatpush2.xpose.msra.mxu0 0.0
      %3407 = vmatprep.subr.mxu0 0.0
      %3408 = vmatpush2.xpose.msra.mxu0 0.0
      %3409 = vmatprep.subr.mxu0 0.0
      %3410 = vmatpush2.xpose.msra.mxu0 0.0
      %3411 = vmatprep.subr.mxu0 0.0
      %3412 = vmatpush2.xpose.msra.mxu0 0.0
      %3413 = vmatprep.mubr.f32.mxu0 0.0
      %3414 = vmatmul.mubr.f32.gmra.mxu0 %v3337
      %v3415 = vpop.f32.mrf.mxu0
      %v3416 = vadd.f32 %v1278, %v3415
      %v3417 = vpop.f32.mrf.mxu0
      %3418 = vmatprep.mubr.f32.mxu0 0.0
      %3419 = vmatmul.mubr.f32.gmra.mxu0 %v3339
      %v3420 = vpop.f32.mrf.mxu0
      %v3421 = vadd.f32 %v1279, %v3420
      %v3422 = vpop.f32.mrf.mxu0
      %3423 = vmatprep.mubr.f32.mxu0 0.0
      %3424 = vmatmul.mubr.f32.gmra.mxu0 %v3341
      %v3425 = vpop.f32.mrf.mxu0
      %v3426 = vadd.f32 %v1280, %v3425
      %v3427 = vpop.f32.mrf.mxu0
      %3428 = vdwg.mxu0
      %v3429 = vsel %vm1549, %v3416, -inf
      %3430 = vmax.xlane.f32.xlu0 %v3429
      %v3431 = vpop.xlane.xlu0 %3430
      %v3432 = vsel %vm1549, %v3421, -inf
      %3433 = vmax.xlane.f32.xlu0 %v3432
      %v3434 = vpop.xlane.xlu0 %3433
      %v3435 = vsel %vm1549, %v3426, -inf
      %3436 = vmax.xlane.f32.xlu0 %v3435
      %v3437 = vpop.xlane.xlu0 %3436
      %v3438 = vsub.f32 %v3416, %v3431
      %v3439 = vsub.f32 %v3421, %v3434
      %v3440 = vsub.f32 %v3426, %v3437
      %v3441 = vmul.f32 %v3438, 1.442695
      %v3442 = vpow.pop %v3441
      %v3443 = vmul.f32 %v3439, 1.442695
      %v3444 = vpow.pop %v3443
      %v3445 = vmul.f32 %v3440, 1.442695
      %v3446 = vpow.pop %v3445
      %v3447 = vsel %vm1549, %v3442, 0.0
      %3448 = vadd.xlane.f32.xlu0 %v3447
      %v3449 = vpop.xlane.xlu0 %3448
      %v3450 = vsel %vm1549, %v3444, 0.0
      %3451 = vadd.xlane.f32.xlu0 %v3450
      %v3452 = vpop.xlane.xlu0 %3451
      %v3453 = vsel %vm1549, %v3446, 0.0
      %3454 = vadd.xlane.f32.xlu0 %v3453
      %v3455 = vpop.xlane.xlu0 %3454
      %v3456 = vrcp.pop %v3449
      %v3457 = vrcp.pop %v3452
      %v3458 = vrcp.pop %v3455
      %v3459 = vmul.f32 %v3442, %v3456
      %v3460 = vmul.f32 %v3444, %v3457
      %v3461 = vmul.f32 %v3446, %v3458
      %3465 = vrot.lane.b32.xlu0 %v3085, 112
      %v3466 = vpop.permute.xlu0 %3465
      %3467 = vrot.lane.b32.xlu0 %v3089, 112
      %v3468 = vpop.permute.xlu0 %3467
      %3469 = vrot.lane.b32.xlu0 %v3095, 112
      %v3470 = vpop.permute.xlu0 %3469
      %v3475 = vsel %vm1549, %v3459, 0
      %v3478 = vsel %vm1549, %v3460, 0
      %v3481 = vsel %vm1549, %v3461, 0
      %3483 = vmatprep.subr.mxu0 0.0
      %3484 = vmatpush1.msra.mxu0 0.0
      %3485 = vmatprep.subr.mxu0 0.0
      %3486 = vmatpush1.msra.mxu0 0.0
      %3487 = vmatprep.subr.mxu0 0.0
      %3488 = vmatpush1.msra.mxu0 0.0
      %3489 = vmatprep.subr.mxu0 0.0
      %3490 = vmatpush1.msra.mxu0 0.0
      %3491 = vmatprep.subr.mxu0 0.0
      %3492 = vmatpush1.msra.mxu0 0.0
      %3493 = vmatprep.subr.mxu0 0.0
      %3494 = vmatpush1.msra.mxu0 0.0
      %3495 = vmatprep.subr.mxu0 0.0
      %3496 = vmatpush1.msra.mxu0 0.0
      %3497 = vmatprep.subr.mxu0 0.0
      %3498 = vmatpush1.msra.mxu0 0.0
      %3499 = vmatprep.subr.mxu0 0.0
      %3500 = vmatpush1.msra.mxu0 0.0
      %3501 = vmatprep.subr.mxu0 0.0
      %3502 = vmatpush1.msra.mxu0 0.0
      %3503 = vmatprep.subr.mxu0 0.0
      %3504 = vmatpush1.msra.mxu0 0.0
      %3505 = vmatprep.subr.mxu0 0.0
      %3506 = vmatpush1.msra.mxu0 0.0
      %3507 = vmatprep.subr.mxu0 0.0
      %3508 = vmatpush1.msra.mxu0 0.0
      %3509 = vmatprep.subr.mxu0 0.0
      %3510 = vmatpush1.msra.mxu0 %v3470
      %3511 = vmatprep.subr.mxu0 0.0
      %3512 = vmatpush1.msra.mxu0 %v3468
      %3513 = vmatprep.subr.mxu0 0.0
      %3514 = vmatpush1.msra.mxu0 %v3466
      %3515 = vmatprep.subr.mxu0 0.0
      %3516 = vmatpush2.msra.mxu0 0.0
      %3517 = vmatprep.subr.mxu0 0.0
      %3518 = vmatpush2.msra.mxu0 0.0
      %3519 = vmatprep.subr.mxu0 0.0
      %3520 = vmatpush2.msra.mxu0 0.0
      %3521 = vmatprep.subr.mxu0 0.0
      %3522 = vmatpush2.msra.mxu0 0.0
      %3523 = vmatprep.subr.mxu0 0.0
      %3524 = vmatpush2.msra.mxu0 0.0
      %3525 = vmatprep.subr.mxu0 0.0
      %3526 = vmatpush2.msra.mxu0 0.0
      %3527 = vmatprep.subr.mxu0 0.0
      %3528 = vmatpush2.msra.mxu0 0.0
      %3529 = vmatprep.subr.mxu0 0.0
      %3530 = vmatpush2.msra.mxu0 0.0
      %3531 = vmatprep.subr.mxu0 0.0
      %3532 = vmatpush2.msra.mxu0 0.0
      %3533 = vmatprep.subr.mxu0 0.0
      %3534 = vmatpush2.msra.mxu0 0.0
      %3535 = vmatprep.subr.mxu0 0.0
      %3536 = vmatpush2.msra.mxu0 0.0
      %3537 = vmatprep.subr.mxu0 0.0
      %3538 = vmatpush2.msra.mxu0 0.0
      %3539 = vmatprep.subr.mxu0 0.0
      %3540 = vmatpush2.msra.mxu0 0.0
      %3541 = vmatprep.subr.mxu0 0.0
      %3542 = vmatpush2.msra.mxu0 0.0
      %3543 = vmatprep.subr.mxu0 0.0
      %3544 = vmatpush2.msra.mxu0 0.0
      %3545 = vmatprep.subr.mxu0 0.0
      %3546 = vmatpush2.msra.mxu0 0.0
      %3547 = vmatprep.mubr.f32.mxu0 0.0
      %3548 = vmatmul.mubr.f32.gmra.mxu0 %v3475
      %v3549 = vpop.f32.mrf.mxu0
      %v3550 = vadd.f32 0.0, %v3549
      %v3551 = vpop.f32.mrf.mxu0
      %3552 = vmatprep.mubr.f32.mxu0 0.0
      %3553 = vmatmul.mubr.f32.gmra.mxu0 %v3478
      %v3554 = vpop.f32.mrf.mxu0
      %v3555 = vadd.f32 0.0, %v3554
      %v3556 = vpop.f32.mrf.mxu0
      %3557 = vmatprep.mubr.f32.mxu0 0.0
      %3558 = vmatmul.mubr.f32.gmra.mxu0 %v3481
      %v3559 = vpop.f32.mrf.mxu0
      %v3560 = vadd.f32 0.0, %v3559
      %v3561 = vpop.f32.mrf.mxu0
      %3562 = vdwg.mxu0
      %3566 = vrot.lane.b32.xlu0 %v3550, 16
      %v3567 = vpop.permute.xlu0 %3566
      %3568 = vrot.lane.b32.xlu0 %v3555, 16
      %v3569 = vpop.permute.xlu0 %3568
      %3570 = vrot.lane.b32.xlu0 %v3560, 16
      %v3571 = vpop.permute.xlu0 %3570
      %3575 = vst.msk [vmem:[#allocation3] sm:$0xff] %vm1925, %v3567
      %3576 = vst.msk [vmem:[#allocation3 + $0x8] sm:$0xff] %vm1925, %v3569
      %3577 = vst.msk [vmem:[#allocation3 + $0x10] sm:$0xff] %vm1925, %v3571
      %3578 = vrot.lane.b32.xlu0 %v3083, 96
      %v3579 = vpop.permute.xlu0 %3578
      %3580 = vrot.lane.b32.xlu0 %v3087, 96
      %v3581 = vpop.permute.xlu0 %3580
      %3582 = vrot.lane.b32.xlu0 %v3093, 96
      %v3583 = vpop.permute.xlu0 %3582
      %3584 = vrot.lane.b32.xlu0 %v3083, 32
      %v3585 = vpop.permute.xlu0 %3584
      %3586 = vrot.lane.b32.xlu0 %v3087, 32
      %v3587 = vpop.permute.xlu0 %3586
      %3588 = vrot.lane.b32.xlu0 %v3093, 32
      %v3589 = vpop.permute.xlu0 %3588
      %v3590 = vsel %vm981, %v3579, 0
      %v3592 = vsel %vm981, %v3581, 0
      %v3594 = vsel %vm981, %v3583, 0
      %v3596 = vsel %vm981, %v3585, 0
      %v3598 = vsel %vm981, %v3587, 0
      %v3600 = vsel %vm981, %v3589, 0
      %3602 = vmatprep.subr.mxu0 0.0
      %3603 = vmatpush1.xpose.msra.mxu0 0.0
      %3604 = vmatprep.subr.mxu0 0.0
      %3605 = vmatpush1.xpose.msra.mxu0 0.0
      %3606 = vmatprep.subr.mxu0 0.0
      %3607 = vmatpush1.xpose.msra.mxu0 0.0
      %3608 = vmatprep.subr.mxu0 0.0
      %3609 = vmatpush1.xpose.msra.mxu0 0.0
      %3610 = vmatprep.subr.mxu0 0.0
      %3611 = vmatpush1.xpose.msra.mxu0 0.0
      %3612 = vmatprep.subr.mxu0 0.0
      %3613 = vmatpush1.xpose.msra.mxu0 0.0
      %3614 = vmatprep.subr.mxu0 0.0
      %3615 = vmatpush1.xpose.msra.mxu0 0.0
      %3616 = vmatprep.subr.mxu0 0.0
      %3617 = vmatpush1.xpose.msra.mxu0 0.0
      %3618 = vmatprep.subr.mxu0 0.0
      %3619 = vmatpush1.xpose.msra.mxu0 0.0
      %3620 = vmatprep.subr.mxu0 0.0
      %3621 = vmatpush1.xpose.msra.mxu0 0.0
      %3622 = vmatprep.subr.mxu0 0.0
      %3623 = vmatpush1.xpose.msra.mxu0 0.0
      %3624 = vmatprep.subr.mxu0 0.0
      %3625 = vmatpush1.xpose.msra.mxu0 0.0
      %3626 = vmatprep.subr.mxu0 0.0
      %3627 = vmatpush1.xpose.msra.mxu0 0.0
      %3628 = vmatprep.subr.mxu0 0.0
      %3629 = vmatpush1.xpose.msra.mxu0 %v3600
      %3630 = vmatprep.subr.mxu0 0.0
      %3631 = vmatpush1.xpose.msra.mxu0 %v3598
      %3632 = vmatprep.subr.mxu0 0.0
      %3633 = vmatpush1.xpose.msra.mxu0 %v3596
      %3634 = vmatprep.subr.mxu0 0.0
      %3635 = vmatpush2.xpose.msra.mxu0 0.0
      %3636 = vmatprep.subr.mxu0 0.0
      %3637 = vmatpush2.xpose.msra.mxu0 0.0
      %3638 = vmatprep.subr.mxu0 0.0
      %3639 = vmatpush2.xpose.msra.mxu0 0.0
      %3640 = vmatprep.subr.mxu0 0.0
      %3641 = vmatpush2.xpose.msra.mxu0 0.0
      %3642 = vmatprep.subr.mxu0 0.0
      %3643 = vmatpush2.xpose.msra.mxu0 0.0
      %3644 = vmatprep.subr.mxu0 0.0
      %3645 = vmatpush2.xpose.msra.mxu0 0.0
      %3646 = vmatprep.subr.mxu0 0.0
      %3647 = vmatpush2.xpose.msra.mxu0 0.0
      %3648 = vmatprep.subr.mxu0 0.0
      %3649 = vmatpush2.xpose.msra.mxu0 0.0
      %3650 = vmatprep.subr.mxu0 0.0
      %3651 = vmatpush2.xpose.msra.mxu0 0.0
      %3652 = vmatprep.subr.mxu0 0.0
      %3653 = vmatpush2.xpose.msra.mxu0 0.0
      %3654 = vmatprep.subr.mxu0 0.0
      %3655 = vmatpush2.xpose.msra.mxu0 0.0
      %3656 = vmatprep.subr.mxu0 0.0
      %3657 = vmatpush2.xpose.msra.mxu0 0.0
      %3658 = vmatprep.subr.mxu0 0.0
      %3659 = vmatpush2.xpose.msra.mxu0 0.0
      %3660 = vmatprep.subr.mxu0 0.0
      %3661 = vmatpush2.xpose.msra.mxu0 0.0
      %3662 = vmatprep.subr.mxu0 0.0
      %3663 = vmatpush2.xpose.msra.mxu0 0.0
      %3664 = vmatprep.subr.mxu0 0.0
      %3665 = vmatpush2.xpose.msra.mxu0 0.0
      %3666 = vmatprep.mubr.f32.mxu0 0.0
      %3667 = vmatmul.mubr.f32.gmra.mxu0 %v3590
      %v3668 = vpop.f32.mrf.mxu0
      %v3669 = vadd.f32 %v1278, %v3668
      %v3670 = vpop.f32.mrf.mxu0
      %3671 = vmatprep.mubr.f32.mxu0 0.0
      %3672 = vmatmul.mubr.f32.gmra.mxu0 %v3592
      %v3673 = vpop.f32.mrf.mxu0
      %v3674 = vadd.f32 %v1279, %v3673
      %v3675 = vpop.f32.mrf.mxu0
      %3676 = vmatprep.mubr.f32.mxu0 0.0
      %3677 = vmatmul.mubr.f32.gmra.mxu0 %v3594
      %v3678 = vpop.f32.mrf.mxu0
      %v3679 = vadd.f32 %v1280, %v3678
      %v3680 = vpop.f32.mrf.mxu0
      %3681 = vdwg.mxu0
      %v3682 = vsel %vm1549, %v3669, -inf
      %3683 = vmax.xlane.f32.xlu0 %v3682
      %v3684 = vpop.xlane.xlu0 %3683
      %v3685 = vsel %vm1549, %v3674, -inf
      %3686 = vmax.xlane.f32.xlu0 %v3685
      %v3687 = vpop.xlane.xlu0 %3686
      %v3688 = vsel %vm1549, %v3679, -inf
      %3689 = vmax.xlane.f32.xlu0 %v3688
      %v3690 = vpop.xlane.xlu0 %3689
      %v3691 = vsub.f32 %v3669, %v3684
      %v3692 = vsub.f32 %v3674, %v3687
      %v3693 = vsub.f32 %v3679, %v3690
      %v3694 = vmul.f32 %v3691, 1.442695
      %v3695 = vpow.pop %v3694
      %v3696 = vmul.f32 %v3692, 1.442695
      %v3697 = vpow.pop %v3696
      %v3698 = vmul.f32 %v3693, 1.442695
      %v3699 = vpow.pop %v3698
      %v3700 = vsel %vm1549, %v3695, 0.0
      %3701 = vadd.xlane.f32.xlu0 %v3700
      %v3702 = vpop.xlane.xlu0 %3701
      %v3703 = vsel %vm1549, %v3697, 0.0
      %3704 = vadd.xlane.f32.xlu0 %v3703
      %v3705 = vpop.xlane.xlu0 %3704
      %v3706 = vsel %vm1549, %v3699, 0.0
      %3707 = vadd.xlane.f32.xlu0 %v3706
      %v3708 = vpop.xlane.xlu0 %3707
      %v3709 = vrcp.pop %v3702
      %v3710 = vrcp.pop %v3705
      %v3711 = vrcp.pop %v3708
      %v3712 = vmul.f32 %v3695, %v3709
      %v3713 = vmul.f32 %v3697, %v3710
      %v3714 = vmul.f32 %v3699, %v3711
      %3715 = vrot.lane.b32.xlu0 %v3085, 96
      %v3716 = vpop.permute.xlu0 %3715
      %3717 = vrot.lane.b32.xlu0 %v3089, 96
      %v3718 = vpop.permute.xlu0 %3717
      %3719 = vrot.lane.b32.xlu0 %v3095, 96
      %v3720 = vpop.permute.xlu0 %3719
      %v3725 = vsel %vm1549, %v3712, 0
      %v3728 = vsel %vm1549, %v3713, 0
      %v3731 = vsel %vm1549, %v3714, 0
      %3733 = vmatprep.subr.mxu0 0.0
      %3734 = vmatpush1.msra.mxu0 0.0
      %3735 = vmatprep.subr.mxu0 0.0
      %3736 = vmatpush1.msra.mxu0 0.0
      %3737 = vmatprep.subr.mxu0 0.0
      %3738 = vmatpush1.msra.mxu0 0.0
      %3739 = vmatprep.subr.mxu0 0.0
      %3740 = vmatpush1.msra.mxu0 0.0
      %3741 = vmatprep.subr.mxu0 0.0
      %3742 = vmatpush1.msra.mxu0 0.0
      %3743 = vmatprep.subr.mxu0 0.0
      %3744 = vmatpush1.msra.mxu0 0.0
      %3745 = vmatprep.subr.mxu0 0.0
      %3746 = vmatpush1.msra.mxu0 0.0
      %3747 = vmatprep.subr.mxu0 0.0
      %3748 = vmatpush1.msra.mxu0 0.0
      %3749 = vmatprep.subr.mxu0 0.0
      %3750 = vmatpush1.msra.mxu0 0.0
      %3751 = vmatprep.subr.mxu0 0.0
      %3752 = vmatpush1.msra.mxu0 0.0
      %3753 = vmatprep.subr.mxu0 0.0
      %3754 = vmatpush1.msra.mxu0 0.0
      %3755 = vmatprep.subr.mxu0 0.0
      %3756 = vmatpush1.msra.mxu0 0.0
      %3757 = vmatprep.subr.mxu0 0.0
      %3758 = vmatpush1.msra.mxu0 0.0
      %3759 = vmatprep.subr.mxu0 0.0
      %3760 = vmatpush1.msra.mxu0 %v3720
      %3761 = vmatprep.subr.mxu0 0.0
      %3762 = vmatpush1.msra.mxu0 %v3718
      %3763 = vmatprep.subr.mxu0 0.0
      %3764 = vmatpush1.msra.mxu0 %v3716
      %3765 = vmatprep.subr.mxu0 0.0
      %3766 = vmatpush2.msra.mxu0 0.0
      %3767 = vmatprep.subr.mxu0 0.0
      %3768 = vmatpush2.msra.mxu0 0.0
      %3769 = vmatprep.subr.mxu0 0.0
      %3770 = vmatpush2.msra.mxu0 0.0
      %3771 = vmatprep.subr.mxu0 0.0
      %3772 = vmatpush2.msra.mxu0 0.0
      %3773 = vmatprep.subr.mxu0 0.0
      %3774 = vmatpush2.msra.mxu0 0.0
      %3775 = vmatprep.subr.mxu0 0.0
      %3776 = vmatpush2.msra.mxu0 0.0
      %3777 = vmatprep.subr.mxu0 0.0
      %3778 = vmatpush2.msra.mxu0 0.0
      %3779 = vmatprep.subr.mxu0 0.0
      %3780 = vmatpush2.msra.mxu0 0.0
      %3781 = vmatprep.subr.mxu0 0.0
      %3782 = vmatpush2.msra.mxu0 0.0
      %3783 = vmatprep.subr.mxu0 0.0
      %3784 = vmatpush2.msra.mxu0 0.0
      %3785 = vmatprep.subr.mxu0 0.0
      %3786 = vmatpush2.msra.mxu0 0.0
      %3787 = vmatprep.subr.mxu0 0.0
      %3788 = vmatpush2.msra.mxu0 0.0
      %3789 = vmatprep.subr.mxu0 0.0
      %3790 = vmatpush2.msra.mxu0 0.0
      %3791 = vmatprep.subr.mxu0 0.0
      %3792 = vmatpush2.msra.mxu0 0.0
      %3793 = vmatprep.subr.mxu0 0.0
      %3794 = vmatpush2.msra.mxu0 0.0
      %3795 = vmatprep.subr.mxu0 0.0
      %3796 = vmatpush2.msra.mxu0 0.0
      %3797 = vmatprep.mubr.f32.mxu0 0.0
      %3798 = vmatmul.mubr.f32.gmra.mxu0 %v3725
      %v3799 = vpop.f32.mrf.mxu0
      %v3800 = vadd.f32 0.0, %v3799
      %v3801 = vpop.f32.mrf.mxu0
      %3802 = vmatprep.mubr.f32.mxu0 0.0
      %3803 = vmatmul.mubr.f32.gmra.mxu0 %v3728
      %v3804 = vpop.f32.mrf.mxu0
      %v3805 = vadd.f32 0.0, %v3804
      %v3806 = vpop.f32.mrf.mxu0
      %3807 = vmatprep.mubr.f32.mxu0 0.0
      %3808 = vmatmul.mubr.f32.gmra.mxu0 %v3731
      %v3809 = vpop.f32.mrf.mxu0
      %v3810 = vadd.f32 0.0, %v3809
      %v3811 = vpop.f32.mrf.mxu0
      %3812 = vdwg.mxu0
      %3816 = vrot.lane.b32.xlu0 %v3800, 32
      %v3817 = vpop.permute.xlu0 %3816
      %3818 = vrot.lane.b32.xlu0 %v3805, 32
      %v3819 = vpop.permute.xlu0 %3818
      %3820 = vrot.lane.b32.xlu0 %v3810, 32
      %v3821 = vpop.permute.xlu0 %3820
      %3825 = vst.msk [vmem:[#allocation3] sm:$0xff] %vm2176, %v3817
      %3826 = vst.msk [vmem:[#allocation3 + $0x8] sm:$0xff] %vm2176, %v3819
      %3827 = vst.msk [vmem:[#allocation3 + $0x10] sm:$0xff] %vm2176, %v3821
      %3828 = vrot.lane.b32.xlu0 %v3083, 80
      %v3829 = vpop.permute.xlu0 %3828
      %3830 = vrot.lane.b32.xlu0 %v3087, 80
      %v3831 = vpop.permute.xlu0 %3830
      %3832 = vrot.lane.b32.xlu0 %v3093, 80
      %v3833 = vpop.permute.xlu0 %3832
      %3834 = vrot.lane.b32.xlu0 %v3083, 16
      %v3835 = vpop.permute.xlu0 %3834
      %3836 = vrot.lane.b32.xlu0 %v3087, 16
      %v3837 = vpop.permute.xlu0 %3836
      %3838 = vrot.lane.b32.xlu0 %v3093, 16
      %v3839 = vpop.permute.xlu0 %3838
      %v3840 = vsel %vm981, %v3829, 0
      %v3842 = vsel %vm981, %v3831, 0
      %v3844 = vsel %vm981, %v3833, 0
      %v3846 = vsel %vm981, %v3835, 0
      %v3848 = vsel %vm981, %v3837, 0
      %v3850 = vsel %vm981, %v3839, 0
      %3852 = vmatprep.subr.mxu0 0.0
      %3853 = vmatpush1.xpose.msra.mxu0 0.0
      %3854 = vmatprep.subr.mxu0 0.0
      %3855 = vmatpush1.xpose.msra.mxu0 0.0
      %3856 = vmatprep.subr.mxu0 0.0
      %3857 = vmatpush1.xpose.msra.mxu0 0.0
      %3858 = vmatprep.subr.mxu0 0.0
      %3859 = vmatpush1.xpose.msra.mxu0 0.0
      %3860 = vmatprep.subr.mxu0 0.0
      %3861 = vmatpush1.xpose.msra.mxu0 0.0
      %3862 = vmatprep.subr.mxu0 0.0
      %3863 = vmatpush1.xpose.msra.mxu0 0.0
      %3864 = vmatprep.subr.mxu0 0.0
      %3865 = vmatpush1.xpose.msra.mxu0 0.0
      %3866 = vmatprep.subr.mxu0 0.0
      %3867 = vmatpush1.xpose.msra.mxu0 0.0
      %3868 = vmatprep.subr.mxu0 0.0
      %3869 = vmatpush1.xpose.msra.mxu0 0.0
      %3870 = vmatprep.subr.mxu0 0.0
      %3871 = vmatpush1.xpose.msra.mxu0 0.0
      %3872 = vmatprep.subr.mxu0 0.0
      %3873 = vmatpush1.xpose.msra.mxu0 0.0
      %3874 = vmatprep.subr.mxu0 0.0
      %3875 = vmatpush1.xpose.msra.mxu0 0.0
      %3876 = vmatprep.subr.mxu0 0.0
      %3877 = vmatpush1.xpose.msra.mxu0 0.0
      %3878 = vmatprep.subr.mxu0 0.0
      %3879 = vmatpush1.xpose.msra.mxu0 %v3850
      %3880 = vmatprep.subr.mxu0 0.0
      %3881 = vmatpush1.xpose.msra.mxu0 %v3848
      %3882 = vmatprep.subr.mxu0 0.0
      %3883 = vmatpush1.xpose.msra.mxu0 %v3846
      %3884 = vmatprep.subr.mxu0 0.0
      %3885 = vmatpush2.xpose.msra.mxu0 0.0
      %3886 = vmatprep.subr.mxu0 0.0
      %3887 = vmatpush2.xpose.msra.mxu0 0.0
      %3888 = vmatprep.subr.mxu0 0.0
      %3889 = vmatpush2.xpose.msra.mxu0 0.0
      %3890 = vmatprep.subr.mxu0 0.0
      %3891 = vmatpush2.xpose.msra.mxu0 0.0
      %3892 = vmatprep.subr.mxu0 0.0
      %3893 = vmatpush2.xpose.msra.mxu0 0.0
      %3894 = vmatprep.subr.mxu0 0.0
      %3895 = vmatpush2.xpose.msra.mxu0 0.0
      %3896 = vmatprep.subr.mxu0 0.0
      %3897 = vmatpush2.xpose.msra.mxu0 0.0
      %3898 = vmatprep.subr.mxu0 0.0
      %3899 = vmatpush2.xpose.msra.mxu0 0.0
      %3900 = vmatprep.subr.mxu0 0.0
      %3901 = vmatpush2.xpose.msra.mxu0 0.0
      %3902 = vmatprep.subr.mxu0 0.0
      %3903 = vmatpush2.xpose.msra.mxu0 0.0
      %3904 = vmatprep.subr.mxu0 0.0
      %3905 = vmatpush2.xpose.msra.mxu0 0.0
      %3906 = vmatprep.subr.mxu0 0.0
      %3907 = vmatpush2.xpose.msra.mxu0 0.0
      %3908 = vmatprep.subr.mxu0 0.0
      %3909 = vmatpush2.xpose.msra.mxu0 0.0
      %3910 = vmatprep.subr.mxu0 0.0
      %3911 = vmatpush2.xpose.msra.mxu0 0.0
      %3912 = vmatprep.subr.mxu0 0.0
      %3913 = vmatpush2.xpose.msra.mxu0 0.0
      %3914 = vmatprep.subr.mxu0 0.0
      %3915 = vmatpush2.xpose.msra.mxu0 0.0
      %3916 = vmatprep.mubr.f32.mxu0 0.0
      %3917 = vmatmul.mubr.f32.gmra.mxu0 %v3840
      %v3918 = vpop.f32.mrf.mxu0
      %v3919 = vadd.f32 %v1278, %v3918
      %v3920 = vpop.f32.mrf.mxu0
      %3921 = vmatprep.mubr.f32.mxu0 0.0
      %3922 = vmatmul.mubr.f32.gmra.mxu0 %v3842
      %v3923 = vpop.f32.mrf.mxu0
      %v3924 = vadd.f32 %v1279, %v3923
      %v3925 = vpop.f32.mrf.mxu0
      %3926 = vmatprep.mubr.f32.mxu0 0.0
      %3927 = vmatmul.mubr.f32.gmra.mxu0 %v3844
      %v3928 = vpop.f32.mrf.mxu0
      %v3929 = vadd.f32 %v1280, %v3928
      %v3930 = vpop.f32.mrf.mxu0
      %3931 = vdwg.mxu0
      %v3932 = vsel %vm1549, %v3919, -inf
      %3933 = vmax.xlane.f32.xlu0 %v3932
      %v3934 = vpop.xlane.xlu0 %3933
      %v3935 = vsel %vm1549, %v3924, -inf
      %3936 = vmax.xlane.f32.xlu0 %v3935
      %v3937 = vpop.xlane.xlu0 %3936
      %v3938 = vsel %vm1549, %v3929, -inf
      %3939 = vmax.xlane.f32.xlu0 %v3938
      %v3940 = vpop.xlane.xlu0 %3939
      %v3941 = vsub.f32 %v3919, %v3934
      %v3942 = vsub.f32 %v3924, %v3937
      %v3943 = vsub.f32 %v3929, %v3940
      %v3944 = vmul.f32 %v3941, 1.442695
      %v3945 = vpow.pop %v3944
      %v3946 = vmul.f32 %v3942, 1.442695
      %v3947 = vpow.pop %v3946
      %v3948 = vmul.f32 %v3943, 1.442695
      %v3949 = vpow.pop %v3948
      %v3950 = vsel %vm1549, %v3945, 0.0
      %3951 = vadd.xlane.f32.xlu0 %v3950
      %v3952 = vpop.xlane.xlu0 %3951
      %v3953 = vsel %vm1549, %v3947, 0.0
      %3954 = vadd.xlane.f32.xlu0 %v3953
      %v3955 = vpop.xlane.xlu0 %3954
      %v3956 = vsel %vm1549, %v3949, 0.0
      %3957 = vadd.xlane.f32.xlu0 %v3956
      %v3958 = vpop.xlane.xlu0 %3957
      %v3959 = vrcp.pop %v3952
      %v3960 = vrcp.pop %v3955
      %v3961 = vrcp.pop %v3958
      %v3962 = vmul.f32 %v3945, %v3959
      %v3963 = vmul.f32 %v3947, %v3960
      %v3964 = vmul.f32 %v3949, %v3961
      %3965 = vrot.lane.b32.xlu0 %v3085, 80
      %v3966 = vpop.permute.xlu0 %3965
      %3967 = vrot.lane.b32.xlu0 %v3089, 80
      %v3968 = vpop.permute.xlu0 %3967
      %3969 = vrot.lane.b32.xlu0 %v3095, 80
      %v3970 = vpop.permute.xlu0 %3969
      %v3975 = vsel %vm1549, %v3962, 0
      %v3978 = vsel %vm1549, %v3963, 0
      %v3981 = vsel %vm1549, %v3964, 0
      %3983 = vmatprep.subr.mxu0 0.0
      %3984 = vmatpush1.msra.mxu0 0.0
      %3985 = vmatprep.subr.mxu0 0.0
      %3986 = vmatpush1.msra.mxu0 0.0
      %3987 = vmatprep.subr.mxu0 0.0
      %3988 = vmatpush1.msra.mxu0 0.0
      %3989 = vmatprep.subr.mxu0 0.0
      %3990 = vmatpush1.msra.mxu0 0.0
      %3991 = vmatprep.subr.mxu0 0.0
      %3992 = vmatpush1.msra.mxu0 0.0
      %3993 = vmatprep.subr.mxu0 0.0
      %3994 = vmatpush1.msra.mxu0 0.0
      %3995 = vmatprep.subr.mxu0 0.0
      %3996 = vmatpush1.msra.mxu0 0.0
      %3997 = vmatprep.subr.mxu0 0.0
      %3998 = vmatpush1.msra.mxu0 0.0
      %3999 = vmatprep.subr.mxu0 0.0
      %4000 = vmatpush1.msra.mxu0 0.0
      %4001 = vmatprep.subr.mxu0 0.0
      %4002 = vmatpush1.msra.mxu0 0.0
      %4003 = vmatprep.subr.mxu0 0.0
      %4004 = vmatpush1.msra.mxu0 0.0
      %4005 = vmatprep.subr.mxu0 0.0
      %4006 = vmatpush1.msra.mxu0 0.0
      %4007 = vmatprep.subr.mxu0 0.0
      %4008 = vmatpush1.msra.mxu0 0.0
      %4009 = vmatprep.subr.mxu0 0.0
      %4010 = vmatpush1.msra.mxu0 %v3970
      %4011 = vmatprep.subr.mxu0 0.0
      %4012 = vmatpush1.msra.mxu0 %v3968
      %4013 = vmatprep.subr.mxu0 0.0
      %4014 = vmatpush1.msra.mxu0 %v3966
      %4015 = vmatprep.subr.mxu0 0.0
      %4016 = vmatpush2.msra.mxu0 0.0
      %4017 = vmatprep.subr.mxu0 0.0
      %4018 = vmatpush2.msra.mxu0 0.0
      %4019 = vmatprep.subr.mxu0 0.0
      %4020 = vmatpush2.msra.mxu0 0.0
      %4021 = vmatprep.subr.mxu0 0.0
      %4022 = vmatpush2.msra.mxu0 0.0
      %4023 = vmatprep.subr.mxu0 0.0
      %4024 = vmatpush2.msra.mxu0 0.0
      %4025 = vmatprep.subr.mxu0 0.0
      %4026 = vmatpush2.msra.mxu0 0.0
      %4027 = vmatprep.subr.mxu0 0.0
      %4028 = vmatpush2.msra.mxu0 0.0
      %4029 = vmatprep.subr.mxu0 0.0
      %4030 = vmatpush2.msra.mxu0 0.0
      %4031 = vmatprep.subr.mxu0 0.0
      %4032 = vmatpush2.msra.mxu0 0.0
      %4033 = vmatprep.subr.mxu0 0.0
      %4034 = vmatpush2.msra.mxu0 0.0
      %4035 = vmatprep.subr.mxu0 0.0
      %4036 = vmatpush2.msra.mxu0 0.0
      %4037 = vmatprep.subr.mxu0 0.0
      %4038 = vmatpush2.msra.mxu0 0.0
      %4039 = vmatprep.subr.mxu0 0.0
      %4040 = vmatpush2.msra.mxu0 0.0
      %4041 = vmatprep.subr.mxu0 0.0
      %4042 = vmatpush2.msra.mxu0 0.0
      %4043 = vmatprep.subr.mxu0 0.0
      %4044 = vmatpush2.msra.mxu0 0.0
      %4045 = vmatprep.subr.mxu0 0.0
      %4046 = vmatpush2.msra.mxu0 0.0
      %4047 = vmatprep.mubr.f32.mxu0 0.0
      %4048 = vmatmul.mubr.f32.gmra.mxu0 %v3975
      %v4049 = vpop.f32.mrf.mxu0
      %v4050 = vadd.f32 0.0, %v4049
      %v4051 = vpop.f32.mrf.mxu0
      %4052 = vmatprep.mubr.f32.mxu0 0.0
      %4053 = vmatmul.mubr.f32.gmra.mxu0 %v3978
      %v4054 = vpop.f32.mrf.mxu0
      %v4055 = vadd.f32 0.0, %v4054
      %v4056 = vpop.f32.mrf.mxu0
      %4057 = vmatprep.mubr.f32.mxu0 0.0
      %4058 = vmatmul.mubr.f32.gmra.mxu0 %v3981
      %v4059 = vpop.f32.mrf.mxu0
      %v4060 = vadd.f32 0.0, %v4059
      %v4061 = vpop.f32.mrf.mxu0
      %4062 = vdwg.mxu0
      %4066 = vrot.lane.b32.xlu0 %v4050, 48
      %v4067 = vpop.permute.xlu0 %4066
      %4068 = vrot.lane.b32.xlu0 %v4055, 48
      %v4069 = vpop.permute.xlu0 %4068
      %4070 = vrot.lane.b32.xlu0 %v4060, 48
      %v4071 = vpop.permute.xlu0 %4070
      %4075 = vst.msk [vmem:[#allocation3] sm:$0xff] %vm2427, %v4067
      %4076 = vst.msk [vmem:[#allocation3 + $0x8] sm:$0xff] %vm2427, %v4069
      %4077 = vst.msk [vmem:[#allocation3 + $0x10] sm:$0xff] %vm2427, %v4071
      %v4078 = vld [vmem:[#allocation3] sm:$0xff]
      %v4079 = vld [vmem:[#allocation3 + $0x8] sm:$0xff]
      %v4080 = vld [vmem:[#allocation3 + $0x10] sm:$0xff]
      %v4081 = vpack.c.bf16 %v4079, %v4078
      %v4082 = vpack.c.bf16 %v4080, %v4080
      %s4083 = scalar_lea.vmem %s11, 32
      %v4084 = vld [vmem:[%s4083] sm:$0xf]
      %v4085 = vld [vmem:[%s4083 + $0x4] sm:$0xf]
      %v4086 = vld [vmem:[%s4083 + $0x8] sm:$0xf]
      %v4087 = vld [vmem:[%s4083 + $0xc] sm:$0xf]
      %v4088 = vld [vmem:[%s4083 + $0x10] sm:$0xf]
      %v4089 = vld [vmem:[%s4083 + $0x14] sm:$0xf]
      %v4090 = vld [vmem:[%s4083 + $0x18] sm:$0xf]
      %v4091 = vld [vmem:[%s4083 + $0x1c] sm:$0xf]
      %v4092 = vld [vmem:[%s6 + $0x23] ss:$0 sm:$0xff]
      %v4101 = vunpack.c.l.b16 %v4084
      %v4102 = vunpack.c.l.b16 %v4085
      %v4103 = vunpack.c.l.b16 %v4086
      %v4104 = vunpack.c.l.b16 %v4087
      %v4105 = vunpack.c.l.b16 %v4088
      %v4106 = vunpack.c.l.b16 %v4089
      %v4107 = vunpack.c.l.b16 %v4090
      %v4108 = vunpack.c.l.b16 %v4091
      %v4109 = vpack.c.b16 %v4102, %v4101
      %v4110 = vpack.c.b16 %v4104, %v4103
      %v4111 = vpack.c.b16 %v4106, %v4105
      %v4112 = vpack.c.b16 %v4108, %v4107
      %v4118 = vsel %vm1199, %v4081, 0
      %v4121 = vsel %vm1199, %v4082, 0
      %4123 = vmatprep.subr.bf16.mxu0 0
      %4124 = vmatpush1.bf16.msra.mxu0 0
      %4125 = vmatprep.subr.bf16.mxu0 0
      %4126 = vmatpush1.bf16.msra.mxu0 0
      %4127 = vmatprep.subr.bf16.mxu0 0
      %4128 = vmatpush1.bf16.msra.mxu0 0
      %4129 = vmatprep.subr.bf16.mxu0 0
      %4130 = vmatpush1.bf16.msra.mxu0 0
      %4131 = vmatprep.subr.bf16.mxu0 0
      %4132 = vmatpush1.bf16.msra.mxu0 %v4112
      %4133 = vmatprep.subr.bf16.mxu0 0
      %4134 = vmatpush1.bf16.msra.mxu0 %v4111
      %4135 = vmatprep.subr.bf16.mxu0 0
      %4136 = vmatpush1.bf16.msra.mxu0 %v4110
      %4137 = vmatprep.subr.bf16.mxu0 0
      %4138 = vmatpush1.bf16.msra.mxu0 %v4109
      %4139 = vmatprep.subr.bf16.mxu0 0
      %4140 = vmatpush2.bf16.msra.mxu0 0
      %4141 = vmatprep.subr.bf16.mxu0 0
      %4142 = vmatpush2.bf16.msra.mxu0 0
      %4143 = vmatprep.subr.bf16.mxu0 0
      %4144 = vmatpush2.bf16.msra.mxu0 0
      %4145 = vmatprep.subr.bf16.mxu0 0
      %4146 = vmatpush2.bf16.msra.mxu0 0
      %4147 = vmatprep.subr.bf16.mxu0 0
      %4148 = vmatpush2.bf16.msra.mxu0 0
      %4149 = vmatprep.subr.bf16.mxu0 0
      %4150 = vmatpush2.bf16.msra.mxu0 0
      %4151 = vmatprep.subr.bf16.mxu0 0
      %4152 = vmatpush2.bf16.msra.mxu0 0
      %4153 = vmatprep.subr.bf16.mxu0 0
      %4154 = vmatpush2.bf16.msra.mxu0 0
      %4155 = vmatprep.mubr.bf16.mxu0 0
      %4156 = vmatmul.mubr.bf16.gmra.mxu0 %v4118
      %v4157 = vpop.f32.mrf.mxu0
      %v4158 = vadd.f32 %v4092, %v4157
      %v4159 = vpop.f32.mrf.mxu0
      %v4160 = vpop.f32.mrf.mxu0
      %v4161 = vadd.f32 %v4092, %v4160
      %v4162 = vpop.f32.mrf.mxu0
      %4163 = vmatprep.mubr.bf16.mxu0 0
      %4164 = vmatmul.mubr.bf16.gmra.mxu0 %v4121
      %v4165 = vpop.f32.mrf.mxu0
      %v4166 = vadd.f32 %v4092, %v4165
      %v4167 = vpop.f32.mrf.mxu0
      %v4168 = vpop.f32.mrf.mxu0
      %v4169 = vpop.f32.mrf.mxu0
      %4170 = vdwg.mxu0
      %v4171 = vadd.f32 %v2928, %v4158
      %v4172 = vadd.f32 %v2929, %v4161
      %v4173 = vadd.f32 %v2930, %v4166
      %v4174 = vld [vmem:[%s6 + $0x21] ss:$0 sm:$0xff]
      %v4175 = vld [vmem:[%s6 + $0x22] ss:$0 sm:$0xff]
      %v4176 = vsel %vm1199, %v4171, 0.0
      %4177 = vadd.xlane.f32.xlu0 %v4176
      %v4178 = vpop.xlane.xlu0 %4177
      %v4179 = vsel %vm1199, %v4172, 0.0
      %4180 = vadd.xlane.f32.xlu0 %v4179
      %v4181 = vpop.xlane.xlu0 %4180
      %v4182 = vsel %vm1199, %v4173, 0.0
      %4183 = vadd.xlane.f32.xlu0 %v4182
      %v4184 = vpop.xlane.xlu0 %4183
      %v4185 = vmul.f32 %v4178, %v1219
      %v4186 = vmul.f32 %v4181, %v1219
      %v4187 = vmul.f32 %v4184, %v1219
      %v4188 = vsub.f32 %v4171, %v4185
      %v4189 = vsub.f32 %v4172, %v4186
      %v4190 = vsub.f32 %v4173, %v4187
      %v4191 = vmul.f32 %v4188, %v4188
      %v4192 = vmul.f32 %v4189, %v4189
      %v4193 = vmul.f32 %v4190, %v4190
      %v4194 = vsel %vm1199, %v4191, 0.0
      %4195 = vadd.xlane.f32.xlu0 %v4194
      %v4196 = vpop.xlane.xlu0 %4195
      %v4197 = vsel %vm1199, %v4192, 0.0
      %4198 = vadd.xlane.f32.xlu0 %v4197
      %v4199 = vpop.xlane.xlu0 %4198
      %v4200 = vsel %vm1199, %v4193, 0.0
      %4201 = vadd.xlane.f32.xlu0 %v4200
      %v4202 = vpop.xlane.xlu0 %4201
      %v4203 = vmul.f32 %v4196, %v1219
      %v4204 = vmul.f32 %v4199, %v1219
      %v4205 = vmul.f32 %v4202, %v1219
      %v4206 = vadd.f32 %v4203, 1e-05
      %v4207 = vadd.f32 %v4204, 1e-05
      %v4208 = vadd.f32 %v4205, 1e-05
      %v4209 = vrsqrt.pop %v4206
      %v4210 = vrsqrt.pop %v4207
      %v4211 = vrsqrt.pop %v4208
      %v4212 = vmul.f32 %v4188, %v4209
      %v4213 = vmul.f32 %v4189, %v4210
      %v4214 = vmul.f32 %v4190, %v4211
      %v4215 = vmul.f32 %v4212, %v4174
      %v4216 = vmul.f32 %v4213, %v4174
      %v4217 = vmul.f32 %v4214, %v4174
      %v4218 = vadd.f32 %v4215, %v4175
      %v4219 = vadd.f32 %v4216, %v4175
      %v4220 = vadd.f32 %v4217, %v4175
      %v4221 = vpack.c.bf16 %v4219, %v4218
      %v4222 = vpack.c.bf16 %v4220, %v4220
      %s4223 = scalar_lea.vmem %s12, 64
      %v4224 = vld [vmem:[%s4223] sm:$0xff]
      %v4225 = vld [vmem:[%s4223 + $0x8] sm:$0xff]
      %v4226 = vld [vmem:[%s4223 + $0x10] sm:$0xff]
      %v4227 = vld [vmem:[%s4223 + $0x18] sm:$0xff]
      %v4228 = vld [vmem:[%s4223 + $0x20] sm:$0xff]
      %v4229 = vld [vmem:[%s4223 + $0x28] sm:$0xff]
      %v4230 = vld [vmem:[%s4223 + $0x30] sm:$0xff]
      %v4231 = vld [vmem:[%s4223 + $0x38] sm:$0xff]
      %s4232 = scalar_lea.vmem %s6, 38
      %v4233 = vld [vmem:[%s4232] ss:$8 sm:$0x3]
      %v4235 = vlaneseq
      %v4236 = vshrl.u32 %v4235, 7
      %v4237 = vsub.s32 0, %v4236
      %v4238 = vrot.slane %v4233, %v4237
      %v4239 = vlaneseq
      %v4240 = vshrl.u32 %v4239, 7
      %v4241 = vsub.s32 1, %v4240
      %v4242 = vrot.slane %v4233, %v4241
      %v4253 = vunpack.c.l.b16 %v4224
      %v4254 = vunpack.c.h.b16 %v4224
      %v4255 = vunpack.c.l.b16 %v4225
      %v4256 = vunpack.c.h.b16 %v4225
      %v4257 = vunpack.c.l.b16 %v4226
      %v4258 = vunpack.c.h.b16 %v4226
      %v4259 = vunpack.c.l.b16 %v4227
      %v4260 = vunpack.c.h.b16 %v4227
      %v4261 = vunpack.c.l.b16 %v4228
      %v4262 = vunpack.c.h.b16 %v4228
      %v4263 = vunpack.c.l.b16 %v4229
      %v4264 = vunpack.c.h.b16 %v4229
      %v4265 = vunpack.c.l.b16 %v4230
      %v4266 = vunpack.c.h.b16 %v4230
      %v4267 = vunpack.c.l.b16 %v4231
      %v4268 = vunpack.c.h.b16 %v4231
      %v4269 = vpack.c.b16 %v4255, %v4253
      %v4270 = vpack.c.b16 %v4256, %v4254
      %v4271 = vpack.c.b16 %v4259, %v4257
      %v4272 = vpack.c.b16 %v4260, %v4258
      %v4273 = vpack.c.b16 %v4263, %v4261
      %v4274 = vpack.c.b16 %v4264, %v4262
      %v4275 = vpack.c.b16 %v4267, %v4265
      %v4276 = vpack.c.b16 %v4268, %v4266
      %v4286 = vsel %vm1199, %v4221, 0
      %v4289 = vsel %vm1199, %v4222, 0
      %4291 = vmatprep.subr.bf16.mxu0 0
      %4292 = vmatpush1.bf16.msra.mxu0 0
      %4293 = vmatprep.subr.bf16.mxu0 0
      %4294 = vmatpush1.bf16.msra.mxu0 0
      %4295 = vmatprep.subr.bf16.mxu0 0
      %4296 = vmatpush1.bf16.msra.mxu0 0
      %4297 = vmatprep.subr.bf16.mxu0 0
      %4298 = vmatpush1.bf16.msra.mxu0 0
      %4299 = vmatprep.subr.bf16.mxu0 %v4276
      %4300 = vmatpush1.bf16.msra.mxu0 %v4275
      %4301 = vmatprep.subr.bf16.mxu0 %v4274
      %4302 = vmatpush1.bf16.msra.mxu0 %v4273
      %4303 = vmatprep.subr.bf16.mxu0 %v4272
      %4304 = vmatpush1.bf16.msra.mxu0 %v4271
      %4305 = vmatprep.subr.bf16.mxu0 %v4270
      %4306 = vmatpush1.bf16.msra.mxu0 %v4269
      %4307 = vmatprep.subr.bf16.mxu0 0
      %4308 = vmatpush2.bf16.msra.mxu0 0
      %4309 = vmatprep.subr.bf16.mxu0 0
      %4310 = vmatpush2.bf16.msra.mxu0 0
      %4311 = vmatprep.subr.bf16.mxu0 0
      %4312 = vmatpush2.bf16.msra.mxu0 0
      %4313 = vmatprep.subr.bf16.mxu0 0
      %4314 = vmatpush2.bf16.msra.mxu0 0
      %4315 = vmatprep.subr.bf16.mxu0 0
      %4316 = vmatpush2.bf16.msra.mxu0 0
      %4317 = vmatprep.subr.bf16.mxu0 0
      %4318 = vmatpush2.bf16.msra.mxu0 0
      %4319 = vmatprep.subr.bf16.mxu0 0
      %4320 = vmatpush2.bf16.msra.mxu0 0
      %4321 = vmatprep.subr.bf16.mxu0 0
      %4322 = vmatpush2.bf16.msra.mxu0 0
      %4323 = vmatprep.mubr.bf16.mxu0 0
      %4324 = vmatmul.mubr.bf16.gmra.mxu0 %v4286
      %v4325 = vpop.f32.mrf.mxu0
      %v4326 = vadd.f32 %v4238, %v4325
      %v4327 = vpop.f32.mrf.mxu0
      %v4328 = vadd.f32 %v4242, %v4327
      %v4329 = vpop.f32.mrf.mxu0
      %v4330 = vadd.f32 %v4238, %v4329
      %v4331 = vpop.f32.mrf.mxu0
      %v4332 = vadd.f32 %v4242, %v4331
      %4333 = vmatprep.mubr.bf16.mxu0 0
      %4334 = vmatmul.mubr.bf16.gmra.mxu0 %v4289
      %v4335 = vpop.f32.mrf.mxu0
      %v4336 = vadd.f32 %v4238, %v4335
      %v4337 = vpop.f32.mrf.mxu0
      %v4338 = vadd.f32 %v4242, %v4337
      %v4339 = vpop.f32.mrf.mxu0
      %v4340 = vpop.f32.mrf.mxu0
      %4341 = vdwg.mxu0
      %v4342 = vmul.f32 %v4326, 0.5
      %v4343 = vmul.f32 %v4328, 0.5
      %v4344 = vmul.f32 %v4330, 0.5
      %v4345 = vmul.f32 %v4332, 0.5
      %v4346 = vmul.f32 %v4336, 0.5
      %v4347 = vmul.f32 %v4338, 0.5
      %v4348 = vmul.f32 %v4326, 0.044715
      %v4349 = vmul.f32 %v4328, 0.044715
      %v4350 = vmul.f32 %v4330, 0.044715
      %v4351 = vmul.f32 %v4332, 0.044715
      %v4352 = vmul.f32 %v4336, 0.044715
      %v4353 = vmul.f32 %v4338, 0.044715
      %v4354 = vmul.f32 %v4348, %v4326
      %v4355 = vmul.f32 %v4349, %v4328
      %v4356 = vmul.f32 %v4350, %v4330
      %v4357 = vmul.f32 %v4351, %v4332
      %v4358 = vmul.f32 %v4352, %v4336
      %v4359 = vmul.f32 %v4353, %v4338
      %v4360 = vmul.f32 %v4354, %v4326
      %v4361 = vmul.f32 %v4355, %v4328
      %v4362 = vmul.f32 %v4356, %v4330
      %v4363 = vmul.f32 %v4357, %v4332
      %v4364 = vmul.f32 %v4358, %v4336
      %v4365 = vmul.f32 %v4359, %v4338
      %v4366 = vadd.f32 %v4326, %v4360
      %v4367 = vadd.f32 %v4328, %v4361
      %v4368 = vadd.f32 %v4330, %v4362
      %v4369 = vadd.f32 %v4332, %v4363
      %v4370 = vadd.f32 %v4336, %v4364
      %v4371 = vadd.f32 %v4338, %v4365
      %v4372 = vmul.f32 %v4366, 0.7978846
      %v4373 = vmul.f32 %v4367, 0.7978846
      %v4374 = vmul.f32 %v4368, 0.7978846
      %v4375 = vmul.f32 %v4369, 0.7978846
      %v4376 = vmul.f32 %v4370, 0.7978846
      %v4377 = vmul.f32 %v4371, 0.7978846
      %v4378 = vtanh.pop %v4372
      %v4379 = vtanh.pop %v4373
      %v4380 = vtanh.pop %v4374
      %v4381 = vtanh.pop %v4375
      %v4382 = vtanh.pop %v4376
      %v4383 = vtanh.pop %v4377
      %v4384 = vadd.f32 %v4378, 1.0
      %v4385 = vadd.f32 %v4379, 1.0
      %v4386 = vadd.f32 %v4380, 1.0
      %v4387 = vadd.f32 %v4381, 1.0
      %v4388 = vadd.f32 %v4382, 1.0
      %v4389 = vadd.f32 %v4383, 1.0
      %v4390 = vmul.f32 %v4342, %v4384
      %v4391 = vmul.f32 %v4343, %v4385
      %v4392 = vmul.f32 %v4344, %v4386
      %v4393 = vmul.f32 %v4345, %v4387
      %v4394 = vmul.f32 %v4346, %v4388
      %v4395 = vmul.f32 %v4347, %v4389
      %v4396 = vpack.c.bf16 %v4392, %v4390
      %v4397 = vpack.c.bf16 %v4393, %v4391
      %v4398 = vpack.c.bf16 %v4394, %v4394
      %v4399 = vpack.c.bf16 %v4395, %v4395
      %s4400 = scalar_lea.vmem %s13, 128
      %v4401 = vld [vmem:[%s4400] sm:$0xf]
      %v4402 = vld [vmem:[%s4400 + $0x4] sm:$0xf]
      %v4403 = vld [vmem:[%s4400 + $0x8] sm:$0xf]
      %v4404 = vld [vmem:[%s4400 + $0xc] sm:$0xf]
      %v4405 = vld [vmem:[%s4400 + $0x10] sm:$0xf]
      %v4406 = vld [vmem:[%s4400 + $0x14] sm:$0xf]
      %v4407 = vld [vmem:[%s4400 + $0x18] sm:$0xf]
      %v4408 = vld [vmem:[%s4400 + $0x1c] sm:$0xf]
      %v4409 = vld [vmem:[%s4400 + $0x20] sm:$0xf]
      %v4410 = vld [vmem:[%s4400 + $0x24] sm:$0xf]
      %v4411 = vld [vmem:[%s4400 + $0x28] sm:$0xf]
      %v4412 = vld [vmem:[%s4400 + $0x2c] sm:$0xf]
      %v4413 = vld [vmem:[%s4400 + $0x30] sm:$0xf]
      %v4414 = vld [vmem:[%s4400 + $0x34] sm:$0xf]
      %v4415 = vld [vmem:[%s4400 + $0x38] sm:$0xf]
      %v4416 = vld [vmem:[%s4400 + $0x3c] sm:$0xf]
      %v4417 = vld [vmem:[%s4400 + $0x40] sm:$0xf]
      %v4418 = vld [vmem:[%s4400 + $0x44] sm:$0xf]
      %v4419 = vld [vmem:[%s4400 + $0x48] sm:$0xf]
      %v4420 = vld [vmem:[%s4400 + $0x4c] sm:$0xf]
      %v4421 = vld [vmem:[%s4400 + $0x50] sm:$0xf]
      %v4422 = vld [vmem:[%s4400 + $0x54] sm:$0xf]
      %v4423 = vld [vmem:[%s4400 + $0x58] sm:$0xf]
      %v4424 = vld [vmem:[%s4400 + $0x5c] sm:$0xf]
      %v4425 = vld [vmem:[%s4400 + $0x60] sm:$0xf]
      %v4426 = vld [vmem:[%s4400 + $0x64] sm:$0xf]
      %v4427 = vld [vmem:[%s4400 + $0x68] sm:$0xf]
      %v4428 = vld [vmem:[%s4400 + $0x6c] sm:$0xf]
      %v4429 = vld [vmem:[%s4400 + $0x70] sm:$0xf]
      %v4430 = vld [vmem:[%s4400 + $0x74] sm:$0xf]
      %v4431 = vld [vmem:[%s4400 + $0x78] sm:$0xf]
      %v4432 = vld [vmem:[%s4400 + $0x7c] sm:$0xf]
      %v4433 = vld [vmem:[%s6 + $0x24] ss:$0 sm:$0xff]
      %v4466 = vunpack.c.l.b16 %v4401
      %v4467 = vunpack.c.l.b16 %v4402
      %v4468 = vunpack.c.l.b16 %v4403
      %v4469 = vunpack.c.l.b16 %v4404
      %v4470 = vunpack.c.l.b16 %v4405
      %v4471 = vunpack.c.l.b16 %v4406
      %v4472 = vunpack.c.l.b16 %v4407
      %v4473 = vunpack.c.l.b16 %v4408
      %v4474 = vunpack.c.l.b16 %v4409
      %v4475 = vunpack.c.l.b16 %v4410
      %v4476 = vunpack.c.l.b16 %v4411
      %v4477 = vunpack.c.l.b16 %v4412
      %v4478 = vunpack.c.l.b16 %v4413
      %v4479 = vunpack.c.l.b16 %v4414
      %v4480 = vunpack.c.l.b16 %v4415
      %v4481 = vunpack.c.l.b16 %v4416
      %v4482 = vunpack.c.l.b16 %v4417
      %v4483 = vunpack.c.l.b16 %v4418
      %v4484 = vunpack.c.l.b16 %v4419
      %v4485 = vunpack.c.l.b16 %v4420
      %v4486 = vunpack.c.l.b16 %v4421
      %v4487 = vunpack.c.l.b16 %v4422
      %v4488 = vunpack.c.l.b16 %v4423
      %v4489 = vunpack.c.l.b16 %v4424
      %v4490 = vunpack.c.l.b16 %v4425
      %v4491 = vunpack.c.l.b16 %v4426
      %v4492 = vunpack.c.l.b16 %v4427
      %v4493 = vunpack.c.l.b16 %v4428
      %v4494 = vunpack.c.l.b16 %v4429
      %v4495 = vunpack.c.l.b16 %v4430
      %v4496 = vunpack.c.l.b16 %v4431
      %v4497 = vunpack.c.l.b16 %v4432
      %v4498 = vpack.c.b16 %v4467, %v4466
      %v4499 = vpack.c.b16 %v4469, %v4468
      %v4500 = vpack.c.b16 %v4471, %v4470
      %v4501 = vpack.c.b16 %v4473, %v4472
      %v4502 = vpack.c.b16 %v4475, %v4474
      %v4503 = vpack.c.b16 %v4477, %v4476
      %v4504 = vpack.c.b16 %v4479, %v4478
      %v4505 = vpack.c.b16 %v4481, %v4480
      %v4506 = vpack.c.b16 %v4483, %v4482
      %v4507 = vpack.c.b16 %v4485, %v4484
      %v4508 = vpack.c.b16 %v4487, %v4486
      %v4509 = vpack.c.b16 %v4489, %v4488
      %v4510 = vpack.c.b16 %v4491, %v4490
      %v4511 = vpack.c.b16 %v4493, %v4492
      %v4512 = vpack.c.b16 %v4495, %v4494
      %v4513 = vpack.c.b16 %v4497, %v4496
      %4530 = vmatprep.subr.bf16.mxu0 0
      %4531 = vmatpush1.bf16.msra.mxu0 %v4505
      %4532 = vmatprep.subr.bf16.mxu0 0
      %4533 = vmatpush1.bf16.msra.mxu0 %v4504
      %4534 = vmatprep.subr.bf16.mxu0 0
      %4535 = vmatpush1.bf16.msra.mxu0 %v4503
      %4536 = vmatprep.subr.bf16.mxu0 0
      %4537 = vmatpush1.bf16.msra.mxu0 %v4502
      %4538 = vmatprep.subr.bf16.mxu0 0
      %4539 = vmatpush1.bf16.msra.mxu0 %v4501
      %4540 = vmatprep.subr.bf16.mxu0 0
      %4541 = vmatpush1.bf16.msra.mxu0 %v4500
      %4542 = vmatprep.subr.bf16.mxu0 0
      %4543 = vmatpush1.bf16.msra.mxu0 %v4499
      %4544 = vmatprep.subr.bf16.mxu0 0
      %4545 = vmatpush1.bf16.msra.mxu0 %v4498
      %4546 = vmatprep.subr.bf16.mxu0 0
      %4547 = vmatpush2.bf16.msra.mxu0 %v4513
      %4548 = vmatprep.subr.bf16.mxu0 0
      %4549 = vmatpush2.bf16.msra.mxu0 %v4512
      %4550 = vmatprep.subr.bf16.mxu0 0
      %4551 = vmatpush2.bf16.msra.mxu0 %v4511
      %4552 = vmatprep.subr.bf16.mxu0 0
      %4553 = vmatpush2.bf16.msra.mxu0 %v4510
      %4554 = vmatprep.subr.bf16.mxu0 0
      %4555 = vmatpush2.bf16.msra.mxu0 %v4509
      %4556 = vmatprep.subr.bf16.mxu0 0
      %4557 = vmatpush2.bf16.msra.mxu0 %v4508
      %4558 = vmatprep.subr.bf16.mxu0 0
      %4559 = vmatpush2.bf16.msra.mxu0 %v4507
      %4560 = vmatprep.subr.bf16.mxu0 0
      %4561 = vmatpush2.bf16.msra.mxu0 %v4506
      %4562 = vmatprep.mubr.bf16.mxu0 %v4397
      %4563 = vmatmul.mubr.bf16.gmra.mxu0 %v4396
      %v4564 = vpop.f32.mrf.mxu0
      %v4565 = vpop.f32.mrf.mxu0
      %v4566 = vpop.f32.mrf.mxu0
      %v4567 = vadd.f32 %v4433, %v4566
      %v4568 = vpop.f32.mrf.mxu0
      %4569 = vmatprep.mubr.bf16.mxu0 %v4399
      %4570 = vmatmul.mubr.bf16.gmra.mxu0 %v4398
      %v4571 = vpop.f32.mrf.mxu0
      %v4572 = vpop.f32.mrf.mxu0
      %v4573 = vpop.f32.mrf.mxu0
      %v4574 = vpop.f32.mrf.mxu0
      %4575 = vdwg.mxu0
      %v4576 = vadd.f32 %v4172, %v4567
      %v4577 = vld [vmem:[%s6 + $0x4] ss:$0 sm:$0xff]
      %v4578 = vld [vmem:[%s6 + $0x5] ss:$0 sm:$0xff]
      %v4579 = vsel %vm1199, %v4576, 0.0
      %4580 = vadd.xlane.f32.xlu0 %v4579
      %v4581 = vpop.xlane.xlu0 %4580
      %v4582 = vmul.f32 %v4581, %v1219
      %v4583 = vsub.f32 %v4576, %v4582
      %v4584 = vmul.f32 %v4583, %v4583
      %v4585 = vsel %vm1199, %v4584, 0.0
      %4586 = vadd.xlane.f32.xlu0 %v4585
      %v4587 = vpop.xlane.xlu0 %4586
      %v4588 = vmul.f32 %v4587, %v1219
      %v4589 = vadd.f32 %v4588, 1e-05
      %v4590 = vrsqrt.pop %v4589
      %v4591 = vmul.f32 %v4583, %v4590
      %v4592 = vmul.f32 %v4591, %v4577
      %v4593 = vadd.f32 %v4592, %v4578
      %v4594 = vpack.c.bf16 %v4593, %v4593
      %v4595 = vld [vmem:[%s14] sm:$0xf]
      %v4596 = vld [vmem:[%s14 + $0x4] sm:$0xf]
      %v4597 = vld [vmem:[%s14 + $0x8] sm:$0xf]
      %v4598 = vld [vmem:[%s14 + $0xc] sm:$0xf]
      %v4599 = vld [vmem:[%s14 + $0x10] sm:$0xf]
      %v4600 = vld [vmem:[%s14 + $0x14] sm:$0xf]
      %v4601 = vld [vmem:[%s14 + $0x18] sm:$0xf]
      %v4602 = vld [vmem:[%s14 + $0x1c] sm:$0xf]
      %v4603 = vld [vmem:[%s6 + $0x6] ss:$0 sm:$0xff]
      %v4612 = vunpack.c.l.b16 %v4595
      %v4613 = vunpack.c.l.b16 %v4596
      %v4614 = vunpack.c.l.b16 %v4597
      %v4615 = vunpack.c.l.b16 %v4598
      %v4616 = vunpack.c.l.b16 %v4599
      %v4617 = vunpack.c.l.b16 %v4600
      %v4618 = vunpack.c.l.b16 %v4601
      %v4619 = vunpack.c.l.b16 %v4602
      %v4620 = vpack.c.b16 %v4613, %v4612
      %v4621 = vpack.c.b16 %v4615, %v4614
      %v4622 = vpack.c.b16 %v4617, %v4616
      %v4623 = vpack.c.b16 %v4619, %v4618
      %v4629 = vsel %vm1199, %v4594, 0
      %4631 = vmatprep.subr.bf16.mxu0 0
      %4632 = vmatpush1.bf16.msra.mxu0 0
      %4633 = vmatprep.subr.bf16.mxu0 0
      %4634 = vmatpush1.bf16.msra.mxu0 0
      %4635 = vmatprep.subr.bf16.mxu0 0
      %4636 = vmatpush1.bf16.msra.mxu0 0
      %4637 = vmatprep.subr.bf16.mxu0 0
      %4638 = vmatpush1.bf16.msra.mxu0 0
      %4639 = vmatprep.subr.bf16.mxu0 0
      %4640 = vmatpush1.bf16.msra.mxu0 %v4623
      %4641 = vmatprep.subr.bf16.mxu0 0
      %4642 = vmatpush1.bf16.msra.mxu0 %v4622
      %4643 = vmatprep.subr.bf16.mxu0 0
      %4644 = vmatpush1.bf16.msra.mxu0 %v4621
      %4645 = vmatprep.subr.bf16.mxu0 0
      %4646 = vmatpush1.bf16.msra.mxu0 %v4620
      %4647 = vmatprep.subr.bf16.mxu0 0
      %4648 = vmatpush2.bf16.msra.mxu0 0
      %4649 = vmatprep.subr.bf16.mxu0 0
      %4650 = vmatpush2.bf16.msra.mxu0 0
      %4651 = vmatprep.subr.bf16.mxu0 0
      %4652 = vmatpush2.bf16.msra.mxu0 0
      %4653 = vmatprep.subr.bf16.mxu0 0
      %4654 = vmatpush2.bf16.msra.mxu0 0
      %4655 = vmatprep.subr.bf16.mxu0 0
      %4656 = vmatpush2.bf16.msra.mxu0 0
      %4657 = vmatprep.subr.bf16.mxu0 0
      %4658 = vmatpush2.bf16.msra.mxu0 0
      %4659 = vmatprep.subr.bf16.mxu0 0
      %4660 = vmatpush2.bf16.msra.mxu0 0
      %4661 = vmatprep.subr.bf16.mxu0 0
      %4662 = vmatpush2.bf16.msra.mxu0 0
      %4663 = vmatprep.mubr.bf16.mxu0 0
      %4664 = vmatmul.mubr.bf16.gmra.mxu0 %v4629
      %v4665 = vpop.f32.mrf.mxu0
      %v4666 = vadd.f32 %v4603, %v4665
      %v4667 = vpop.f32.mrf.mxu0
      %v4668 = vpop.f32.mrf.mxu0
      %v4669 = vpop.f32.mrf.mxu0
      %4670 = vdwg.mxu0
      %4671 = vst [vmem:[%s557] sm:$0xff] %v4666
      %p4672 = scmp.lt.s32.totalorder %s26, 1
      %s4673 = scalar_select %p4672, %s26, 1
      %s4674 = smul.addr %s4673, 8
      %s4675 = scalar_lea.vmem %s15, %s4674
      // Predicated region
      $region81: #{_lambda_.3} parent=79 // pred_check
        %p4676 = pneg %p384
      $region82: #{_lambda_.3} parent=79 // pred_check_branch
        %4678 = sbr.rel (%p4676) target = $region84
      $region83: #{_lambda_.3} parent=79 // pred_region
        _
      $region84: #{_lambda_.3} parent=79 // pred_fallthru
        _
    $region80: #{_lambda_.3} parent=5 // pred_fallthru
      _
    %p4679 = scmp.le.s32.totalorder 2, %s21
    // Predicated region
    $region85: #{_lambda_.3} parent=5 // pred_check
      %p4680 = pneg %p4679
    $region86: #{_lambda_.3} parent=5 // pred_check_branch
      %4682 = sbr.rel (%p4680) target = $region88
    $region87: #{_lambda_.3} parent=5 // pred_region
      %s4683 = ssub.s32 %s21, 2
      // Predicated region
      $region89: #{_lambda_.3} parent=87 // pred_check
        %p4684 = pneg %p390
      $region90: #{_lambda_.3} parent=87 // pred_check_branch
        %4686 = sbr.rel (%p4684) target = $region92
      $region91: #{_lambda_.3} parent=87 // pred_region
        %p4687 = scmp.lt.s32.totalorder %s27, 1
        %s4688 = scalar_select %p4687, %s27, 1
        %s4689 = smul.addr %s4688, 8
        %s4690 = scalar_lea.vmem %s15, %s4689
      $region92: #{_lambda_.3} parent=87 // pred_fallthru
        _
    $region88: #{_lambda_.3} parent=5 // pred_fallthru
      _
  $region6: #{_lambda_.3} parent=0 // loop_footer
    %s25 = sadd.s32 1, %s21
  $region7: #{_lambda_.3} parent=0 // loop_footer_branch
    %20 = sbr.rel target = $region3
  $region8: #{_lambda_.3} parent=0 // loop_exit
    _

</llo_original>
